<compile_context>
chip_gen: v7x
topology: tpu7x:2x2x1
jax: 0.10.0
libtpu: 0.0.40
codegen_flags: <defaults>
</compile_context>

<pallas_src>
import math

import jax
import jax.numpy as jnp
from jax.experimental import pallas as pl
from jax.experimental.pallas import tpu as pltpu


PARAMS_PER_LEVEL = 22


# -----------------------------------------------------------------------------
# Fused kernel: all levels of the StrataVAD decoder stack in one kernel body.
# Per level: inter-level Linear -> num_layers x TransformerDecoderLayer
# (norm_first=False, relu, dropout=0) -> final decoder LayerNorm, computed on
# one row per memory element (exact, see module-level note).
# -----------------------------------------------------------------------------
def make_fused_kernel(cfgs, pack, eps=1e-5):
    n_levels = len(cfgs)

    def layer_norm(y, w, b):
        mu = jnp.mean(y, axis=-1, keepdims=True)
        var = jnp.mean(jnp.square(y - mu), axis=-1, keepdims=True)
        return (y - mu) * jax.lax.rsqrt(var + eps) * w + b

    def level_forward(mem_in, refs, cfg):
        (lin_wt, lin_b, sa_v_wt, sa_v_b, sa_out_wt, sa_out_b,
         ca_v_wt, ca_v_b, ca_out_wt, ca_out_b,
         ff1_wt, ff1_b, ff2_wt, ff2_b,
         n1_w, n1_b, n2_w, n2_b, n3_w, n3_b, fn_w, fn_b) = refs
        L, d = cfg['L'], cfg['d']
        M = mem_in.shape[0]            # memory elements handled this grid step

        # inter-level Linear on the M memory elements
        mem = jnp.dot(mem_in, lin_wt[...],
                      preferred_element_type=jnp.float32) + lin_b[...]

        x = None
        for l in range(L):             # static unroll over decoder layers
            # ---- self-attention (exactly collapsed to V + out-proj) --------
            if l == 0:
                # x == 0 -> V projection is bias-only; a single (1, d) row.
                sa0 = jnp.dot(sa_v_b[pl.ds(0, 1), :], sa_out_wt[0],
                              preferred_element_type=jnp.float32) \
                    + sa_out_b[pl.ds(0, 1), :]
                x = jnp.broadcast_to(
                    layer_norm(sa0, n1_w[pl.ds(0, 1), :], n1_b[pl.ds(0, 1), :]),
                    (M, d))
            else:
                v = jnp.dot(x, sa_v_wt[l],
                            preferred_element_type=jnp.float32) \
                    + sa_v_b[pl.ds(l, 1), :]
                sa = jnp.dot(v, sa_out_wt[l],
                             preferred_element_type=jnp.float32) \
                    + sa_out_b[pl.ds(l, 1), :]
                x = layer_norm(x + sa, n1_w[pl.ds(l, 1), :], n1_b[pl.ds(l, 1), :])

            # ---- cross-attention to the length-1 memory (softmax == 1) -----
            vmem = jnp.dot(mem, ca_v_wt[l],
                           preferred_element_type=jnp.float32) \
                + ca_v_b[pl.ds(l, 1), :]
            ca = jnp.dot(vmem, ca_out_wt[l],
                         preferred_element_type=jnp.float32) \
                + ca_out_b[pl.ds(l, 1), :]
            x = layer_norm(x + ca, n2_w[pl.ds(l, 1), :], n2_b[pl.ds(l, 1), :])

            # ---- feed-forward (relu) ----------------------------------------
            h1 = jnp.maximum(
                jnp.dot(x, ff1_wt[l], preferred_element_type=jnp.float32)
                + ff1_b[pl.ds(l, 1), :], 0.0)
            ffo = jnp.dot(h1, ff2_wt[l],
                          preferred_element_type=jnp.float32) \
                + ff2_b[pl.ds(l, 1), :]
            x = layer_norm(x + ffo, n3_w[pl.ds(l, 1), :], n3_b[pl.ds(l, 1), :])

        # final decoder LayerNorm (nn.Transformer always adds one)
        return layer_norm(x, fn_w[...], fn_b[...])

    def kernel(*refs):
        latent_ref = refs[0]
        out_ref = refs[-1]
        param_refs = refs[1:-1]

        x = latent_ref[0]                                   # (tb, latent_dim)
        for li, cfg in enumerate(cfgs):
            lp = param_refs[li * PARAMS_PER_LEVEL:(li + 1) * PARAMS_PER_LEVEL]
            x = level_forward(x, lp, cfg)                   # (M, d): 1 row/element
            if li + 1 < n_levels:
                # level boundary: each element's (identical) row becomes the
                # next level's S memory elements (batch-major ordering).
                M, d = x.shape
                S = cfg['S']
                x = jnp.broadcast_to(x[:, None, :], (M, S, d)).reshape(M * S, d)

        # final store: broadcast each element row to its S_last output rows
        M, d = x.shape
        S = cfgs[-1]['S']
        if pack:
            # lane-dense (..., 128) store: each 128-lane row packs 128//d
            # consecutive (identical) output rows of the same element -> the
            # HBM writeback uses unmasked full-lane vst instead of vst.msk.
            rep = 128 // d
            rpe = (S * d) // 128                            # packed rows / element
            w = jnp.concatenate([x] * rep, axis=-1)         # (M, 128)
            out = jnp.broadcast_to(w[:, None, :], (M, rpe, 128))
            out_ref[...] = out.reshape(M * rpe, 128)
        else:
            out = jnp.broadcast_to(x[:, None, :], (M, S, d))
            out_ref[...] = out.reshape(M * S, d)

    return kernel


def _full_spec(a):
    nd = a.ndim
    return pl.BlockSpec(a.shape, lambda i, _nd=nd: (0,) * _nd)


def _flatten_level_params(p, d):
    # self-attn and cross-attn in-projections pre-sliced to their V part only
    # (exact: attention weights always sum to 1 over identical / length-1
    # values, so Q and K never contribute) -> 2/3 less DMA + VMEM for both.
    return [p['lin_wt'], p['lin_b'],
            p['sa_in_wt'][:, :, 2 * d:], p['sa_in_b'][:, 2 * d:],
            p['sa_out_wt'], p['sa_out_b'],
            p['ca_in_wt'][:, :, 2 * d:], p['ca_in_b'][:, 2 * d:],
            p['ca_out_wt'], p['ca_out_b'],
            p['ff1_wt'], p['ff1_b'], p['ff2_wt'], p['ff2_b'],
            p['n1_w'], p['n1_b'], p['n2_w'], p['n2_b'], p['n3_w'], p['n3_b'],
            p['fn_w'], p['fn_b']]


def strata_vad_forward(latent, seq_dims, params, block_batch=None):
    """Mirrors StrataVAD.forward (dropout=0) with ONE fused pallas_call."""
    batch, latent_dim = latent.shape

    cfgs = []
    d_prev = latent_dim
    for i, p in enumerate(params):
        d = p['lin_wt'].shape[1]
        cfgs.append(dict(L=p['sa_in_wt'].shape[0], S=int(seq_dims[i]),
                         d=d, d_prev=d_prev, ff=p['ff1_wt'].shape[2]))
        d_prev = d
    S_list = [c['S'] for c in cfgs]
    prod_s = 1
    for s in S_list:
        prod_s *= s
    d_last = cfgs[-1]['d']
    S_last = cfgs[-1]['S']

    # >= 2 grid steps by default so ("parallel",) can use both v7x TensorCores
    # and per-block DMAs pipeline across steps.
    if block_batch is None:
        block_batch = batch // 2 if (batch >= 2 and batch % 2 == 0) else batch
    tb = block_batch
    assert batch % tb == 0, "block_batch must divide batch"
    n_blocks = batch // tb
    rows_per_block = tb * prod_s

    # lane-dense packed output (biggest store-side lever per review)
    pack = (d_last < 128 and 128 % d_last == 0
            and (S_last * d_last) % 128 == 0
            and ((rows_per_block * d_last) // 128) % 8 == 0)

    flat = []
    for p, c in zip(params, cfgs):
        flat += _flatten_level_params(p, c['d'])

    kernel = make_fused_kernel(cfgs, pack)

    # free view: batch blocks become a leading (untiled) axis -> the latent
    # BlockSpec is fully (8,128)-rule compliant for any tb.
    latent_blk = latent.reshape(n_blocks, tb, latent_dim)

    if pack:
        pr = rows_per_block * d_last // 128
        out_shape = jax.ShapeDtypeStruct((n_blocks * pr, 128), jnp.float32)
        out_spec = pl.BlockSpec((pr, 128), lambda i: (i, 0))
    else:
        out_shape = jax.ShapeDtypeStruct((batch * prod_s, d_last), jnp.float32)
        out_spec = pl.BlockSpec((rows_per_block, d_last), lambda i: (i, 0))

    # Advisory cost estimate: lets XLA overlap surrounding ops with the
    # (launch/DMA-bound) custom call.
    flops = 0
    transc = 0
    m = batch
    for c in cfgs:
        flops += 2 * m * c['d_prev'] * c['d']                       # inter-level Linear
        flops += c['L'] * (4 * 2 * m * c['d'] * c['d']              # sa_v/sa_out/ca_v/ca_out
                           + 2 * 2 * m * c['d'] * c['ff'])          # ff1/ff2
        transc += m * (3 * c['L'] + 1)                              # rsqrt per LN row
        m *= c['S']
    bytes_accessed = (latent.size + batch * prod_s * d_last
                      + sum(int(a.size) for a in flat)) * 4
    cost = pl.CostEstimate(flops=int(flops), transcendentals=int(transc),
                           bytes_accessed=int(bytes_accessed))

    out = pl.pallas_call(
        kernel,
        out_shape=out_shape,
        grid_spec=pltpu.PrefetchScalarGridSpec(
            num_scalar_prefetch=0,
            grid=(n_blocks,),
            in_specs=[pl.BlockSpec((1, tb, latent_dim), lambda i: (i, 0, 0))]
                     + [_full_spec(a) for a in flat],
            out_specs=out_spec,
        ),
        compiler_params=pltpu.CompilerParams(
            dimension_semantics=("parallel",),      # batch blocks independent
            vmem_limit_bytes=32 * 1024 * 1024),     # explicit (v5e default is 16 MiB)
        cost_estimate=cost,
    )(latent_blk, *flat)

    # All prod_s rows of one batch element are identical (exact degeneracy) and
    # rows are written batch-major, so a free reshape recovers PyTorch's
    # (batch, prod_s, d_last) output exactly — no transpose needed.
    return out.reshape(batch, prod_s, d_last)


# -----------------------------------------------------------------------------
# Deterministic synthetic parameters (PyTorch shapes, pre-transposed for x @ Wt)
# -----------------------------------------------------------------------------
def init_level_params(key, d_prev, d, ff, L, H):
    ks = iter(jax.random.split(key, 32))

    def rnd(shape, fan_in):
        return jax.random.normal(next(ks), shape, jnp.float32) * (fan_in ** -0.5)

    p = {'nhead': H}
    p['lin_wt'] = rnd((d_prev, d), d_prev)       # torch Linear weight (d, d_prev)^T
    p['lin_b'] = rnd((1, d), d_prev)
    p['sa_in_wt'] = rnd((L, d, 3 * d), d)        # torch in_proj_weight (3d, d)^T
    p['sa_in_b'] = rnd((L, 3 * d), d)
    p['sa_out_wt'] = rnd((L, d, d), d)
    p['sa_out_b'] = rnd((L, d), d)
    p['ca_in_wt'] = rnd((L, d, 3 * d), d)
    p['ca_in_b'] = rnd((L, 3 * d), d)
    p['ca_out_wt'] = rnd((L, d, d), d)
    p['ca_out_b'] = rnd((L, d), d)
    p['ff1_wt'] = rnd((L, d, ff), d)             # torch linear1 weight (ff, d)^T
    p['ff1_b'] = rnd((L, ff), d)
    p['ff2_wt'] = rnd((L, ff, d), ff)            # torch linear2 weight (d, ff)^T
    p['ff2_b'] = rnd((L, d), ff)
    for n in ('n1', 'n2', 'n3'):
        p[n + '_w'] = 1.0 + 0.1 * jax.random.normal(next(ks), (L, d), jnp.float32)
        p[n + '_b'] = 0.1 * jax.random.normal(next(ks), (L, d), jnp.float32)
    p['fn_w'] = 1.0 + 0.1 * jax.random.normal(next(ks), (1, d), jnp.float32)
    p['fn_b'] = 0.1 * jax.random.normal(next(ks), (1, d), jnp.float32)
    return p


# -----------------------------------------------------------------------------
# Pure-JAX reference (PyTorch layout, FULL multi-head self-/cross-attention —
# deliberately does NOT use the degeneracy, so it validates the collapse).
# -----------------------------------------------------------------------------
def level_ref(x_in, S, p, eps=1e-5):
    M, _ = x_in.shape
    L = p['sa_in_wt'].shape[0]
    d = p['lin_wt'].shape[1]
    H = p['nhead']
    dh = d // H

    def ln(y, w, b):
        mu = y.mean(-1, keepdims=True)
        var = ((y - mu) ** 2).mean(-1, keepdims=True)
        return (y - mu) / jnp.sqrt(var + eps) * w + b

    mem = x_in @ p['lin_wt'] + p['lin_b']                          # (M, d)
    x = jnp.zeros((M, S, d), jnp.float32)
    for l in range(L):
        in_wt, in_b = p['sa_in_wt'][l], p['sa_in_b'][l]
        q = x @ in_wt[:, :d] + in_b[:d]
        k = x @ in_wt[:, d:2 * d] + in_b[d:2 * d]
        v = x @ in_wt[:, 2 * d:] + in_b[2 * d:]
        qh = q.reshape(M, S, H, dh).transpose(0, 2, 1, 3)
        kh = k.reshape(M, S, H, dh).transpose(0, 2, 1, 3)
        vh = v.reshape(M, S, H, dh).transpose(0, 2, 1, 3)
        scores = jnp.einsum('mhqe,mhke->mhqk', qh, kh) / math.sqrt(dh)
        pa = jax.nn.softmax(scores, axis=-1)
        o = jnp.einsum('mhqk,mhke->mhqe', pa, vh).transpose(0, 2, 1, 3).reshape(M, S, d)
        sa = o @ p['sa_out_wt'][l] + p['sa_out_b'][l]
        x = ln(x + sa, p['n1_w'][l], p['n1_b'][l])

        v_mem = mem @ p['ca_in_wt'][l][:, 2 * d:] + p['ca_in_b'][l][2 * d:]
        ca = (v_mem @ p['ca_out_wt'][l] + p['ca_out_b'][l])[:, None, :]
        x = ln(x + ca, p['n2_w'][l], p['n2_b'][l])

        h1 = jnp.maximum(x @ p['ff1_wt'][l] + p['ff1_b'][l], 0.0)
        ffo = h1 @ p['ff2_wt'][l] + p['ff2_b'][l]
        x = ln(x + ffo, p['n3_w'][l], p['n3_b'][l])
    return ln(x, p['fn_w'][0], p['fn_b'][0])                       # (M, S, d)


def strata_vad_ref(latent, seq_dims, params):
    batch = latent.shape[0]
    x = latent
    for i, p in enumerate(params):
        x2 = x.reshape(-1, x.shape[-1])
        x = jnp.swapaxes(level_ref(x2, seq_dims[i], p), 0, 1)      # (S, M, d)
    return jnp.swapaxes(x.reshape(-1, batch, x.shape[-1]), 0, 1)


# -----------------------------------------------------------------------------
if __name__ == "__main__":
    key = jax.random.PRNGKey(0)

    # StrataVAD(n_levels=2, latent_dim=32, d_model=64, nhead=4, num_layers=2,
    #           dim_feedforward=128, dropout=0.0, linears=True)
    batch = 2
    n_levels = 2
    latent_dim = 32
    d_model = (64, 64)
    nhead = (4, 4)
    num_layers = (2, 2)
    dim_feedforward = (128, 128)
    seq_dims = (4, 8)

    keys = jax.random.split(key, n_levels + 1)
    params = []
    d_prev = latent_dim
    for i in range(n_levels):
        params.append(init_level_params(keys[i], d_prev, d_model[i],
                                        dim_feedforward[i], num_layers[i], nhead[i]))
        d_prev = d_model[i]

    latent = jax.random.normal(keys[-1], (batch, latent_dim), jnp.float32)

    out = strata_vad_forward(latent, seq_dims, params)
    out = jax.block_until_ready(out)

    expected_shape = (batch, seq_dims[0] * seq_dims[1], d_model[-1])
    assert out.shape == expected_shape, (out.shape, expected_shape)

    ref = strata_vad_ref(latent, seq_dims, params)
    if not jnp.allclose(out, ref, atol=2e-2, rtol=2e-2):
        raise AssertionError("kernel/reference mismatch, max abs diff = %g"
                             % float(jnp.max(jnp.abs(out - ref))))

    print("KERNEL_OK")
</pallas_src>

<mosaic_0001>
module attributes {stable_mosaic.version = 11 : i64} {
  func.func @kernel(%arg0: i32, %arg1: memref<1x1x32xf32, #tpu.memory_space<vmem>>, %arg2: memref<32x64xf32, #tpu.memory_space<vmem>>, %arg3: memref<1x64xf32, #tpu.memory_space<vmem>>, %arg4: memref<2x64x64xf32, #tpu.memory_space<vmem>>, %arg5: memref<2x64xf32, #tpu.memory_space<vmem>>, %arg6: memref<2x64x64xf32, #tpu.memory_space<vmem>>, %arg7: memref<2x64xf32, #tpu.memory_space<vmem>>, %arg8: memref<2x64x64xf32, #tpu.memory_space<vmem>>, %arg9: memref<2x64xf32, #tpu.memory_space<vmem>>, %arg10: memref<2x64x64xf32, #tpu.memory_space<vmem>>, %arg11: memref<2x64xf32, #tpu.memory_space<vmem>>, %arg12: memref<2x64x128xf32, #tpu.memory_space<vmem>>, %arg13: memref<2x128xf32, #tpu.memory_space<vmem>>, %arg14: memref<2x128x64xf32, #tpu.memory_space<vmem>>, %arg15: memref<2x64xf32, #tpu.memory_space<vmem>>, %arg16: memref<2x64xf32, #tpu.memory_space<vmem>>, %arg17: memref<2x64xf32, #tpu.memory_space<vmem>>, %arg18: memref<2x64xf32, #tpu.memory_space<vmem>>, %arg19: memref<2x64xf32, #tpu.memory_space<vmem>>, %arg20: memref<2x64xf32, #tpu.memory_space<vmem>>, %arg21: memref<2x64xf32, #tpu.memory_space<vmem>>, %arg22: memref<1x64xf32, #tpu.memory_space<vmem>>, %arg23: memref<1x64xf32, #tpu.memory_space<vmem>>, %arg24: memref<64x64xf32, #tpu.memory_space<vmem>>, %arg25: memref<1x64xf32, #tpu.memory_space<vmem>>, %arg26: memref<2x64x64xf32, #tpu.memory_space<vmem>>, %arg27: memref<2x64xf32, #tpu.memory_space<vmem>>, %arg28: memref<2x64x64xf32, #tpu.memory_space<vmem>>, %arg29: memref<2x64xf32, #tpu.memory_space<vmem>>, %arg30: memref<2x64x64xf32, #tpu.memory_space<vmem>>, %arg31: memref<2x64xf32, #tpu.memory_space<vmem>>, %arg32: memref<2x64x64xf32, #tpu.memory_space<vmem>>, %arg33: memref<2x64xf32, #tpu.memory_space<vmem>>, %arg34: memref<2x64x128xf32, #tpu.memory_space<vmem>>, %arg35: memref<2x128xf32, #tpu.memory_space<vmem>>, %arg36: memref<2x128x64xf32, #tpu.memory_space<vmem>>, %arg37: memref<2x64xf32, #tpu.memory_space<vmem>>, %arg38: memref<2x64xf32, #tpu.memory_space<vmem>>, %arg39: memref<2x64xf32, #tpu.memory_space<vmem>>, %arg40: memref<2x64xf32, #tpu.memory_space<vmem>>, %arg41: memref<2x64xf32, #tpu.memory_space<vmem>>, %arg42: memref<2x64xf32, #tpu.memory_space<vmem>>, %arg43: memref<2x64xf32, #tpu.memory_space<vmem>>, %arg44: memref<1x64xf32, #tpu.memory_space<vmem>>, %arg45: memref<1x64xf32, #tpu.memory_space<vmem>>, %arg46: memref<16x128xf32, #tpu.memory_space<vmem>>) attributes {dimension_semantics = [#tpu.dimension_semantics<parallel>], iteration_bounds = array<i64: 2>, scalar_prefetch = 0 : i64, scratch_operands = 0 : i64, tpu.core_type = #tpu.core_type<tc>, window_params = [{transform_indices = @transform_0, window_bounds = array<i64: 1, 1, 32>}, {pipeline_mode = #tpu.pipeline_mode<synchronous>, transform_indices = @transform_1, window_bounds = array<i64: 32, 64>}, {pipeline_mode = #tpu.pipeline_mode<synchronous>, transform_indices = @transform_2, window_bounds = array<i64: 1, 64>}, {pipeline_mode = #tpu.pipeline_mode<synchronous>, transform_indices = @transform_3, window_bounds = array<i64: 2, 64, 64>}, {pipeline_mode = #tpu.pipeline_mode<synchronous>, transform_indices = @transform_4, window_bounds = array<i64: 2, 64>}, {pipeline_mode = #tpu.pipeline_mode<synchronous>, transform_indices = @transform_5, window_bounds = array<i64: 2, 64, 64>}, {pipeline_mode = #tpu.pipeline_mode<synchronous>, transform_indices = @transform_6, window_bounds = array<i64: 2, 64>}, {pipeline_mode = #tpu.pipeline_mode<synchronous>, transform_indices = @transform_7, window_bounds = array<i64: 2, 64, 64>}, {pipeline_mode = #tpu.pipeline_mode<synchronous>, transform_indices = @transform_8, window_bounds = array<i64: 2, 64>}, {pipeline_mode = #tpu.pipeline_mode<synchronous>, transform_indices = @transform_9, window_bounds = array<i64: 2, 64, 64>}, {pipeline_mode = #tpu.pipeline_mode<synchronous>, transform_indices = @transform_10, window_bounds = array<i64: 2, 64>}, {pipeline_mode = #tpu.pipeline_mode<synchronous>, transform_indices = @transform_11, window_bounds = array<i64: 2, 64, 128>}, {pipeline_mode = #tpu.pipeline_mode<synchronous>, transform_indices = @transform_12, window_bounds = array<i64: 2, 128>}, {pipeline_mode = #tpu.pipeline_mode<synchronous>, transform_indices = @transform_13, window_bounds = array<i64: 2, 128, 64>}, {pipeline_mode = #tpu.pipeline_mode<synchronous>, transform_indices = @transform_14, window_bounds = array<i64: 2, 64>}, {pipeline_mode = #tpu.pipeline_mode<synchronous>, transform_indices = @transform_15, window_bounds = array<i64: 2, 64>}, {pipeline_mode = #tpu.pipeline_mode<synchronous>, transform_indices = @transform_16, window_bounds = array<i64: 2, 64>}, {pipeline_mode = #tpu.pipeline_mode<synchronous>, transform_indices = @transform_17, window_bounds = array<i64: 2, 64>}, {pipeline_mode = #tpu.pipeline_mode<synchronous>, transform_indices = @transform_18, window_bounds = array<i64: 2, 64>}, {pipeline_mode = #tpu.pipeline_mode<synchronous>, transform_indices = @transform_19, window_bounds = array<i64: 2, 64>}, {pipeline_mode = #tpu.pipeline_mode<synchronous>, transform_indices = @transform_20, window_bounds = array<i64: 2, 64>}, {pipeline_mode = #tpu.pipeline_mode<synchronous>, transform_indices = @transform_21, window_bounds = array<i64: 1, 64>}, {pipeline_mode = #tpu.pipeline_mode<synchronous>, transform_indices = @transform_22, window_bounds = array<i64: 1, 64>}, {pipeline_mode = #tpu.pipeline_mode<synchronous>, transform_indices = @transform_23, window_bounds = array<i64: 64, 64>}, {pipeline_mode = #tpu.pipeline_mode<synchronous>, transform_indices = @transform_24, window_bounds = array<i64: 1, 64>}, {pipeline_mode = #tpu.pipeline_mode<synchronous>, transform_indices = @transform_25, window_bounds = array<i64: 2, 64, 64>}, {pipeline_mode = #tpu.pipeline_mode<synchronous>, transform_indices = @transform_26, window_bounds = array<i64: 2, 64>}, {pipeline_mode = #tpu.pipeline_mode<synchronous>, transform_indices = @transform_27, window_bounds = array<i64: 2, 64, 64>}, {pipeline_mode = #tpu.pipeline_mode<synchronous>, transform_indices = @transform_28, window_bounds = array<i64: 2, 64>}, {pipeline_mode = #tpu.pipeline_mode<synchronous>, transform_indices = @transform_29, window_bounds = array<i64: 2, 64, 64>}, {pipeline_mode = #tpu.pipeline_mode<synchronous>, transform_indices = @transform_30, window_bounds = array<i64: 2, 64>}, {pipeline_mode = #tpu.pipeline_mode<synchronous>, transform_indices = @transform_31, window_bounds = array<i64: 2, 64, 64>}, {pipeline_mode = #tpu.pipeline_mode<synchronous>, transform_indices = @transform_32, window_bounds = array<i64: 2, 64>}, {pipeline_mode = #tpu.pipeline_mode<synchronous>, transform_indices = @transform_33, window_bounds = array<i64: 2, 64, 128>}, {pipeline_mode = #tpu.pipeline_mode<synchronous>, transform_indices = @transform_34, window_bounds = array<i64: 2, 128>}, {pipeline_mode = #tpu.pipeline_mode<synchronous>, transform_indices = @transform_35, window_bounds = array<i64: 2, 128, 64>}, {pipeline_mode = #tpu.pipeline_mode<synchronous>, transform_indices = @transform_36, window_bounds = array<i64: 2, 64>}, {pipeline_mode = #tpu.pipeline_mode<synchronous>, transform_indices = @transform_37, window_bounds = array<i64: 2, 64>}, {pipeline_mode = #tpu.pipeline_mode<synchronous>, transform_indices = @transform_38, window_bounds = array<i64: 2, 64>}, {pipeline_mode = #tpu.pipeline_mode<synchronous>, transform_indices = @transform_39, window_bounds = array<i64: 2, 64>}, {pipeline_mode = #tpu.pipeline_mode<synchronous>, transform_indices = @transform_40, window_bounds = array<i64: 2, 64>}, {pipeline_mode = #tpu.pipeline_mode<synchronous>, transform_indices = @transform_41, window_bounds = array<i64: 2, 64>}, {pipeline_mode = #tpu.pipeline_mode<synchronous>, transform_indices = @transform_42, window_bounds = array<i64: 2, 64>}, {pipeline_mode = #tpu.pipeline_mode<synchronous>, transform_indices = @transform_43, window_bounds = array<i64: 1, 64>}, {pipeline_mode = #tpu.pipeline_mode<synchronous>, transform_indices = @transform_44, window_bounds = array<i64: 1, 64>}, {transform_indices = @transform_45, window_bounds = array<i64: 16, 128>}]} {
    %c0 = arith.constant 0 : index
    %c0_0 = arith.constant 0 : index
    %c0_1 = arith.constant 0 : index
    %0 = vector.load %arg1[%c0, %c0_0, %c0_1] : memref<1x1x32xf32, #tpu.memory_space<vmem>>, vector<1x1x32xf32>
    %1 = vector.shape_cast %0 : vector<1x1x32xf32> to vector<1x32xf32>
    %c0_2 = arith.constant 0 : index
    %c0_3 = arith.constant 0 : index
    %2 = vector.load %arg2[%c0_2, %c0_3] : memref<32x64xf32, #tpu.memory_space<vmem>>, vector<32x64xf32>
    %cst = arith.constant dense<0.000000e+00> : vector<1x64xf32>
    %3 = tpu.matmul %1, %2, %cst {dimension_numbers = #tpu.dot_dimension_numbers<[1], [0], [0], [1], [0, 0, 1, 1], [], []>} : vector<1x32xf32>, vector<32x64xf32>, vector<1x64xf32> -> vector<1x64xf32>
    %c0_4 = arith.constant 0 : index
    %c0_5 = arith.constant 0 : index
    %4 = vector.load %arg3[%c0_4, %c0_5] : memref<1x64xf32, #tpu.memory_space<vmem>>, vector<1x64xf32>
    %5 = arith.addf %3, %4 : vector<1x64xf32>
    %c0_6 = arith.constant 0 : index
    %c0_7 = arith.constant 0 : index
    %6 = vector.load %arg5[%c0_6, %c0_7] : memref<2x64xf32, #tpu.memory_space<vmem>>, vector<1x64xf32>
    %c0_8 = arith.constant 0 : index
    %c0_9 = arith.constant 0 : index
    %c0_10 = arith.constant 0 : index
    %7 = vector.load %arg6[%c0_8, %c0_9, %c0_10] : memref<2x64x64xf32, #tpu.memory_space<vmem>>, vector<1x64x64xf32>
    %8 = vector.shape_cast %7 : vector<1x64x64xf32> to vector<64x64xf32>
    %cst_11 = arith.constant dense<0.000000e+00> : vector<1x64xf32>
    %9 = tpu.matmul %6, %8, %cst_11 {dimension_numbers = #tpu.dot_dimension_numbers<[1], [0], [0], [1], [0, 0, 1, 1], [], []>} : vector<1x64xf32>, vector<64x64xf32>, vector<1x64xf32> -> vector<1x64xf32>
    %c0_12 = arith.constant 0 : index
    %c0_13 = arith.constant 0 : index
    %10 = vector.load %arg7[%c0_12, %c0_13] : memref<2x64xf32, #tpu.memory_space<vmem>>, vector<1x64xf32>
    %11 = arith.addf %9, %10 : vector<1x64xf32>
    %c0_14 = arith.constant 0 : index
    %c0_15 = arith.constant 0 : index
    %12 = vector.load %arg16[%c0_14, %c0_15] : memref<2x64xf32, #tpu.memory_space<vmem>>, vector<1x64xf32>
    %c0_16 = arith.constant 0 : index
    %c0_17 = arith.constant 0 : index
    %13 = vector.load %arg17[%c0_16, %c0_17] : memref<2x64xf32, #tpu.memory_space<vmem>>, vector<1x64xf32>
    %cst_18 = arith.constant dense<0.000000e+00> : vector<1xf32>
    %14 = vector.multi_reduction <add>, %11, %cst_18 [1] : vector<1x64xf32> to vector<1xf32>
    %15 = vector.shape_cast %14 : vector<1xf32> to vector<1x1xf32>
    %cst_19 = arith.constant 6.400000e+01 : f32
    %16 = vector.broadcast %cst_19 : f32 to vector<1x1xf32>
    %17 = arith.divf %15, %16 : vector<1x1xf32>
    %18 = vector.broadcast %17 : vector<1x1xf32> to vector<1x64xf32>
    %19 = arith.subf %11, %18 : vector<1x64xf32>
    %20 = arith.mulf %19, %19 : vector<1x64xf32>
    %cst_20 = arith.constant dense<0.000000e+00> : vector<1xf32>
    %21 = vector.multi_reduction <add>, %20, %cst_20 [1] : vector<1x64xf32> to vector<1xf32>
    %22 = vector.shape_cast %21 : vector<1xf32> to vector<1x1xf32>
    %cst_21 = arith.constant 6.400000e+01 : f32
    %23 = vector.broadcast %cst_21 : f32 to vector<1x1xf32>
    %24 = arith.divf %22, %23 : vector<1x1xf32>
    %25 = vector.broadcast %17 : vector<1x1xf32> to vector<1x64xf32>
    %26 = arith.subf %11, %25 : vector<1x64xf32>
    %cst_22 = arith.constant 9.99999974E-6 : f32
    %27 = vector.broadcast %cst_22 : f32 to vector<1x1xf32>
    %28 = arith.addf %24, %27 : vector<1x1xf32>
    %29 = math.rsqrt %28 : vector<1x1xf32>
    %30 = vector.broadcast %29 : vector<1x1xf32> to vector<1x64xf32>
    %31 = arith.mulf %26, %30 : vector<1x64xf32>
    %32 = arith.mulf %31, %12 : vector<1x64xf32>
    %33 = arith.addf %32, %13 : vector<1x64xf32>
    %c0_23 = arith.constant 0 : index
    %c0_24 = arith.constant 0 : index
    %c0_25 = arith.constant 0 : index
    %34 = vector.load %arg8[%c0_23, %c0_24, %c0_25] : memref<2x64x64xf32, #tpu.memory_space<vmem>>, vector<1x64x64xf32>
    %35 = vector.shape_cast %34 : vector<1x64x64xf32> to vector<64x64xf32>
    %cst_26 = arith.constant dense<0.000000e+00> : vector<1x64xf32>
    %36 = tpu.matmul %5, %35, %cst_26 {dimension_numbers = #tpu.dot_dimension_numbers<[1], [0], [0], [1], [0, 0, 1, 1], [], []>} : vector<1x64xf32>, vector<64x64xf32>, vector<1x64xf32> -> vector<1x64xf32>
    %c0_27 = arith.constant 0 : index
    %c0_28 = arith.constant 0 : index
    %37 = vector.load %arg9[%c0_27, %c0_28] : memref<2x64xf32, #tpu.memory_space<vmem>>, vector<1x64xf32>
    %38 = arith.addf %36, %37 : vector<1x64xf32>
    %c0_29 = arith.constant 0 : index
    %c0_30 = arith.constant 0 : index
    %c0_31 = arith.constant 0 : index
    %39 = vector.load %arg10[%c0_29, %c0_30, %c0_31] : memref<2x64x64xf32, #tpu.memory_space<vmem>>, vector<1x64x64xf32>
    %40 = vector.shape_cast %39 : vector<1x64x64xf32> to vector<64x64xf32>
    %cst_32 = arith.constant dense<0.000000e+00> : vector<1x64xf32>
    %41 = tpu.matmul %38, %40, %cst_32 {dimension_numbers = #tpu.dot_dimension_numbers<[1], [0], [0], [1], [0, 0, 1, 1], [], []>} : vector<1x64xf32>, vector<64x64xf32>, vector<1x64xf32> -> vector<1x64xf32>
    %c0_33 = arith.constant 0 : index
    %c0_34 = arith.constant 0 : index
    %42 = vector.load %arg11[%c0_33, %c0_34] : memref<2x64xf32, #tpu.memory_space<vmem>>, vector<1x64xf32>
    %43 = arith.addf %41, %42 : vector<1x64xf32>
    %44 = arith.addf %33, %43 : vector<1x64xf32>
    %c0_35 = arith.constant 0 : index
    %c0_36 = arith.constant 0 : index
    %45 = vector.load %arg18[%c0_35, %c0_36] : memref<2x64xf32, #tpu.memory_space<vmem>>, vector<1x64xf32>
    %c0_37 = arith.constant 0 : index
    %c0_38 = arith.constant 0 : index
    %46 = vector.load %arg19[%c0_37, %c0_38] : memref<2x64xf32, #tpu.memory_space<vmem>>, vector<1x64xf32>
    %cst_39 = arith.constant dense<0.000000e+00> : vector<1xf32>
    %47 = vector.multi_reduction <add>, %44, %cst_39 [1] : vector<1x64xf32> to vector<1xf32>
    %48 = vector.shape_cast %47 : vector<1xf32> to vector<1x1xf32>
    %cst_40 = arith.constant 6.400000e+01 : f32
    %49 = vector.broadcast %cst_40 : f32 to vector<1x1xf32>
    %50 = arith.divf %48, %49 : vector<1x1xf32>
    %51 = vector.broadcast %50 : vector<1x1xf32> to vector<1x64xf32>
    %52 = arith.subf %44, %51 : vector<1x64xf32>
    %53 = arith.mulf %52, %52 : vector<1x64xf32>
    %cst_41 = arith.constant dense<0.000000e+00> : vector<1xf32>
    %54 = vector.multi_reduction <add>, %53, %cst_41 [1] : vector<1x64xf32> to vector<1xf32>
    %55 = vector.shape_cast %54 : vector<1xf32> to vector<1x1xf32>
    %cst_42 = arith.constant 6.400000e+01 : f32
    %56 = vector.broadcast %cst_42 : f32 to vector<1x1xf32>
    %57 = arith.divf %55, %56 : vector<1x1xf32>
    %58 = vector.broadcast %50 : vector<1x1xf32> to vector<1x64xf32>
    %59 = arith.subf %44, %58 : vector<1x64xf32>
    %cst_43 = arith.constant 9.99999974E-6 : f32
    %60 = vector.broadcast %cst_43 : f32 to vector<1x1xf32>
    %61 = arith.addf %57, %60 : vector<1x1xf32>
    %62 = math.rsqrt %61 : vector<1x1xf32>
    %63 = vector.broadcast %62 : vector<1x1xf32> to vector<1x64xf32>
    %64 = arith.mulf %59, %63 : vector<1x64xf32>
    %65 = arith.mulf %64, %45 : vector<1x64xf32>
    %66 = arith.addf %65, %46 : vector<1x64xf32>
    %c0_44 = arith.constant 0 : index
    %c0_45 = arith.constant 0 : index
    %c0_46 = arith.constant 0 : index
    %67 = vector.load %arg12[%c0_44, %c0_45, %c0_46] : memref<2x64x128xf32, #tpu.memory_space<vmem>>, vector<1x64x128xf32>
    %68 = vector.shape_cast %67 : vector<1x64x128xf32> to vector<64x128xf32>
    %cst_47 = arith.constant dense<0.000000e+00> : vector<1x128xf32>
    %69 = tpu.matmul %66, %68, %cst_47 {dimension_numbers = #tpu.dot_dimension_numbers<[1], [0], [0], [1], [0, 0, 1, 1], [], []>} : vector<1x64xf32>, vector<64x128xf32>, vector<1x128xf32> -> vector<1x128xf32>
    %c0_48 = arith.constant 0 : index
    %c0_49 = arith.constant 0 : index
    %70 = vector.load %arg13[%c0_48, %c0_49] : memref<2x128xf32, #tpu.memory_space<vmem>>, vector<1x128xf32>
    %71 = arith.addf %69, %70 : vector<1x128xf32>
    %cst_50 = arith.constant 0.000000e+00 : f32
    %72 = vector.broadcast %cst_50 : f32 to vector<1x128xf32>
    %73 = arith.maximumf %71, %72 : vector<1x128xf32>
    %c0_51 = arith.constant 0 : index
    %c0_52 = arith.constant 0 : index
    %c0_53 = arith.constant 0 : index
    %74 = vector.load %arg14[%c0_51, %c0_52, %c0_53] : memref<2x128x64xf32, #tpu.memory_space<vmem>>, vector<1x128x64xf32>
    %75 = vector.shape_cast %74 : vector<1x128x64xf32> to vector<128x64xf32>
    %cst_54 = arith.constant dense<0.000000e+00> : vector<1x64xf32>
    %76 = tpu.matmul %73, %75, %cst_54 {dimension_numbers = #tpu.dot_dimension_numbers<[1], [0], [0], [1], [0, 0, 1, 1], [], []>} : vector<1x128xf32>, vector<128x64xf32>, vector<1x64xf32> -> vector<1x64xf32>
    %c0_55 = arith.constant 0 : index
    %c0_56 = arith.constant 0 : index
    %77 = vector.load %arg15[%c0_55, %c0_56] : memref<2x64xf32, #tpu.memory_space<vmem>>, vector<1x64xf32>
    %78 = arith.addf %76, %77 : vector<1x64xf32>
    %79 = arith.addf %66, %78 : vector<1x64xf32>
    %c0_57 = arith.constant 0 : index
    %c0_58 = arith.constant 0 : index
    %80 = vector.load %arg20[%c0_57, %c0_58] : memref<2x64xf32, #tpu.memory_space<vmem>>, vector<1x64xf32>
    %c0_59 = arith.constant 0 : index
    %c0_60 = arith.constant 0 : index
    %81 = vector.load %arg21[%c0_59, %c0_60] : memref<2x64xf32, #tpu.memory_space<vmem>>, vector<1x64xf32>
    %cst_61 = arith.constant dense<0.000000e+00> : vector<1xf32>
    %82 = vector.multi_reduction <add>, %79, %cst_61 [1] : vector<1x64xf32> to vector<1xf32>
    %83 = vector.shape_cast %82 : vector<1xf32> to vector<1x1xf32>
    %cst_62 = arith.constant 6.400000e+01 : f32
    %84 = vector.broadcast %cst_62 : f32 to vector<1x1xf32>
    %85 = arith.divf %83, %84 : vector<1x1xf32>
    %86 = vector.broadcast %85 : vector<1x1xf32> to vector<1x64xf32>
    %87 = arith.subf %79, %86 : vector<1x64xf32>
    %88 = arith.mulf %87, %87 : vector<1x64xf32>
    %cst_63 = arith.constant dense<0.000000e+00> : vector<1xf32>
    %89 = vector.multi_reduction <add>, %88, %cst_63 [1] : vector<1x64xf32> to vector<1xf32>
    %90 = vector.shape_cast %89 : vector<1xf32> to vector<1x1xf32>
    %cst_64 = arith.constant 6.400000e+01 : f32
    %91 = vector.broadcast %cst_64 : f32 to vector<1x1xf32>
    %92 = arith.divf %90, %91 : vector<1x1xf32>
    %93 = vector.broadcast %85 : vector<1x1xf32> to vector<1x64xf32>
    %94 = arith.subf %79, %93 : vector<1x64xf32>
    %cst_65 = arith.constant 9.99999974E-6 : f32
    %95 = vector.broadcast %cst_65 : f32 to vector<1x1xf32>
    %96 = arith.addf %92, %95 : vector<1x1xf32>
    %97 = math.rsqrt %96 : vector<1x1xf32>
    %98 = vector.broadcast %97 : vector<1x1xf32> to vector<1x64xf32>
    %99 = arith.mulf %94, %98 : vector<1x64xf32>
    %100 = arith.mulf %99, %80 : vector<1x64xf32>
    %101 = arith.addf %100, %81 : vector<1x64xf32>
    %c1 = arith.constant 1 : index
    %c0_66 = arith.constant 0 : index
    %c0_67 = arith.constant 0 : index
    %102 = vector.load %arg4[%c1, %c0_66, %c0_67] : memref<2x64x64xf32, #tpu.memory_space<vmem>>, vector<1x64x64xf32>
    %103 = vector.shape_cast %102 : vector<1x64x64xf32> to vector<64x64xf32>
    %cst_68 = arith.constant dense<0.000000e+00> : vector<1x64xf32>
    %104 = tpu.matmul %101, %103, %cst_68 {dimension_numbers = #tpu.dot_dimension_numbers<[1], [0], [0], [1], [0, 0, 1, 1], [], []>} : vector<1x64xf32>, vector<64x64xf32>, vector<1x64xf32> -> vector<1x64xf32>
    %c1_69 = arith.constant 1 : index
    %c0_70 = arith.constant 0 : index
    %105 = vector.load %arg5[%c1_69, %c0_70] : memref<2x64xf32, #tpu.memory_space<vmem>>, vector<1x64xf32>
    %106 = arith.addf %104, %105 : vector<1x64xf32>
    %c1_71 = arith.constant 1 : index
    %c0_72 = arith.constant 0 : index
    %c0_73 = arith.constant 0 : index
    %107 = vector.load %arg6[%c1_71, %c0_72, %c0_73] : memref<2x64x64xf32, #tpu.memory_space<vmem>>, vector<1x64x64xf32>
    %108 = vector.shape_cast %107 : vector<1x64x64xf32> to vector<64x64xf32>
    %cst_74 = arith.constant dense<0.000000e+00> : vector<1x64xf32>
    %109 = tpu.matmul %106, %108, %cst_74 {dimension_numbers = #tpu.dot_dimension_numbers<[1], [0], [0], [1], [0, 0, 1, 1], [], []>} : vector<1x64xf32>, vector<64x64xf32>, vector<1x64xf32> -> vector<1x64xf32>
    %c1_75 = arith.constant 1 : index
    %c0_76 = arith.constant 0 : index
    %110 = vector.load %arg7[%c1_75, %c0_76] : memref<2x64xf32, #tpu.memory_space<vmem>>, vector<1x64xf32>
    %111 = arith.addf %109, %110 : vector<1x64xf32>
    %112 = arith.addf %101, %111 : vector<1x64xf32>
    %c1_77 = arith.constant 1 : index
    %c0_78 = arith.constant 0 : index
    %113 = vector.load %arg16[%c1_77, %c0_78] : memref<2x64xf32, #tpu.memory_space<vmem>>, vector<1x64xf32>
    %c1_79 = arith.constant 1 : index
    %c0_80 = arith.constant 0 : index
    %114 = vector.load %arg17[%c1_79, %c0_80] : memref<2x64xf32, #tpu.memory_space<vmem>>, vector<1x64xf32>
    %cst_81 = arith.constant dense<0.000000e+00> : vector<1xf32>
    %115 = vector.multi_reduction <add>, %112, %cst_81 [1] : vector<1x64xf32> to vector<1xf32>
    %116 = vector.shape_cast %115 : vector<1xf32> to vector<1x1xf32>
    %cst_82 = arith.constant 6.400000e+01 : f32
    %117 = vector.broadcast %cst_82 : f32 to vector<1x1xf32>
    %118 = arith.divf %116, %117 : vector<1x1xf32>
    %119 = vector.broadcast %118 : vector<1x1xf32> to vector<1x64xf32>
    %120 = arith.subf %112, %119 : vector<1x64xf32>
    %121 = arith.mulf %120, %120 : vector<1x64xf32>
    %cst_83 = arith.constant dense<0.000000e+00> : vector<1xf32>
    %122 = vector.multi_reduction <add>, %121, %cst_83 [1] : vector<1x64xf32> to vector<1xf32>
    %123 = vector.shape_cast %122 : vector<1xf32> to vector<1x1xf32>
    %cst_84 = arith.constant 6.400000e+01 : f32
    %124 = vector.broadcast %cst_84 : f32 to vector<1x1xf32>
    %125 = arith.divf %123, %124 : vector<1x1xf32>
    %126 = vector.broadcast %118 : vector<1x1xf32> to vector<1x64xf32>
    %127 = arith.subf %112, %126 : vector<1x64xf32>
    %cst_85 = arith.constant 9.99999974E-6 : f32
    %128 = vector.broadcast %cst_85 : f32 to vector<1x1xf32>
    %129 = arith.addf %125, %128 : vector<1x1xf32>
    %130 = math.rsqrt %129 : vector<1x1xf32>
    %131 = vector.broadcast %130 : vector<1x1xf32> to vector<1x64xf32>
    %132 = arith.mulf %127, %131 : vector<1x64xf32>
    %133 = arith.mulf %132, %113 : vector<1x64xf32>
    %134 = arith.addf %133, %114 : vector<1x64xf32>
    %c1_86 = arith.constant 1 : index
    %c0_87 = arith.constant 0 : index
    %c0_88 = arith.constant 0 : index
    %135 = vector.load %arg8[%c1_86, %c0_87, %c0_88] : memref<2x64x64xf32, #tpu.memory_space<vmem>>, vector<1x64x64xf32>
    %136 = vector.shape_cast %135 : vector<1x64x64xf32> to vector<64x64xf32>
    %cst_89 = arith.constant dense<0.000000e+00> : vector<1x64xf32>
    %137 = tpu.matmul %5, %136, %cst_89 {dimension_numbers = #tpu.dot_dimension_numbers<[1], [0], [0], [1], [0, 0, 1, 1], [], []>} : vector<1x64xf32>, vector<64x64xf32>, vector<1x64xf32> -> vector<1x64xf32>
    %c1_90 = arith.constant 1 : index
    %c0_91 = arith.constant 0 : index
    %138 = vector.load %arg9[%c1_90, %c0_91] : memref<2x64xf32, #tpu.memory_space<vmem>>, vector<1x64xf32>
    %139 = arith.addf %137, %138 : vector<1x64xf32>
    %c1_92 = arith.constant 1 : index
    %c0_93 = arith.constant 0 : index
    %c0_94 = arith.constant 0 : index
    %140 = vector.load %arg10[%c1_92, %c0_93, %c0_94] : memref<2x64x64xf32, #tpu.memory_space<vmem>>, vector<1x64x64xf32>
    %141 = vector.shape_cast %140 : vector<1x64x64xf32> to vector<64x64xf32>
    %cst_95 = arith.constant dense<0.000000e+00> : vector<1x64xf32>
    %142 = tpu.matmul %139, %141, %cst_95 {dimension_numbers = #tpu.dot_dimension_numbers<[1], [0], [0], [1], [0, 0, 1, 1], [], []>} : vector<1x64xf32>, vector<64x64xf32>, vector<1x64xf32> -> vector<1x64xf32>
    %c1_96 = arith.constant 1 : index
    %c0_97 = arith.constant 0 : index
    %143 = vector.load %arg11[%c1_96, %c0_97] : memref<2x64xf32, #tpu.memory_space<vmem>>, vector<1x64xf32>
    %144 = arith.addf %142, %143 : vector<1x64xf32>
    %145 = arith.addf %134, %144 : vector<1x64xf32>
    %c1_98 = arith.constant 1 : index
    %c0_99 = arith.constant 0 : index
    %146 = vector.load %arg18[%c1_98, %c0_99] : memref<2x64xf32, #tpu.memory_space<vmem>>, vector<1x64xf32>
    %c1_100 = arith.constant 1 : index
    %c0_101 = arith.constant 0 : index
    %147 = vector.load %arg19[%c1_100, %c0_101] : memref<2x64xf32, #tpu.memory_space<vmem>>, vector<1x64xf32>
    %cst_102 = arith.constant dense<0.000000e+00> : vector<1xf32>
    %148 = vector.multi_reduction <add>, %145, %cst_102 [1] : vector<1x64xf32> to vector<1xf32>
    %149 = vector.shape_cast %148 : vector<1xf32> to vector<1x1xf32>
    %cst_103 = arith.constant 6.400000e+01 : f32
    %150 = vector.broadcast %cst_103 : f32 to vector<1x1xf32>
    %151 = arith.divf %149, %150 : vector<1x1xf32>
    %152 = vector.broadcast %151 : vector<1x1xf32> to vector<1x64xf32>
    %153 = arith.subf %145, %152 : vector<1x64xf32>
    %154 = arith.mulf %153, %153 : vector<1x64xf32>
    %cst_104 = arith.constant dense<0.000000e+00> : vector<1xf32>
    %155 = vector.multi_reduction <add>, %154, %cst_104 [1] : vector<1x64xf32> to vector<1xf32>
    %156 = vector.shape_cast %155 : vector<1xf32> to vector<1x1xf32>
    %cst_105 = arith.constant 6.400000e+01 : f32
    %157 = vector.broadcast %cst_105 : f32 to vector<1x1xf32>
    %158 = arith.divf %156, %157 : vector<1x1xf32>
    %159 = vector.broadcast %151 : vector<1x1xf32> to vector<1x64xf32>
    %160 = arith.subf %145, %159 : vector<1x64xf32>
    %cst_106 = arith.constant 9.99999974E-6 : f32
    %161 = vector.broadcast %cst_106 : f32 to vector<1x1xf32>
    %162 = arith.addf %158, %161 : vector<1x1xf32>
    %163 = math.rsqrt %162 : vector<1x1xf32>
    %164 = vector.broadcast %163 : vector<1x1xf32> to vector<1x64xf32>
    %165 = arith.mulf %160, %164 : vector<1x64xf32>
    %166 = arith.mulf %165, %146 : vector<1x64xf32>
    %167 = arith.addf %166, %147 : vector<1x64xf32>
    %c1_107 = arith.constant 1 : index
    %c0_108 = arith.constant 0 : index
    %c0_109 = arith.constant 0 : index
    %168 = vector.load %arg12[%c1_107, %c0_108, %c0_109] : memref<2x64x128xf32, #tpu.memory_space<vmem>>, vector<1x64x128xf32>
    %169 = vector.shape_cast %168 : vector<1x64x128xf32> to vector<64x128xf32>
    %cst_110 = arith.constant dense<0.000000e+00> : vector<1x128xf32>
    %170 = tpu.matmul %167, %169, %cst_110 {dimension_numbers = #tpu.dot_dimension_numbers<[1], [0], [0], [1], [0, 0, 1, 1], [], []>} : vector<1x64xf32>, vector<64x128xf32>, vector<1x128xf32> -> vector<1x128xf32>
    %c1_111 = arith.constant 1 : index
    %c0_112 = arith.constant 0 : index
    %171 = vector.load %arg13[%c1_111, %c0_112] : memref<2x128xf32, #tpu.memory_space<vmem>>, vector<1x128xf32>
    %172 = arith.addf %170, %171 : vector<1x128xf32>
    %cst_113 = arith.constant 0.000000e+00 : f32
    %173 = vector.broadcast %cst_113 : f32 to vector<1x128xf32>
    %174 = arith.maximumf %172, %173 : vector<1x128xf32>
    %c1_114 = arith.constant 1 : index
    %c0_115 = arith.constant 0 : index
    %c0_116 = arith.constant 0 : index
    %175 = vector.load %arg14[%c1_114, %c0_115, %c0_116] : memref<2x128x64xf32, #tpu.memory_space<vmem>>, vector<1x128x64xf32>
    %176 = vector.shape_cast %175 : vector<1x128x64xf32> to vector<128x64xf32>
    %cst_117 = arith.constant dense<0.000000e+00> : vector<1x64xf32>
    %177 = tpu.matmul %174, %176, %cst_117 {dimension_numbers = #tpu.dot_dimension_numbers<[1], [0], [0], [1], [0, 0, 1, 1], [], []>} : vector<1x128xf32>, vector<128x64xf32>, vector<1x64xf32> -> vector<1x64xf32>
    %c1_118 = arith.constant 1 : index
    %c0_119 = arith.constant 0 : index
    %178 = vector.load %arg15[%c1_118, %c0_119] : memref<2x64xf32, #tpu.memory_space<vmem>>, vector<1x64xf32>
    %179 = arith.addf %177, %178 : vector<1x64xf32>
    %180 = arith.addf %167, %179 : vector<1x64xf32>
    %c1_120 = arith.constant 1 : index
    %c0_121 = arith.constant 0 : index
    %181 = vector.load %arg20[%c1_120, %c0_121] : memref<2x64xf32, #tpu.memory_space<vmem>>, vector<1x64xf32>
    %c1_122 = arith.constant 1 : index
    %c0_123 = arith.constant 0 : index
    %182 = vector.load %arg21[%c1_122, %c0_123] : memref<2x64xf32, #tpu.memory_space<vmem>>, vector<1x64xf32>
    %cst_124 = arith.constant dense<0.000000e+00> : vector<1xf32>
    %183 = vector.multi_reduction <add>, %180, %cst_124 [1] : vector<1x64xf32> to vector<1xf32>
    %184 = vector.shape_cast %183 : vector<1xf32> to vector<1x1xf32>
    %cst_125 = arith.constant 6.400000e+01 : f32
    %185 = vector.broadcast %cst_125 : f32 to vector<1x1xf32>
    %186 = arith.divf %184, %185 : vector<1x1xf32>
    %187 = vector.broadcast %186 : vector<1x1xf32> to vector<1x64xf32>
    %188 = arith.subf %180, %187 : vector<1x64xf32>
    %189 = arith.mulf %188, %188 : vector<1x64xf32>
    %cst_126 = arith.constant dense<0.000000e+00> : vector<1xf32>
    %190 = vector.multi_reduction <add>, %189, %cst_126 [1] : vector<1x64xf32> to vector<1xf32>
    %191 = vector.shape_cast %190 : vector<1xf32> to vector<1x1xf32>
    %cst_127 = arith.constant 6.400000e+01 : f32
    %192 = vector.broadcast %cst_127 : f32 to vector<1x1xf32>
    %193 = arith.divf %191, %192 : vector<1x1xf32>
    %194 = vector.broadcast %186 : vector<1x1xf32> to vector<1x64xf32>
    %195 = arith.subf %180, %194 : vector<1x64xf32>
    %cst_128 = arith.constant 9.99999974E-6 : f32
    %196 = vector.broadcast %cst_128 : f32 to vector<1x1xf32>
    %197 = arith.addf %193, %196 : vector<1x1xf32>
    %198 = math.rsqrt %197 : vector<1x1xf32>
    %199 = vector.broadcast %198 : vector<1x1xf32> to vector<1x64xf32>
    %200 = arith.mulf %195, %199 : vector<1x64xf32>
    %201 = arith.mulf %200, %181 : vector<1x64xf32>
    %202 = arith.addf %201, %182 : vector<1x64xf32>
    %c0_129 = arith.constant 0 : index
    %c0_130 = arith.constant 0 : index
    %203 = vector.load %arg22[%c0_129, %c0_130] : memref<1x64xf32, #tpu.memory_space<vmem>>, vector<1x64xf32>
    %c0_131 = arith.constant 0 : index
    %c0_132 = arith.constant 0 : index
    %204 = vector.load %arg23[%c0_131, %c0_132] : memref<1x64xf32, #tpu.memory_space<vmem>>, vector<1x64xf32>
    %cst_133 = arith.constant dense<0.000000e+00> : vector<1xf32>
    %205 = vector.multi_reduction <add>, %202, %cst_133 [1] : vector<1x64xf32> to vector<1xf32>
    %206 = vector.shape_cast %205 : vector<1xf32> to vector<1x1xf32>
    %cst_134 = arith.constant 6.400000e+01 : f32
    %207 = vector.broadcast %cst_134 : f32 to vector<1x1xf32>
    %208 = arith.divf %206, %207 : vector<1x1xf32>
    %209 = vector.broadcast %208 : vector<1x1xf32> to vector<1x64xf32>
    %210 = arith.subf %202, %209 : vector<1x64xf32>
    %211 = arith.mulf %210, %210 : vector<1x64xf32>
    %cst_135 = arith.constant dense<0.000000e+00> : vector<1xf32>
    %212 = vector.multi_reduction <add>, %211, %cst_135 [1] : vector<1x64xf32> to vector<1xf32>
    %213 = vector.shape_cast %212 : vector<1xf32> to vector<1x1xf32>
    %cst_136 = arith.constant 6.400000e+01 : f32
    %214 = vector.broadcast %cst_136 : f32 to vector<1x1xf32>
    %215 = arith.divf %213, %214 : vector<1x1xf32>
    %216 = vector.broadcast %208 : vector<1x1xf32> to vector<1x64xf32>
    %217 = arith.subf %202, %216 : vector<1x64xf32>
    %cst_137 = arith.constant 9.99999974E-6 : f32
    %218 = vector.broadcast %cst_137 : f32 to vector<1x1xf32>
    %219 = arith.addf %215, %218 : vector<1x1xf32>
    %220 = math.rsqrt %219 : vector<1x1xf32>
    %221 = vector.broadcast %220 : vector<1x1xf32> to vector<1x64xf32>
    %222 = arith.mulf %217, %221 : vector<1x64xf32>
    %223 = arith.mulf %222, %203 : vector<1x64xf32>
    %224 = arith.addf %223, %204 : vector<1x64xf32>
    %225 = vector.shape_cast %224 : vector<1x64xf32> to vector<1x1x64xf32>
    %226 = vector.shape_cast %225 : vector<1x1x64xf32> to vector<1x1x64xf32>
    %227 = vector.broadcast %226 : vector<1x1x64xf32> to vector<1x4x64xf32>
    %228 = vector.shape_cast %227 : vector<1x4x64xf32> to vector<4x64xf32>
    %c0_138 = arith.constant 0 : index
    %c0_139 = arith.constant 0 : index
    %229 = vector.load %arg24[%c0_138, %c0_139] : memref<64x64xf32, #tpu.memory_space<vmem>>, vector<64x64xf32>
    %cst_140 = arith.constant dense<0.000000e+00> : vector<4x64xf32>
    %230 = tpu.matmul %228, %229, %cst_140 {dimension_numbers = #tpu.dot_dimension_numbers<[1], [0], [0], [1], [0, 0, 1, 1], [], []>} : vector<4x64xf32>, vector<64x64xf32>, vector<4x64xf32> -> vector<4x64xf32>
    %c0_141 = arith.constant 0 : index
    %c0_142 = arith.constant 0 : index
    %231 = vector.load %arg25[%c0_141, %c0_142] : memref<1x64xf32, #tpu.memory_space<vmem>>, vector<1x64xf32>
    %232 = vector.broadcast %231 : vector<1x64xf32> to vector<4x64xf32>
    %233 = arith.addf %230, %232 : vector<4x64xf32>
    %c0_143 = arith.constant 0 : index
    %c0_144 = arith.constant 0 : index
    %234 = vector.load %arg27[%c0_143, %c0_144] : memref<2x64xf32, #tpu.memory_space<vmem>>, vector<1x64xf32>
    %c0_145 = arith.constant 0 : index
    %c0_146 = arith.constant 0 : index
    %c0_147 = arith.constant 0 : index
    %235 = vector.load %arg28[%c0_145, %c0_146, %c0_147] : memref<2x64x64xf32, #tpu.memory_space<vmem>>, vector<1x64x64xf32>
    %236 = vector.shape_cast %235 : vector<1x64x64xf32> to vector<64x64xf32>
    %cst_148 = arith.constant dense<0.000000e+00> : vector<1x64xf32>
    %237 = tpu.matmul %234, %236, %cst_148 {dimension_numbers = #tpu.dot_dimension_numbers<[1], [0], [0], [1], [0, 0, 1, 1], [], []>} : vector<1x64xf32>, vector<64x64xf32>, vector<1x64xf32> -> vector<1x64xf32>
    %c0_149 = arith.constant 0 : index
    %c0_150 = arith.constant 0 : index
    %238 = vector.load %arg29[%c0_149, %c0_150] : memref<2x64xf32, #tpu.memory_space<vmem>>, vector<1x64xf32>
    %239 = arith.addf %237, %238 : vector<1x64xf32>
    %c0_151 = arith.constant 0 : index
    %c0_152 = arith.constant 0 : index
    %240 = vector.load %arg38[%c0_151, %c0_152] : memref<2x64xf32, #tpu.memory_space<vmem>>, vector<1x64xf32>
    %c0_153 = arith.constant 0 : index
    %c0_154 = arith.constant 0 : index
    %241 = vector.load %arg39[%c0_153, %c0_154] : memref<2x64xf32, #tpu.memory_space<vmem>>, vector<1x64xf32>
    %cst_155 = arith.constant dense<0.000000e+00> : vector<1xf32>
    %242 = vector.multi_reduction <add>, %239, %cst_155 [1] : vector<1x64xf32> to vector<1xf32>
    %243 = vector.shape_cast %242 : vector<1xf32> to vector<1x1xf32>
    %cst_156 = arith.constant 6.400000e+01 : f32
    %244 = vector.broadcast %cst_156 : f32 to vector<1x1xf32>
    %245 = arith.divf %243, %244 : vector<1x1xf32>
    %246 = vector.broadcast %245 : vector<1x1xf32> to vector<1x64xf32>
    %247 = arith.subf %239, %246 : vector<1x64xf32>
    %248 = arith.mulf %247, %247 : vector<1x64xf32>
    %cst_157 = arith.constant dense<0.000000e+00> : vector<1xf32>
    %249 = vector.multi_reduction <add>, %248, %cst_157 [1] : vector<1x64xf32> to vector<1xf32>
    %250 = vector.shape_cast %249 : vector<1xf32> to vector<1x1xf32>
    %cst_158 = arith.constant 6.400000e+01 : f32
    %251 = vector.broadcast %cst_158 : f32 to vector<1x1xf32>
    %252 = arith.divf %250, %251 : vector<1x1xf32>
    %253 = vector.broadcast %245 : vector<1x1xf32> to vector<1x64xf32>
    %254 = arith.subf %239, %253 : vector<1x64xf32>
    %cst_159 = arith.constant 9.99999974E-6 : f32
    %255 = vector.broadcast %cst_159 : f32 to vector<1x1xf32>
    %256 = arith.addf %252, %255 : vector<1x1xf32>
    %257 = math.rsqrt %256 : vector<1x1xf32>
    %258 = vector.broadcast %257 : vector<1x1xf32> to vector<1x64xf32>
    %259 = arith.mulf %254, %258 : vector<1x64xf32>
    %260 = arith.mulf %259, %240 : vector<1x64xf32>
    %261 = arith.addf %260, %241 : vector<1x64xf32>
    %262 = vector.shape_cast %261 : vector<1x64xf32> to vector<1x64xf32>
    %263 = vector.broadcast %262 : vector<1x64xf32> to vector<4x64xf32>
    %c0_160 = arith.constant 0 : index
    %c0_161 = arith.constant 0 : index
    %c0_162 = arith.constant 0 : index
    %264 = vector.load %arg30[%c0_160, %c0_161, %c0_162] : memref<2x64x64xf32, #tpu.memory_space<vmem>>, vector<1x64x64xf32>
    %265 = vector.shape_cast %264 : vector<1x64x64xf32> to vector<64x64xf32>
    %cst_163 = arith.constant dense<0.000000e+00> : vector<4x64xf32>
    %266 = tpu.matmul %233, %265, %cst_163 {dimension_numbers = #tpu.dot_dimension_numbers<[1], [0], [0], [1], [0, 0, 1, 1], [], []>} : vector<4x64xf32>, vector<64x64xf32>, vector<4x64xf32> -> vector<4x64xf32>
    %c0_164 = arith.constant 0 : index
    %c0_165 = arith.constant 0 : index
    %267 = vector.load %arg31[%c0_164, %c0_165] : memref<2x64xf32, #tpu.memory_space<vmem>>, vector<1x64xf32>
    %268 = vector.broadcast %267 : vector<1x64xf32> to vector<4x64xf32>
    %269 = arith.addf %266, %268 : vector<4x64xf32>
    %c0_166 = arith.constant 0 : index
    %c0_167 = arith.constant 0 : index
    %c0_168 = arith.constant 0 : index
    %270 = vector.load %arg32[%c0_166, %c0_167, %c0_168] : memref<2x64x64xf32, #tpu.memory_space<vmem>>, vector<1x64x64xf32>
    %271 = vector.shape_cast %270 : vector<1x64x64xf32> to vector<64x64xf32>
    %cst_169 = arith.constant dense<0.000000e+00> : vector<4x64xf32>
    %272 = tpu.matmul %269, %271, %cst_169 {dimension_numbers = #tpu.dot_dimension_numbers<[1], [0], [0], [1], [0, 0, 1, 1], [], []>} : vector<4x64xf32>, vector<64x64xf32>, vector<4x64xf32> -> vector<4x64xf32>
    %c0_170 = arith.constant 0 : index
    %c0_171 = arith.constant 0 : index
    %273 = vector.load %arg33[%c0_170, %c0_171] : memref<2x64xf32, #tpu.memory_space<vmem>>, vector<1x64xf32>
    %274 = vector.broadcast %273 : vector<1x64xf32> to vector<4x64xf32>
    %275 = arith.addf %272, %274 : vector<4x64xf32>
    %276 = arith.addf %263, %275 : vector<4x64xf32>
    %c0_172 = arith.constant 0 : index
    %c0_173 = arith.constant 0 : index
    %277 = vector.load %arg40[%c0_172, %c0_173] : memref<2x64xf32, #tpu.memory_space<vmem>>, vector<1x64xf32>
    %c0_174 = arith.constant 0 : index
    %c0_175 = arith.constant 0 : index
    %278 = vector.load %arg41[%c0_174, %c0_175] : memref<2x64xf32, #tpu.memory_space<vmem>>, vector<1x64xf32>
    %cst_176 = arith.constant dense<0.000000e+00> : vector<4xf32>
    %279 = vector.multi_reduction <add>, %276, %cst_176 [1] : vector<4x64xf32> to vector<4xf32>
    %280 = vector.shape_cast %279 : vector<4xf32> to vector<4x1xf32>
    %cst_177 = arith.constant 6.400000e+01 : f32
    %281 = vector.broadcast %cst_177 : f32 to vector<4x1xf32>
    %282 = arith.divf %280, %281 : vector<4x1xf32>
    %283 = vector.broadcast %282 : vector<4x1xf32> to vector<4x64xf32>
    %284 = arith.subf %276, %283 : vector<4x64xf32>
    %285 = arith.mulf %284, %284 : vector<4x64xf32>
    %cst_178 = arith.constant dense<0.000000e+00> : vector<4xf32>
    %286 = vector.multi_reduction <add>, %285, %cst_178 [1] : vector<4x64xf32> to vector<4xf32>
    %287 = vector.shape_cast %286 : vector<4xf32> to vector<4x1xf32>
    %cst_179 = arith.constant 6.400000e+01 : f32
    %288 = vector.broadcast %cst_179 : f32 to vector<4x1xf32>
    %289 = arith.divf %287, %288 : vector<4x1xf32>
    %290 = vector.broadcast %282 : vector<4x1xf32> to vector<4x64xf32>
    %291 = arith.subf %276, %290 : vector<4x64xf32>
    %cst_180 = arith.constant 9.99999974E-6 : f32
    %292 = vector.broadcast %cst_180 : f32 to vector<4x1xf32>
    %293 = arith.addf %289, %292 : vector<4x1xf32>
    %294 = math.rsqrt %293 : vector<4x1xf32>
    %295 = vector.broadcast %294 : vector<4x1xf32> to vector<4x64xf32>
    %296 = arith.mulf %291, %295 : vector<4x64xf32>
    %297 = vector.broadcast %277 : vector<1x64xf32> to vector<4x64xf32>
    %298 = arith.mulf %296, %297 : vector<4x64xf32>
    %299 = vector.broadcast %278 : vector<1x64xf32> to vector<4x64xf32>
    %300 = arith.addf %298, %299 : vector<4x64xf32>
    %c0_181 = arith.constant 0 : index
    %c0_182 = arith.constant 0 : index
    %c0_183 = arith.constant 0 : index
    %301 = vector.load %arg34[%c0_181, %c0_182, %c0_183] : memref<2x64x128xf32, #tpu.memory_space<vmem>>, vector<1x64x128xf32>
    %302 = vector.shape_cast %301 : vector<1x64x128xf32> to vector<64x128xf32>
    %cst_184 = arith.constant dense<0.000000e+00> : vector<4x128xf32>
    %303 = tpu.matmul %300, %302, %cst_184 {dimension_numbers = #tpu.dot_dimension_numbers<[1], [0], [0], [1], [0, 0, 1, 1], [], []>} : vector<4x64xf32>, vector<64x128xf32>, vector<4x128xf32> -> vector<4x128xf32>
    %c0_185 = arith.constant 0 : index
    %c0_186 = arith.constant 0 : index
    %304 = vector.load %arg35[%c0_185, %c0_186] : memref<2x128xf32, #tpu.memory_space<vmem>>, vector<1x128xf32>
    %305 = vector.broadcast %304 : vector<1x128xf32> to vector<4x128xf32>
    %306 = arith.addf %303, %305 : vector<4x128xf32>
    %cst_187 = arith.constant 0.000000e+00 : f32
    %307 = vector.broadcast %cst_187 : f32 to vector<4x128xf32>
    %308 = arith.maximumf %306, %307 : vector<4x128xf32>
    %c0_188 = arith.constant 0 : index
    %c0_189 = arith.constant 0 : index
    %c0_190 = arith.constant 0 : index
    %309 = vector.load %arg36[%c0_188, %c0_189, %c0_190] : memref<2x128x64xf32, #tpu.memory_space<vmem>>, vector<1x128x64xf32>
    %310 = vector.shape_cast %309 : vector<1x128x64xf32> to vector<128x64xf32>
    %cst_191 = arith.constant dense<0.000000e+00> : vector<4x64xf32>
    %311 = tpu.matmul %308, %310, %cst_191 {dimension_numbers = #tpu.dot_dimension_numbers<[1], [0], [0], [1], [0, 0, 1, 1], [], []>} : vector<4x128xf32>, vector<128x64xf32>, vector<4x64xf32> -> vector<4x64xf32>
    %c0_192 = arith.constant 0 : index
    %c0_193 = arith.constant 0 : index
    %312 = vector.load %arg37[%c0_192, %c0_193] : memref<2x64xf32, #tpu.memory_space<vmem>>, vector<1x64xf32>
    %313 = vector.broadcast %312 : vector<1x64xf32> to vector<4x64xf32>
    %314 = arith.addf %311, %313 : vector<4x64xf32>
    %315 = arith.addf %300, %314 : vector<4x64xf32>
    %c0_194 = arith.constant 0 : index
    %c0_195 = arith.constant 0 : index
    %316 = vector.load %arg42[%c0_194, %c0_195] : memref<2x64xf32, #tpu.memory_space<vmem>>, vector<1x64xf32>
    %c0_196 = arith.constant 0 : index
    %c0_197 = arith.constant 0 : index
    %317 = vector.load %arg43[%c0_196, %c0_197] : memref<2x64xf32, #tpu.memory_space<vmem>>, vector<1x64xf32>
    %cst_198 = arith.constant dense<0.000000e+00> : vector<4xf32>
    %318 = vector.multi_reduction <add>, %315, %cst_198 [1] : vector<4x64xf32> to vector<4xf32>
    %319 = vector.shape_cast %318 : vector<4xf32> to vector<4x1xf32>
    %cst_199 = arith.constant 6.400000e+01 : f32
    %320 = vector.broadcast %cst_199 : f32 to vector<4x1xf32>
    %321 = arith.divf %319, %320 : vector<4x1xf32>
    %322 = vector.broadcast %321 : vector<4x1xf32> to vector<4x64xf32>
    %323 = arith.subf %315, %322 : vector<4x64xf32>
    %324 = arith.mulf %323, %323 : vector<4x64xf32>
    %cst_200 = arith.constant dense<0.000000e+00> : vector<4xf32>
    %325 = vector.multi_reduction <add>, %324, %cst_200 [1] : vector<4x64xf32> to vector<4xf32>
    %326 = vector.shape_cast %325 : vector<4xf32> to vector<4x1xf32>
    %cst_201 = arith.constant 6.400000e+01 : f32
    %327 = vector.broadcast %cst_201 : f32 to vector<4x1xf32>
    %328 = arith.divf %326, %327 : vector<4x1xf32>
    %329 = vector.broadcast %321 : vector<4x1xf32> to vector<4x64xf32>
    %330 = arith.subf %315, %329 : vector<4x64xf32>
    %cst_202 = arith.constant 9.99999974E-6 : f32
    %331 = vector.broadcast %cst_202 : f32 to vector<4x1xf32>
    %332 = arith.addf %328, %331 : vector<4x1xf32>
    %333 = math.rsqrt %332 : vector<4x1xf32>
    %334 = vector.broadcast %333 : vector<4x1xf32> to vector<4x64xf32>
    %335 = arith.mulf %330, %334 : vector<4x64xf32>
    %336 = vector.broadcast %316 : vector<1x64xf32> to vector<4x64xf32>
    %337 = arith.mulf %335, %336 : vector<4x64xf32>
    %338 = vector.broadcast %317 : vector<1x64xf32> to vector<4x64xf32>
    %339 = arith.addf %337, %338 : vector<4x64xf32>
    %c1_203 = arith.constant 1 : index
    %c0_204 = arith.constant 0 : index
    %c0_205 = arith.constant 0 : index
    %340 = vector.load %arg26[%c1_203, %c0_204, %c0_205] : memref<2x64x64xf32, #tpu.memory_space<vmem>>, vector<1x64x64xf32>
    %341 = vector.shape_cast %340 : vector<1x64x64xf32> to vector<64x64xf32>
    %cst_206 = arith.constant dense<0.000000e+00> : vector<4x64xf32>
    %342 = tpu.matmul %339, %341, %cst_206 {dimension_numbers = #tpu.dot_dimension_numbers<[1], [0], [0], [1], [0, 0, 1, 1], [], []>} : vector<4x64xf32>, vector<64x64xf32>, vector<4x64xf32> -> vector<4x64xf32>
    %c1_207 = arith.constant 1 : index
    %c0_208 = arith.constant 0 : index
    %343 = vector.load %arg27[%c1_207, %c0_208] : memref<2x64xf32, #tpu.memory_space<vmem>>, vector<1x64xf32>
    %344 = vector.broadcast %343 : vector<1x64xf32> to vector<4x64xf32>
    %345 = arith.addf %342, %344 : vector<4x64xf32>
    %c1_209 = arith.constant 1 : index
    %c0_210 = arith.constant 0 : index
    %c0_211 = arith.constant 0 : index
    %346 = vector.load %arg28[%c1_209, %c0_210, %c0_211] : memref<2x64x64xf32, #tpu.memory_space<vmem>>, vector<1x64x64xf32>
    %347 = vector.shape_cast %346 : vector<1x64x64xf32> to vector<64x64xf32>
    %cst_212 = arith.constant dense<0.000000e+00> : vector<4x64xf32>
    %348 = tpu.matmul %345, %347, %cst_212 {dimension_numbers = #tpu.dot_dimension_numbers<[1], [0], [0], [1], [0, 0, 1, 1], [], []>} : vector<4x64xf32>, vector<64x64xf32>, vector<4x64xf32> -> vector<4x64xf32>
    %c1_213 = arith.constant 1 : index
    %c0_214 = arith.constant 0 : index
    %349 = vector.load %arg29[%c1_213, %c0_214] : memref<2x64xf32, #tpu.memory_space<vmem>>, vector<1x64xf32>
    %350 = vector.broadcast %349 : vector<1x64xf32> to vector<4x64xf32>
    %351 = arith.addf %348, %350 : vector<4x64xf32>
    %352 = arith.addf %339, %351 : vector<4x64xf32>
    %c1_215 = arith.constant 1 : index
    %c0_216 = arith.constant 0 : index
    %353 = vector.load %arg38[%c1_215, %c0_216] : memref<2x64xf32, #tpu.memory_space<vmem>>, vector<1x64xf32>
    %c1_217 = arith.constant 1 : index
    %c0_218 = arith.constant 0 : index
    %354 = vector.load %arg39[%c1_217, %c0_218] : memref<2x64xf32, #tpu.memory_space<vmem>>, vector<1x64xf32>
    %cst_219 = arith.constant dense<0.000000e+00> : vector<4xf32>
    %355 = vector.multi_reduction <add>, %352, %cst_219 [1] : vector<4x64xf32> to vector<4xf32>
    %356 = vector.shape_cast %355 : vector<4xf32> to vector<4x1xf32>
    %cst_220 = arith.constant 6.400000e+01 : f32
    %357 = vector.broadcast %cst_220 : f32 to vector<4x1xf32>
    %358 = arith.divf %356, %357 : vector<4x1xf32>
    %359 = vector.broadcast %358 : vector<4x1xf32> to vector<4x64xf32>
    %360 = arith.subf %352, %359 : vector<4x64xf32>
    %361 = arith.mulf %360, %360 : vector<4x64xf32>
    %cst_221 = arith.constant dense<0.000000e+00> : vector<4xf32>
    %362 = vector.multi_reduction <add>, %361, %cst_221 [1] : vector<4x64xf32> to vector<4xf32>
    %363 = vector.shape_cast %362 : vector<4xf32> to vector<4x1xf32>
    %cst_222 = arith.constant 6.400000e+01 : f32
    %364 = vector.broadcast %cst_222 : f32 to vector<4x1xf32>
    %365 = arith.divf %363, %364 : vector<4x1xf32>
    %366 = vector.broadcast %358 : vector<4x1xf32> to vector<4x64xf32>
    %367 = arith.subf %352, %366 : vector<4x64xf32>
    %cst_223 = arith.constant 9.99999974E-6 : f32
    %368 = vector.broadcast %cst_223 : f32 to vector<4x1xf32>
    %369 = arith.addf %365, %368 : vector<4x1xf32>
    %370 = math.rsqrt %369 : vector<4x1xf32>
    %371 = vector.broadcast %370 : vector<4x1xf32> to vector<4x64xf32>
    %372 = arith.mulf %367, %371 : vector<4x64xf32>
    %373 = vector.broadcast %353 : vector<1x64xf32> to vector<4x64xf32>
    %374 = arith.mulf %372, %373 : vector<4x64xf32>
    %375 = vector.broadcast %354 : vector<1x64xf32> to vector<4x64xf32>
    %376 = arith.addf %374, %375 : vector<4x64xf32>
    %c1_224 = arith.constant 1 : index
    %c0_225 = arith.constant 0 : index
    %c0_226 = arith.constant 0 : index
    %377 = vector.load %arg30[%c1_224, %c0_225, %c0_226] : memref<2x64x64xf32, #tpu.memory_space<vmem>>, vector<1x64x64xf32>
    %378 = vector.shape_cast %377 : vector<1x64x64xf32> to vector<64x64xf32>
    %cst_227 = arith.constant dense<0.000000e+00> : vector<4x64xf32>
    %379 = tpu.matmul %233, %378, %cst_227 {dimension_numbers = #tpu.dot_dimension_numbers<[1], [0], [0], [1], [0, 0, 1, 1], [], []>} : vector<4x64xf32>, vector<64x64xf32>, vector<4x64xf32> -> vector<4x64xf32>
    %c1_228 = arith.constant 1 : index
    %c0_229 = arith.constant 0 : index
    %380 = vector.load %arg31[%c1_228, %c0_229] : memref<2x64xf32, #tpu.memory_space<vmem>>, vector<1x64xf32>
    %381 = vector.broadcast %380 : vector<1x64xf32> to vector<4x64xf32>
    %382 = arith.addf %379, %381 : vector<4x64xf32>
    %c1_230 = arith.constant 1 : index
    %c0_231 = arith.constant 0 : index
    %c0_232 = arith.constant 0 : index
    %383 = vector.load %arg32[%c1_230, %c0_231, %c0_232] : memref<2x64x64xf32, #tpu.memory_space<vmem>>, vector<1x64x64xf32>
    %384 = vector.shape_cast %383 : vector<1x64x64xf32> to vector<64x64xf32>
    %cst_233 = arith.constant dense<0.000000e+00> : vector<4x64xf32>
    %385 = tpu.matmul %382, %384, %cst_233 {dimension_numbers = #tpu.dot_dimension_numbers<[1], [0], [0], [1], [0, 0, 1, 1], [], []>} : vector<4x64xf32>, vector<64x64xf32>, vector<4x64xf32> -> vector<4x64xf32>
    %c1_234 = arith.constant 1 : index
    %c0_235 = arith.constant 0 : index
    %386 = vector.load %arg33[%c1_234, %c0_235] : memref<2x64xf32, #tpu.memory_space<vmem>>, vector<1x64xf32>
    %387 = vector.broadcast %386 : vector<1x64xf32> to vector<4x64xf32>
    %388 = arith.addf %385, %387 : vector<4x64xf32>
    %389 = arith.addf %376, %388 : vector<4x64xf32>
    %c1_236 = arith.constant 1 : index
    %c0_237 = arith.constant 0 : index
    %390 = vector.load %arg40[%c1_236, %c0_237] : memref<2x64xf32, #tpu.memory_space<vmem>>, vector<1x64xf32>
    %c1_238 = arith.constant 1 : index
    %c0_239 = arith.constant 0 : index
    %391 = vector.load %arg41[%c1_238, %c0_239] : memref<2x64xf32, #tpu.memory_space<vmem>>, vector<1x64xf32>
    %cst_240 = arith.constant dense<0.000000e+00> : vector<4xf32>
    %392 = vector.multi_reduction <add>, %389, %cst_240 [1] : vector<4x64xf32> to vector<4xf32>
    %393 = vector.shape_cast %392 : vector<4xf32> to vector<4x1xf32>
    %cst_241 = arith.constant 6.400000e+01 : f32
    %394 = vector.broadcast %cst_241 : f32 to vector<4x1xf32>
    %395 = arith.divf %393, %394 : vector<4x1xf32>
    %396 = vector.broadcast %395 : vector<4x1xf32> to vector<4x64xf32>
    %397 = arith.subf %389, %396 : vector<4x64xf32>
    %398 = arith.mulf %397, %397 : vector<4x64xf32>
    %cst_242 = arith.constant dense<0.000000e+00> : vector<4xf32>
    %399 = vector.multi_reduction <add>, %398, %cst_242 [1] : vector<4x64xf32> to vector<4xf32>
    %400 = vector.shape_cast %399 : vector<4xf32> to vector<4x1xf32>
    %cst_243 = arith.constant 6.400000e+01 : f32
    %401 = vector.broadcast %cst_243 : f32 to vector<4x1xf32>
    %402 = arith.divf %400, %401 : vector<4x1xf32>
    %403 = vector.broadcast %395 : vector<4x1xf32> to vector<4x64xf32>
    %404 = arith.subf %389, %403 : vector<4x64xf32>
    %cst_244 = arith.constant 9.99999974E-6 : f32
    %405 = vector.broadcast %cst_244 : f32 to vector<4x1xf32>
    %406 = arith.addf %402, %405 : vector<4x1xf32>
    %407 = math.rsqrt %406 : vector<4x1xf32>
    %408 = vector.broadcast %407 : vector<4x1xf32> to vector<4x64xf32>
    %409 = arith.mulf %404, %408 : vector<4x64xf32>
    %410 = vector.broadcast %390 : vector<1x64xf32> to vector<4x64xf32>
    %411 = arith.mulf %409, %410 : vector<4x64xf32>
    %412 = vector.broadcast %391 : vector<1x64xf32> to vector<4x64xf32>
    %413 = arith.addf %411, %412 : vector<4x64xf32>
    %c1_245 = arith.constant 1 : index
    %c0_246 = arith.constant 0 : index
    %c0_247 = arith.constant 0 : index
    %414 = vector.load %arg34[%c1_245, %c0_246, %c0_247] : memref<2x64x128xf32, #tpu.memory_space<vmem>>, vector<1x64x128xf32>
    %415 = vector.shape_cast %414 : vector<1x64x128xf32> to vector<64x128xf32>
    %cst_248 = arith.constant dense<0.000000e+00> : vector<4x128xf32>
    %416 = tpu.matmul %413, %415, %cst_248 {dimension_numbers = #tpu.dot_dimension_numbers<[1], [0], [0], [1], [0, 0, 1, 1], [], []>} : vector<4x64xf32>, vector<64x128xf32>, vector<4x128xf32> -> vector<4x128xf32>
    %c1_249 = arith.constant 1 : index
    %c0_250 = arith.constant 0 : index
    %417 = vector.load %arg35[%c1_249, %c0_250] : memref<2x128xf32, #tpu.memory_space<vmem>>, vector<1x128xf32>
    %418 = vector.broadcast %417 : vector<1x128xf32> to vector<4x128xf32>
    %419 = arith.addf %416, %418 : vector<4x128xf32>
    %cst_251 = arith.constant 0.000000e+00 : f32
    %420 = vector.broadcast %cst_251 : f32 to vector<4x128xf32>
    %421 = arith.maximumf %419, %420 : vector<4x128xf32>
    %c1_252 = arith.constant 1 : index
    %c0_253 = arith.constant 0 : index
    %c0_254 = arith.constant 0 : index
    %422 = vector.load %arg36[%c1_252, %c0_253, %c0_254] : memref<2x128x64xf32, #tpu.memory_space<vmem>>, vector<1x128x64xf32>
    %423 = vector.shape_cast %422 : vector<1x128x64xf32> to vector<128x64xf32>
    %cst_255 = arith.constant dense<0.000000e+00> : vector<4x64xf32>
    %424 = tpu.matmul %421, %423, %cst_255 {dimension_numbers = #tpu.dot_dimension_numbers<[1], [0], [0], [1], [0, 0, 1, 1], [], []>} : vector<4x128xf32>, vector<128x64xf32>, vector<4x64xf32> -> vector<4x64xf32>
    %c1_256 = arith.constant 1 : index
    %c0_257 = arith.constant 0 : index
    %425 = vector.load %arg37[%c1_256, %c0_257] : memref<2x64xf32, #tpu.memory_space<vmem>>, vector<1x64xf32>
    %426 = vector.broadcast %425 : vector<1x64xf32> to vector<4x64xf32>
    %427 = arith.addf %424, %426 : vector<4x64xf32>
    %428 = arith.addf %413, %427 : vector<4x64xf32>
    %c1_258 = arith.constant 1 : index
    %c0_259 = arith.constant 0 : index
    %429 = vector.load %arg42[%c1_258, %c0_259] : memref<2x64xf32, #tpu.memory_space<vmem>>, vector<1x64xf32>
    %c1_260 = arith.constant 1 : index
    %c0_261 = arith.constant 0 : index
    %430 = vector.load %arg43[%c1_260, %c0_261] : memref<2x64xf32, #tpu.memory_space<vmem>>, vector<1x64xf32>
    %cst_262 = arith.constant dense<0.000000e+00> : vector<4xf32>
    %431 = vector.multi_reduction <add>, %428, %cst_262 [1] : vector<4x64xf32> to vector<4xf32>
    %432 = vector.shape_cast %431 : vector<4xf32> to vector<4x1xf32>
    %cst_263 = arith.constant 6.400000e+01 : f32
    %433 = vector.broadcast %cst_263 : f32 to vector<4x1xf32>
    %434 = arith.divf %432, %433 : vector<4x1xf32>
    %435 = vector.broadcast %434 : vector<4x1xf32> to vector<4x64xf32>
    %436 = arith.subf %428, %435 : vector<4x64xf32>
    %437 = arith.mulf %436, %436 : vector<4x64xf32>
    %cst_264 = arith.constant dense<0.000000e+00> : vector<4xf32>
    %438 = vector.multi_reduction <add>, %437, %cst_264 [1] : vector<4x64xf32> to vector<4xf32>
    %439 = vector.shape_cast %438 : vector<4xf32> to vector<4x1xf32>
    %cst_265 = arith.constant 6.400000e+01 : f32
    %440 = vector.broadcast %cst_265 : f32 to vector<4x1xf32>
    %441 = arith.divf %439, %440 : vector<4x1xf32>
    %442 = vector.broadcast %434 : vector<4x1xf32> to vector<4x64xf32>
    %443 = arith.subf %428, %442 : vector<4x64xf32>
    %cst_266 = arith.constant 9.99999974E-6 : f32
    %444 = vector.broadcast %cst_266 : f32 to vector<4x1xf32>
    %445 = arith.addf %441, %444 : vector<4x1xf32>
    %446 = math.rsqrt %445 : vector<4x1xf32>
    %447 = vector.broadcast %446 : vector<4x1xf32> to vector<4x64xf32>
    %448 = arith.mulf %443, %447 : vector<4x64xf32>
    %449 = vector.broadcast %429 : vector<1x64xf32> to vector<4x64xf32>
    %450 = arith.mulf %448, %449 : vector<4x64xf32>
    %451 = vector.broadcast %430 : vector<1x64xf32> to vector<4x64xf32>
    %452 = arith.addf %450, %451 : vector<4x64xf32>
    %c0_267 = arith.constant 0 : index
    %c0_268 = arith.constant 0 : index
    %453 = vector.load %arg44[%c0_267, %c0_268] : memref<1x64xf32, #tpu.memory_space<vmem>>, vector<1x64xf32>
    %c0_269 = arith.constant 0 : index
    %c0_270 = arith.constant 0 : index
    %454 = vector.load %arg45[%c0_269, %c0_270] : memref<1x64xf32, #tpu.memory_space<vmem>>, vector<1x64xf32>
    %cst_271 = arith.constant dense<0.000000e+00> : vector<4xf32>
    %455 = vector.multi_reduction <add>, %452, %cst_271 [1] : vector<4x64xf32> to vector<4xf32>
    %456 = vector.shape_cast %455 : vector<4xf32> to vector<4x1xf32>
    %cst_272 = arith.constant 6.400000e+01 : f32
    %457 = vector.broadcast %cst_272 : f32 to vector<4x1xf32>
    %458 = arith.divf %456, %457 : vector<4x1xf32>
    %459 = vector.broadcast %458 : vector<4x1xf32> to vector<4x64xf32>
    %460 = arith.subf %452, %459 : vector<4x64xf32>
    %461 = arith.mulf %460, %460 : vector<4x64xf32>
    %cst_273 = arith.constant dense<0.000000e+00> : vector<4xf32>
    %462 = vector.multi_reduction <add>, %461, %cst_273 [1] : vector<4x64xf32> to vector<4xf32>
    %463 = vector.shape_cast %462 : vector<4xf32> to vector<4x1xf32>
    %cst_274 = arith.constant 6.400000e+01 : f32
    %464 = vector.broadcast %cst_274 : f32 to vector<4x1xf32>
    %465 = arith.divf %463, %464 : vector<4x1xf32>
    %466 = vector.broadcast %458 : vector<4x1xf32> to vector<4x64xf32>
    %467 = arith.subf %452, %466 : vector<4x64xf32>
    %cst_275 = arith.constant 9.99999974E-6 : f32
    %468 = vector.broadcast %cst_275 : f32 to vector<4x1xf32>
    %469 = arith.addf %465, %468 : vector<4x1xf32>
    %470 = math.rsqrt %469 : vector<4x1xf32>
    %471 = vector.broadcast %470 : vector<4x1xf32> to vector<4x64xf32>
    %472 = arith.mulf %467, %471 : vector<4x64xf32>
    %473 = vector.broadcast %453 : vector<1x64xf32> to vector<4x64xf32>
    %474 = arith.mulf %472, %473 : vector<4x64xf32>
    %475 = vector.broadcast %454 : vector<1x64xf32> to vector<4x64xf32>
    %476 = arith.addf %474, %475 : vector<4x64xf32>
    %477 = tpu.concatenate %476, %476 in 1 : vector<4x64xf32>, vector<4x64xf32> -> vector<4x128xf32>
    %478 = vector.shape_cast %477 : vector<4x128xf32> to vector<4x1x128xf32>
    %479 = vector.shape_cast %478 : vector<4x1x128xf32> to vector<4x1x128xf32>
    %480 = vector.broadcast %479 : vector<4x1x128xf32> to vector<4x4x128xf32>
    %481 = vector.shape_cast %480 : vector<4x4x128xf32> to vector<16x128xf32>
    %c0_276 = arith.constant 0 : index
    %c0_277 = arith.constant 0 : index
    %482 = vector.load %arg46[%c0_276, %c0_277] : memref<16x128xf32, #tpu.memory_space<vmem>>, vector<16x128xf32>
    tpu.vector_store %arg46[%c0_276, %c0_277], %481 {strides = array<i32>} : memref<16x128xf32, #tpu.memory_space<vmem>>, vector<16x128xf32>,
    return
  }
  func.func @transform_0(%arg0: i32) -> (i32, i32, i32) {
    %c0_i32 = arith.constant 0 : i32
    %c0_i32_0 = arith.constant 0 : i32
    %c0_i32_1 = arith.constant 0 : i32
    return %arg0, %c0_i32, %c0_i32_0 : i32, i32, i32
  }
  func.func @transform_1(%arg0: i32) -> (i32, i32) {
    %c0_i32 = arith.constant 0 : i32
    %c0_i32_0 = arith.constant 0 : i32
    %c0_i32_1 = arith.constant 0 : i32
    return %c0_i32, %c0_i32_0 : i32, i32
  }
  func.func @transform_2(%arg0: i32) -> (i32, i32) {
    %c0_i32 = arith.constant 0 : i32
    %c0_i32_0 = arith.constant 0 : i32
    %c0_i32_1 = arith.constant 0 : i32
    return %c0_i32, %c0_i32_0 : i32, i32
  }
  func.func @transform_3(%arg0: i32) -> (i32, i32, i32) {
    %c0_i32 = arith.constant 0 : i32
    %c0_i32_0 = arith.constant 0 : i32
    %c0_i32_1 = arith.constant 0 : i32
    %c0_i32_2 = arith.constant 0 : i32
    return %c0_i32, %c0_i32_0, %c0_i32_1 : i32, i32, i32
  }
  func.func @transform_4(%arg0: i32) -> (i32, i32) {
    %c0_i32 = arith.constant 0 : i32
    %c0_i32_0 = arith.constant 0 : i32
    %c0_i32_1 = arith.constant 0 : i32
    return %c0_i32, %c0_i32_0 : i32, i32
  }
  func.func @transform_5(%arg0: i32) -> (i32, i32, i32) {
    %c0_i32 = arith.constant 0 : i32
    %c0_i32_0 = arith.constant 0 : i32
    %c0_i32_1 = arith.constant 0 : i32
    %c0_i32_2 = arith.constant 0 : i32
    return %c0_i32, %c0_i32_0, %c0_i32_1 : i32, i32, i32
  }
  func.func @transform_6(%arg0: i32) -> (i32, i32) {
    %c0_i32 = arith.constant 0 : i32
    %c0_i32_0 = arith.constant 0 : i32
    %c0_i32_1 = arith.constant 0 : i32
    return %c0_i32, %c0_i32_0 : i32, i32
  }
  func.func @transform_7(%arg0: i32) -> (i32, i32, i32) {
    %c0_i32 = arith.constant 0 : i32
    %c0_i32_0 = arith.constant 0 : i32
    %c0_i32_1 = arith.constant 0 : i32
    %c0_i32_2 = arith.constant 0 : i32
    return %c0_i32, %c0_i32_0, %c0_i32_1 : i32, i32, i32
  }
  func.func @transform_8(%arg0: i32) -> (i32, i32) {
    %c0_i32 = arith.constant 0 : i32
    %c0_i32_0 = arith.constant 0 : i32
    %c0_i32_1 = arith.constant 0 : i32
    return %c0_i32, %c0_i32_0 : i32, i32
  }
  func.func @transform_9(%arg0: i32) -> (i32, i32, i32) {
    %c0_i32 = arith.constant 0 : i32
    %c0_i32_0 = arith.constant 0 : i32
    %c0_i32_1 = arith.constant 0 : i32
    %c0_i32_2 = arith.constant 0 : i32
    return %c0_i32, %c0_i32_0, %c0_i32_1 : i32, i32, i32
  }
  func.func @transform_10(%arg0: i32) -> (i32, i32) {
    %c0_i32 = arith.constant 0 : i32
    %c0_i32_0 = arith.constant 0 : i32
    %c0_i32_1 = arith.constant 0 : i32
    return %c0_i32, %c0_i32_0 : i32, i32
  }
  func.func @transform_11(%arg0: i32) -> (i32, i32, i32) {
    %c0_i32 = arith.constant 0 : i32
    %c0_i32_0 = arith.constant 0 : i32
    %c0_i32_1 = arith.constant 0 : i32
    %c0_i32_2 = arith.constant 0 : i32
    return %c0_i32, %c0_i32_0, %c0_i32_1 : i32, i32, i32
  }
  func.func @transform_12(%arg0: i32) -> (i32, i32) {
    %c0_i32 = arith.constant 0 : i32
    %c0_i32_0 = arith.constant 0 : i32
    %c0_i32_1 = arith.constant 0 : i32
    return %c0_i32, %c0_i32_0 : i32, i32
  }
  func.func @transform_13(%arg0: i32) -> (i32, i32, i32) {
    %c0_i32 = arith.constant 0 : i32
    %c0_i32_0 = arith.constant 0 : i32
    %c0_i32_1 = arith.constant 0 : i32
    %c0_i32_2 = arith.constant 0 : i32
    return %c0_i32, %c0_i32_0, %c0_i32_1 : i32, i32, i32
  }
  func.func @transform_14(%arg0: i32) -> (i32, i32) {
    %c0_i32 = arith.constant 0 : i32
    %c0_i32_0 = arith.constant 0 : i32
    %c0_i32_1 = arith.constant 0 : i32
    return %c0_i32, %c0_i32_0 : i32, i32
  }
  func.func @transform_15(%arg0: i32) -> (i32, i32) {
    %c0_i32 = arith.constant 0 : i32
    %c0_i32_0 = arith.constant 0 : i32
    %c0_i32_1 = arith.constant 0 : i32
    return %c0_i32, %c0_i32_0 : i32, i32
  }
  func.func @transform_16(%arg0: i32) -> (i32, i32) {
    %c0_i32 = arith.constant 0 : i32
    %c0_i32_0 = arith.constant 0 : i32
    %c0_i32_1 = arith.constant 0 : i32
    return %c0_i32, %c0_i32_0 : i32, i32
  }
  func.func @transform_17(%arg0: i32) -> (i32, i32) {
    %c0_i32 = arith.constant 0 : i32
    %c0_i32_0 = arith.constant 0 : i32
    %c0_i32_1 = arith.constant 0 : i32
    return %c0_i32, %c0_i32_0 : i32, i32
  }
  func.func @transform_18(%arg0: i32) -> (i32, i32) {
    %c0_i32 = arith.constant 0 : i32
    %c0_i32_0 = arith.constant 0 : i32
    %c0_i32_1 = arith.constant 0 : i32
    return %c0_i32, %c0_i32_0 : i32, i32
  }
  func.func @transform_19(%arg0: i32) -> (i32, i32) {
    %c0_i32 = arith.constant 0 : i32
    %c0_i32_0 = arith.constant 0 : i32
    %c0_i32_1 = arith.constant 0 : i32
    return %c0_i32, %c0_i32_0 : i32, i32
  }
  func.func @transform_20(%arg0: i32) -> (i32, i32) {
    %c0_i32 = arith.constant 0 : i32
    %c0_i32_0 = arith.constant 0 : i32
    %c0_i32_1 = arith.constant 0 : i32
    return %c0_i32, %c0_i32_0 : i32, i32
  }
  func.func @transform_21(%arg0: i32) -> (i32, i32) {
    %c0_i32 = arith.constant 0 : i32
    %c0_i32_0 = arith.constant 0 : i32
    %c0_i32_1 = arith.constant 0 : i32
    return %c0_i32, %c0_i32_0 : i32, i32
  }
  func.func @transform_22(%arg0: i32) -> (i32, i32) {
    %c0_i32 = arith.constant 0 : i32
    %c0_i32_0 = arith.constant 0 : i32
    %c0_i32_1 = arith.constant 0 : i32
    return %c0_i32, %c0_i32_0 : i32, i32
  }
  func.func @transform_23(%arg0: i32) -> (i32, i32) {
    %c0_i32 = arith.constant 0 : i32
    %c0_i32_0 = arith.constant 0 : i32
    %c0_i32_1 = arith.constant 0 : i32
    return %c0_i32, %c0_i32_0 : i32, i32
  }
  func.func @transform_24(%arg0: i32) -> (i32, i32) {
    %c0_i32 = arith.constant 0 : i32
    %c0_i32_0 = arith.constant 0 : i32
    %c0_i32_1 = arith.constant 0 : i32
    return %c0_i32, %c0_i32_0 : i32, i32
  }
  func.func @transform_25(%arg0: i32) -> (i32, i32, i32) {
    %c0_i32 = arith.constant 0 : i32
    %c0_i32_0 = arith.constant 0 : i32
    %c0_i32_1 = arith.constant 0 : i32
    %c0_i32_2 = arith.constant 0 : i32
    return %c0_i32, %c0_i32_0, %c0_i32_1 : i32, i32, i32
  }
  func.func @transform_26(%arg0: i32) -> (i32, i32) {
    %c0_i32 = arith.constant 0 : i32
    %c0_i32_0 = arith.constant 0 : i32
    %c0_i32_1 = arith.constant 0 : i32
    return %c0_i32, %c0_i32_0 : i32, i32
  }
  func.func @transform_27(%arg0: i32) -> (i32, i32, i32) {
    %c0_i32 = arith.constant 0 : i32
    %c0_i32_0 = arith.constant 0 : i32
    %c0_i32_1 = arith.constant 0 : i32
    %c0_i32_2 = arith.constant 0 : i32
    return %c0_i32, %c0_i32_0, %c0_i32_1 : i32, i32, i32
  }
  func.func @transform_28(%arg0: i32) -> (i32, i32) {
    %c0_i32 = arith.constant 0 : i32
    %c0_i32_0 = arith.constant 0 : i32
    %c0_i32_1 = arith.constant 0 : i32
    return %c0_i32, %c0_i32_0 : i32, i32
  }
  func.func @transform_29(%arg0: i32) -> (i32, i32, i32) {
    %c0_i32 = arith.constant 0 : i32
    %c0_i32_0 = arith.constant 0 : i32
    %c0_i32_1 = arith.constant 0 : i32
    %c0_i32_2 = arith.constant 0 : i32
    return %c0_i32, %c0_i32_0, %c0_i32_1 : i32, i32, i32
  }
  func.func @transform_30(%arg0: i32) -> (i32, i32) {
    %c0_i32 = arith.constant 0 : i32
    %c0_i32_0 = arith.constant 0 : i32
    %c0_i32_1 = arith.constant 0 : i32
    return %c0_i32, %c0_i32_0 : i32, i32
  }
  func.func @transform_31(%arg0: i32) -> (i32, i32, i32) {
    %c0_i32 = arith.constant 0 : i32
    %c0_i32_0 = arith.constant 0 : i32
    %c0_i32_1 = arith.constant 0 : i32
    %c0_i32_2 = arith.constant 0 : i32
    return %c0_i32, %c0_i32_0, %c0_i32_1 : i32, i32, i32
  }
  func.func @transform_32(%arg0: i32) -> (i32, i32) {
    %c0_i32 = arith.constant 0 : i32
    %c0_i32_0 = arith.constant 0 : i32
    %c0_i32_1 = arith.constant 0 : i32
    return %c0_i32, %c0_i32_0 : i32, i32
  }
  func.func @transform_33(%arg0: i32) -> (i32, i32, i32) {
    %c0_i32 = arith.constant 0 : i32
    %c0_i32_0 = arith.constant 0 : i32
    %c0_i32_1 = arith.constant 0 : i32
    %c0_i32_2 = arith.constant 0 : i32
    return %c0_i32, %c0_i32_0, %c0_i32_1 : i32, i32, i32
  }
  func.func @transform_34(%arg0: i32) -> (i32, i32) {
    %c0_i32 = arith.constant 0 : i32
    %c0_i32_0 = arith.constant 0 : i32
    %c0_i32_1 = arith.constant 0 : i32
    return %c0_i32, %c0_i32_0 : i32, i32
  }
  func.func @transform_35(%arg0: i32) -> (i32, i32, i32) {
    %c0_i32 = arith.constant 0 : i32
    %c0_i32_0 = arith.constant 0 : i32
    %c0_i32_1 = arith.constant 0 : i32
    %c0_i32_2 = arith.constant 0 : i32
    return %c0_i32, %c0_i32_0, %c0_i32_1 : i32, i32, i32
  }
  func.func @transform_36(%arg0: i32) -> (i32, i32) {
    %c0_i32 = arith.constant 0 : i32
    %c0_i32_0 = arith.constant 0 : i32
    %c0_i32_1 = arith.constant 0 : i32
    return %c0_i32, %c0_i32_0 : i32, i32
  }
  func.func @transform_37(%arg0: i32) -> (i32, i32) {
    %c0_i32 = arith.constant 0 : i32
    %c0_i32_0 = arith.constant 0 : i32
    %c0_i32_1 = arith.constant 0 : i32
    return %c0_i32, %c0_i32_0 : i32, i32
  }
  func.func @transform_38(%arg0: i32) -> (i32, i32) {
    %c0_i32 = arith.constant 0 : i32
    %c0_i32_0 = arith.constant 0 : i32
    %c0_i32_1 = arith.constant 0 : i32
    return %c0_i32, %c0_i32_0 : i32, i32
  }
  func.func @transform_39(%arg0: i32) -> (i32, i32) {
    %c0_i32 = arith.constant 0 : i32
    %c0_i32_0 = arith.constant 0 : i32
    %c0_i32_1 = arith.constant 0 : i32
    return %c0_i32, %c0_i32_0 : i32, i32
  }
  func.func @transform_40(%arg0: i32) -> (i32, i32) {
    %c0_i32 = arith.constant 0 : i32
    %c0_i32_0 = arith.constant 0 : i32
    %c0_i32_1 = arith.constant 0 : i32
    return %c0_i32, %c0_i32_0 : i32, i32
  }
  func.func @transform_41(%arg0: i32) -> (i32, i32) {
    %c0_i32 = arith.constant 0 : i32
    %c0_i32_0 = arith.constant 0 : i32
    %c0_i32_1 = arith.constant 0 : i32
    return %c0_i32, %c0_i32_0 : i32, i32
  }
  func.func @transform_42(%arg0: i32) -> (i32, i32) {
    %c0_i32 = arith.constant 0 : i32
    %c0_i32_0 = arith.constant 0 : i32
    %c0_i32_1 = arith.constant 0 : i32
    return %c0_i32, %c0_i32_0 : i32, i32
  }
  func.func @transform_43(%arg0: i32) -> (i32, i32) {
    %c0_i32 = arith.constant 0 : i32
    %c0_i32_0 = arith.constant 0 : i32
    %c0_i32_1 = arith.constant 0 : i32
    return %c0_i32, %c0_i32_0 : i32, i32
  }
  func.func @transform_44(%arg0: i32) -> (i32, i32) {
    %c0_i32 = arith.constant 0 : i32
    %c0_i32_0 = arith.constant 0 : i32
    %c0_i32_1 = arith.constant 0 : i32
    return %c0_i32, %c0_i32_0 : i32, i32
  }
  func.func @transform_45(%arg0: i32) -> (i32, i32) {
    %c0_i32 = arith.constant 0 : i32
    %c0_i32_0 = arith.constant 0 : i32
    return %arg0, %c0_i32 : i32, i32
  }
}

</mosaic_0001>

<llo_original>
// kernel: tpu_custom_call.1
$region0: #{tpu_custom_call.1}
  #allocation0 [shape = 'u32[]', space=smem, size = 0x4, offset = 0x4, fixed_abs, tag = 'smem constant byte address 0x4 - core index']
  #allocation1 [shape = 'u32[144,128]{1,0:T(1,128)}', space=vmem, size = 0x12000, scoped, tag = 'internal scratch']
  %s0 = inlined_call_operand.smem [shape: u32[46], index: -1, kind: input, shape index: {}]
  %s1 = sld [smem:[%s0]]
  %s2 = scalar_lea.smem %s0, 1
  %s3 = sld [smem:[%s2]]
  %s4 = scalar_lea.smem %s0, 2
  %s5 = sld [smem:[%s4]]
  %s6 = scalar_lea.smem %s0, 3
  %s7 = sld [smem:[%s6]]
  %s8 = scalar_lea.smem %s0, 4
  %s9 = sld [smem:[%s8]]
  %s10 = scalar_lea.smem %s0, 5
  %s11 = sld [smem:[%s10]]
  %s12 = scalar_lea.smem %s0, 6
  %s13 = sld [smem:[%s12]]
  %s14 = scalar_lea.smem %s0, 7
  %s15 = sld [smem:[%s14]]
  %s16 = scalar_lea.smem %s0, 8
  %s17 = sld [smem:[%s16]]
  %s18 = scalar_lea.smem %s0, 9
  %s19 = sld [smem:[%s18]]
  %s20 = scalar_lea.smem %s0, 10
  %s21 = sld [smem:[%s20]]
  %s22 = scalar_lea.smem %s0, 11
  %s23 = sld [smem:[%s22]]
  %s24 = scalar_lea.smem %s0, 12
  %s25 = sld [smem:[%s24]]
  %s26 = scalar_lea.smem %s0, 13
  %s27 = sld [smem:[%s26]]
  %s28 = scalar_lea.smem %s0, 14
  %s29 = sld [smem:[%s28]]
  %s30 = scalar_lea.smem %s0, 15
  %s31 = sld [smem:[%s30]]
  %s32 = scalar_lea.smem %s0, 16
  %s33 = sld [smem:[%s32]]
  %s34 = scalar_lea.smem %s0, 17
  %s35 = sld [smem:[%s34]]
  %s36 = scalar_lea.smem %s0, 18
  %s37 = sld [smem:[%s36]]
  %s38 = scalar_lea.smem %s0, 19
  %s39 = sld [smem:[%s38]]
  %s40 = scalar_lea.smem %s0, 20
  %s41 = sld [smem:[%s40]]
  %s42 = scalar_lea.smem %s0, 21
  %s43 = sld [smem:[%s42]]
  %s44 = scalar_lea.smem %s0, 22
  %s45 = sld [smem:[%s44]]
  %s46 = scalar_lea.smem %s0, 23
  %s47 = sld [smem:[%s46]]
  %s48 = scalar_lea.smem %s0, 24
  %s49 = sld [smem:[%s48]]
  %s50 = scalar_lea.smem %s0, 25
  %s51 = sld [smem:[%s50]]
  %s52 = scalar_lea.smem %s0, 26
  %s53 = sld [smem:[%s52]]
  %s54 = scalar_lea.smem %s0, 27
  %s55 = sld [smem:[%s54]]
  %s56 = scalar_lea.smem %s0, 28
  %s57 = sld [smem:[%s56]]
  %s58 = scalar_lea.smem %s0, 29
  %s59 = sld [smem:[%s58]]
  %s60 = scalar_lea.smem %s0, 30
  %s61 = sld [smem:[%s60]]
  %s62 = scalar_lea.smem %s0, 31
  %s63 = sld [smem:[%s62]]
  %s64 = scalar_lea.smem %s0, 32
  %s65 = sld [smem:[%s64]]
  %s66 = scalar_lea.smem %s0, 33
  %s67 = sld [smem:[%s66]]
  %s68 = scalar_lea.smem %s0, 34
  %s69 = sld [smem:[%s68]]
  %s70 = scalar_lea.smem %s0, 35
  %s71 = sld [smem:[%s70]]
  %s72 = scalar_lea.smem %s0, 36
  %s73 = sld [smem:[%s72]]
  %s74 = scalar_lea.smem %s0, 37
  %s75 = sld [smem:[%s74]]
  %s76 = scalar_lea.smem %s0, 38
  %s77 = sld [smem:[%s76]]
  %s78 = scalar_lea.smem %s0, 39
  %s79 = sld [smem:[%s78]]
  %s80 = scalar_lea.smem %s0, 40
  %s81 = sld [smem:[%s80]]
  %s82 = scalar_lea.smem %s0, 41
  %s83 = sld [smem:[%s82]]
  %s84 = scalar_lea.smem %s0, 42
  %s85 = sld [smem:[%s84]]
  %s86 = scalar_lea.smem %s0, 43
  %s87 = sld [smem:[%s86]]
  %s88 = scalar_lea.smem %s0, 44
  %s89 = sld [smem:[%s88]]
  %s90 = scalar_lea.smem %s0, 45
  %s91 = sld [smem:[%s90]]
  %s92 = sld [smem:[#allocation0]]
  $region297: #{tpu_custom_call.1} parent=0
    _
  %s94 = ssub.s32 1, %s92
  %s95 = scalar_select 0, %s94, %s92
  $region1: #{tpu_custom_call.1} parent=0
    #allocation2 [shape = 'u8[1024]{0}', space=vmem, size = 0x400, scoped, tag = 'input window, operand 0']
    #allocation3 [shape = 's32[2]{0}', space=sflag, size = 0x8, scoped, tag = 'scoped memory for tpu_custom_call.1']
    #allocation4 [shape = 's32[2]{0}', space=sflag, size = 0x8, scoped, tag = 'scoped memory for tpu_custom_call.1']
    #allocation5 [shape = 'u8[16384]{0}', space=vmem, size = 0x4000, scoped, tag = 'input window, operand 1, single buffered']
    #allocation6 [shape = 's32[1]{0}', space=sflag, size = 0x4, scoped, tag = 'scoped memory for tpu_custom_call.1']
    #allocation7 [shape = 'u8[512]{0}', space=vmem, size = 0x400, scoped, tag = 'input window, operand 2, single buffered']
    #allocation8 [shape = 'u8[1024]{0}', space=vmem, size = 0x400, scoped, tag = 'input window, operand 8, single buffered']
    #allocation9 [shape = 's32[1]{0}', space=sflag, size = 0x4, scoped, tag = 'scoped memory for tpu_custom_call.1']
    #allocation10 [shape = 'u8[1024]{0}', space=vmem, size = 0x400, scoped, tag = 'input window, operand 10, single buffered']
    #allocation11 [shape = 'u8[1024]{0}', space=vmem, size = 0x400, scoped, tag = 'input window, operand 12, single buffered']
    #allocation12 [shape = 's32[1]{0}', space=sflag, size = 0x4, scoped, tag = 'scoped memory for tpu_custom_call.1']
    #allocation13 [shape = 'u8[1024]{0}', space=vmem, size = 0x400, scoped, tag = 'input window, operand 14, single buffered']
    #allocation14 [shape = 'u8[1024]{0}', space=vmem, size = 0x400, scoped, tag = 'input window, operand 15, single buffered']
    #allocation15 [shape = 's32[1]{0}', space=sflag, size = 0x4, scoped, tag = 'scoped memory for tpu_custom_call.1']
    #allocation16 [shape = 'u8[1024]{0}', space=vmem, size = 0x400, scoped, tag = 'input window, operand 16, single buffered']
    #allocation17 [shape = 'u8[1024]{0}', space=vmem, size = 0x400, scoped, tag = 'input window, operand 17, single buffered']
    #allocation18 [shape = 's32[1]{0}', space=sflag, size = 0x4, scoped, tag = 'scoped memory for tpu_custom_call.1']
    #allocation19 [shape = 'u8[1024]{0}', space=vmem, size = 0x400, scoped, tag = 'input window, operand 18, single buffered']
    #allocation20 [shape = 'u8[1024]{0}', space=vmem, size = 0x400, scoped, tag = 'input window, operand 19, single buffered']
    #allocation21 [shape = 's32[1]{0}', space=sflag, size = 0x4, scoped, tag = 'scoped memory for tpu_custom_call.1']
    #allocation22 [shape = 'u8[1024]{0}', space=vmem, size = 0x400, scoped, tag = 'input window, operand 20, single buffered']
    #allocation23 [shape = 'u8[512]{0}', space=vmem, size = 0x400, scoped, tag = 'input window, operand 21, single buffered']
    #allocation24 [shape = 's32[1]{0}', space=sflag, size = 0x4, scoped, tag = 'scoped memory for tpu_custom_call.1']
    #allocation25 [shape = 'u8[512]{0}', space=vmem, size = 0x400, scoped, tag = 'input window, operand 22, single buffered']
    #allocation26 [shape = 'u8[512]{0}', space=vmem, size = 0x400, scoped, tag = 'input window, operand 24, single buffered']
    #allocation27 [shape = 's32[1]{0}', space=sflag, size = 0x4, scoped, tag = 'scoped memory for tpu_custom_call.1']
    #allocation28 [shape = 'u8[65536]{0}', space=vmem, size = 0x10000, scoped, tag = 'input window, operand 25, single buffered']
    #allocation29 [shape = 'u8[65536]{0}', space=vmem, size = 0x10000, scoped, tag = 'input window, operand 27, single buffered']
    #allocation30 [shape = 's32[1]{0}', space=sflag, size = 0x4, scoped, tag = 'scoped memory for tpu_custom_call.1']
    #allocation31 [shape = 'u8[65536]{0}', space=vmem, size = 0x10000, scoped, tag = 'input window, operand 29, single buffered']
    #allocation32 [shape = 'u8[65536]{0}', space=vmem, size = 0x10000, scoped, tag = 'input window, operand 31, single buffered']
    #allocation33 [shape = 's32[1]{0}', space=sflag, size = 0x4, scoped, tag = 'scoped memory for tpu_custom_call.1']
    #allocation34 [shape = 'u8[65536]{0}', space=vmem, size = 0x10000, scoped, tag = 'input window, operand 33, single buffered']
    #allocation35 [shape = 'u8[16384]{0}', space=vmem, size = 0x4000, scoped, tag = 'output window, operand 0']
    %96 = vsyncpa [#allocation3], 0
    %s97 = scalar_lea.sflag [#allocation3], 1
    %98 = vsyncpa %s97, 0
    %99 = vsyncpa [#allocation6], 0
    %100 = vsyncpa [#allocation9], 0
    %101 = vsyncpa [#allocation12], 0
    %102 = vsyncpa [#allocation15], 0
    %103 = vsyncpa [#allocation18], 0
    %104 = vsyncpa [#allocation21], 0
    %105 = vsyncpa [#allocation24], 0
    %106 = vsyncpa [#allocation27], 0
    %107 = vsyncpa [#allocation30], 0
    %108 = vsyncpa [#allocation33], 0
    %109 = vsyncpa [#allocation4], 0
    %s110 = scalar_lea.sflag [#allocation4], 1
    %111 = vsyncpa %s110, 0
    loop: start=0, step=1, limit=4
    $region2: #{tpu_custom_call.1} parent=1 // loop_pre_header
      _
    $region3: #{tpu_custom_call.1} parent=1 // loop_header
      %s113 = sphi 0, %s117
      %p114 = scmp.ge.s32.totalorder %s113, 4
      %s123 = sphi 0, %s125
      %s126 = sphi 0, %s123
      %s127 = sphi 0, %s126
      %s143 = sphi 0, %s127
      %s147 = sphi 0, %s147
      %s149 = sphi 0, %s147
      %s150 = sphi 0, %s149
      %s164 = sphi 0, %s150
      %s168 = sphi 0, %s168
      %s170 = sphi 0, %s168
      %s171 = sphi 0, %s170
      %s185 = sphi 0, %s171
      %s189 = sphi 0, %s189
      %s191 = sphi 0, %s189
      %s192 = sphi 0, %s191
      %s206 = sphi 0, %s192
      %s210 = sphi 0, %s210
      %s212 = sphi 0, %s210
      %s213 = sphi 0, %s212
      %s227 = sphi 0, %s213
      %s231 = sphi 0, %s231
      %s233 = sphi 0, %s231
      %s234 = sphi 0, %s233
      %s248 = sphi 0, %s234
      %s252 = sphi 0, %s252
      %s254 = sphi 0, %s252
      %s255 = sphi 0, %s254
      %s269 = sphi 0, %s255
      %s273 = sphi 0, %s273
      %s275 = sphi 0, %s273
      %s276 = sphi 0, %s275
      %s290 = sphi 0, %s276
      %s294 = sphi 0, %s294
      %s296 = sphi 0, %s294
      %s297 = sphi 0, %s296
      %s311 = sphi 0, %s297
      %s315 = sphi 0, %s315
      %s317 = sphi 0, %s315
      %s318 = sphi 0, %s317
      %s332 = sphi 0, %s318
      %s336 = sphi 0, %s336
      %s338 = sphi 0, %s336
      %s339 = sphi 0, %s338
      %s353 = sphi 0, %s339
      %s357 = sphi 0, %s357
      %s359 = sphi 0, %s357
      %s360 = sphi 0, %s359
      %s374 = sphi 0, %s360
      %s378 = sphi 0, %s378
      %s380 = sphi 0, %s378
      %s381 = sphi 0, %s380
      %s395 = sphi 0, %s381
      %s399 = sphi 0, %s399
      %s401 = sphi 0, %s399
      %s402 = sphi 0, %s401
      %s416 = sphi 0, %s402
      %s420 = sphi 0, %s420
      %s422 = sphi 0, %s420
      %s423 = sphi 0, %s422
      %s437 = sphi 0, %s423
      %s441 = sphi 0, %s441
      %s443 = sphi 0, %s441
      %s444 = sphi 0, %s443
      %s458 = sphi 0, %s444
      %s462 = sphi 0, %s462
      %s464 = sphi 0, %s462
      %s465 = sphi 0, %s464
      %s479 = sphi 0, %s465
      %s483 = sphi 0, %s483
      %s485 = sphi 0, %s483
      %s486 = sphi 0, %s485
      %s500 = sphi 0, %s486
      %s504 = sphi 0, %s504
      %s506 = sphi 0, %s504
      %s507 = sphi 0, %s506
      %s521 = sphi 0, %s507
      %s525 = sphi 0, %s525
      %s527 = sphi 0, %s525
      %s528 = sphi 0, %s527
      %s542 = sphi 0, %s528
      %s546 = sphi 0, %s546
      %s548 = sphi 0, %s546
      %s549 = sphi 0, %s548
      %s563 = sphi 0, %s549
      %s567 = sphi 0, %s567
      %s569 = sphi 0, %s567
      %s570 = sphi 0, %s569
      %s584 = sphi 0, %s570
      %s588 = sphi 0, %s588
      %s590 = sphi 0, %s588
      %s591 = sphi 0, %s590
      %s605 = sphi 0, %s591
      %s609 = sphi 0, %s609
      %s611 = sphi 0, %s609
      %s612 = sphi 0, %s611
      %s626 = sphi 0, %s612
      %s630 = sphi 0, %s630
      %s632 = sphi 0, %s630
      %s633 = sphi 0, %s632
      %s647 = sphi 0, %s633
      %s651 = sphi 0, %s651
      %s653 = sphi 0, %s651
      %s654 = sphi 0, %s653
      %s668 = sphi 0, %s654
      %s672 = sphi 0, %s672
      %s674 = sphi 0, %s672
      %s675 = sphi 0, %s674
      %s689 = sphi 0, %s675
      %s693 = sphi 0, %s693
      %s695 = sphi 0, %s693
      %s696 = sphi 0, %s695
      %s710 = sphi 0, %s696
      %s714 = sphi 0, %s714
      %s716 = sphi 0, %s714
      %s717 = sphi 0, %s716
      %s731 = sphi 0, %s717
      %s735 = sphi 0, %s735
      %s737 = sphi 0, %s735
      %s738 = sphi 0, %s737
      %s752 = sphi 0, %s738
      %s756 = sphi 0, %s756
      %s758 = sphi 0, %s756
      %s759 = sphi 0, %s758
      %s773 = sphi 0, %s759
      %s777 = sphi 0, %s777
      %s779 = sphi 0, %s777
      %s780 = sphi 0, %s779
      %s794 = sphi 0, %s780
      %s798 = sphi 0, %s798
      %s800 = sphi 0, %s798
      %s801 = sphi 0, %s800
      %s815 = sphi 0, %s801
      %s819 = sphi 0, %s819
      %s821 = sphi 0, %s819
      %s822 = sphi 0, %s821
      %s836 = sphi 0, %s822
      %s840 = sphi 0, %s840
      %s842 = sphi 0, %s840
      %s843 = sphi 0, %s842
      %s857 = sphi 0, %s843
      %s861 = sphi 0, %s861
      %s863 = sphi 0, %s861
      %s864 = sphi 0, %s863
      %s878 = sphi 0, %s864
      %s882 = sphi 0, %s882
      %s884 = sphi 0, %s882
      %s885 = sphi 0, %s884
      %s899 = sphi 0, %s885
      %s903 = sphi 0, %s903
      %s905 = sphi 0, %s903
      %s906 = sphi 0, %s905
      %s920 = sphi 0, %s906
      %s924 = sphi 0, %s924
      %s926 = sphi 0, %s924
      %s927 = sphi 0, %s926
      %s941 = sphi 0, %s927
      %s945 = sphi 0, %s945
      %s947 = sphi 0, %s945
      %s948 = sphi 0, %s947
      %s962 = sphi 0, %s948
      %s966 = sphi 0, %s966
      %s968 = sphi 0, %s966
      %s969 = sphi 0, %s968
      %s983 = sphi 0, %s969
      %s987 = sphi 0, %s987
      %s989 = sphi 0, %s987
      %s990 = sphi 0, %s989
      %s1004 = sphi 0, %s990
      %s1008 = sphi 0, %s1008
      %s1010 = sphi 0, %s1008
      %s1011 = sphi 0, %s1010
      %s1025 = sphi 0, %s1011
      %s1029 = sphi 0, %s1029
      %s1031 = sphi 0, %s1029
      %s1032 = sphi 0, %s1031
      %s1046 = sphi 0, %s1032
      %s1050 = sphi 0, %s1050
      %s1052 = sphi 0, %s1050
      %s1053 = sphi 0, %s1052
      %s1067 = sphi 0, %s1053
      %s1073 = sphi 0, %s1075
      %s1076 = sphi 0, %s1073
      %s1077 = sphi 0, %s1076
      %s1093 = sphi 0, %s1077
    $region4: #{tpu_custom_call.1} parent=1 // loop_header_branch
      %116 = sbr.rel (%p114) target = $region8
    $region5: #{tpu_custom_call.1} parent=1 // loop_body
      %s118 = ssub.s32 %s113, 1
      %s119 = ssub.s32 %s113, 2
      %s120 = sadd.s32 %s113, 1
      %s121 = ssub.s32 %s113, %s120
      %p122 = scmp.eq.s32.totalorder %s121, 0
      %s124 = sadd.s32 %s123, 1
      %s125 = scalar_select %p122, %s123, %s124
      %p128 = pneg %p122
      %p129 = scmp.eq.s32.totalorder %s113, 1
      %p130 = por %p128, %p129
      %p131 = scmp.ne.s32.totalorder %s123, %s126
      %p132 = scmp.eq.s32.totalorder %s113, 0
      %p133 = por %p131, %p132
      %p134 = scmp.ne.s32.totalorder %s123, %s126
      %p135 = scmp.eq.s32.totalorder %s118, 1
      %p136 = por %p134, %p135
      %p137 = scmp.ne.s32.totalorder %s126, %s127
      %p138 = scmp.eq.s32.totalorder %s118, 0
      %p139 = por %p137, %p138
      %p140 = scmp.ne.s32.totalorder %s126, %s127
      %p141 = scmp.eq.s32.totalorder %s119, 1
      %p142 = por %p140, %p141
      %p144 = scmp.ne.s32.totalorder %s127, %s143
      %p145 = scmp.eq.s32.totalorder %s119, 0
      %p146 = por %p144, %p145
      %s148 = sadd.s32 %s147, 1
      %p151 = scmp.eq.s32.totalorder %s113, 1
      %p152 = scmp.ne.s32.totalorder %s147, %s149
      %p153 = scmp.eq.s32.totalorder %s113, 0
      %p154 = por %p152, %p153
      %p155 = scmp.ne.s32.totalorder %s147, %s149
      %p156 = scmp.eq.s32.totalorder %s118, 1
      %p157 = por %p155, %p156
      %p158 = scmp.ne.s32.totalorder %s149, %s150
      %p159 = scmp.eq.s32.totalorder %s118, 0
      %p160 = por %p158, %p159
      %p161 = scmp.ne.s32.totalorder %s149, %s150
      %p162 = scmp.eq.s32.totalorder %s119, 1
      %p163 = por %p161, %p162
      %p165 = scmp.ne.s32.totalorder %s150, %s164
      %p166 = scmp.eq.s32.totalorder %s119, 0
      %p167 = por %p165, %p166
      %s169 = sadd.s32 %s168, 1
      %p172 = scmp.eq.s32.totalorder %s113, 1
      %p173 = scmp.ne.s32.totalorder %s168, %s170
      %p174 = scmp.eq.s32.totalorder %s113, 0
      %p175 = por %p173, %p174
      %p176 = scmp.ne.s32.totalorder %s168, %s170
      %p177 = scmp.eq.s32.totalorder %s118, 1
      %p178 = por %p176, %p177
      %p179 = scmp.ne.s32.totalorder %s170, %s171
      %p180 = scmp.eq.s32.totalorder %s118, 0
      %p181 = por %p179, %p180
      %p182 = scmp.ne.s32.totalorder %s170, %s171
      %p183 = scmp.eq.s32.totalorder %s119, 1
      %p184 = por %p182, %p183
      %p186 = scmp.ne.s32.totalorder %s171, %s185
      %p187 = scmp.eq.s32.totalorder %s119, 0
      %p188 = por %p186, %p187
      %s190 = sadd.s32 %s189, 1
      %p193 = scmp.eq.s32.totalorder %s113, 1
      %p194 = scmp.ne.s32.totalorder %s189, %s191
      %p195 = scmp.eq.s32.totalorder %s113, 0
      %p196 = por %p194, %p195
      %p197 = scmp.ne.s32.totalorder %s189, %s191
      %p198 = scmp.eq.s32.totalorder %s118, 1
      %p199 = por %p197, %p198
      %p200 = scmp.ne.s32.totalorder %s191, %s192
      %p201 = scmp.eq.s32.totalorder %s118, 0
      %p202 = por %p200, %p201
      %p203 = scmp.ne.s32.totalorder %s191, %s192
      %p204 = scmp.eq.s32.totalorder %s119, 1
      %p205 = por %p203, %p204
      %p207 = scmp.ne.s32.totalorder %s192, %s206
      %p208 = scmp.eq.s32.totalorder %s119, 0
      %p209 = por %p207, %p208
      %s211 = sadd.s32 %s210, 1
      %p214 = scmp.eq.s32.totalorder %s113, 1
      %p215 = scmp.ne.s32.totalorder %s210, %s212
      %p216 = scmp.eq.s32.totalorder %s113, 0
      %p217 = por %p215, %p216
      %p218 = scmp.ne.s32.totalorder %s210, %s212
      %p219 = scmp.eq.s32.totalorder %s118, 1
      %p220 = por %p218, %p219
      %p221 = scmp.ne.s32.totalorder %s212, %s213
      %p222 = scmp.eq.s32.totalorder %s118, 0
      %p223 = por %p221, %p222
      %p224 = scmp.ne.s32.totalorder %s212, %s213
      %p225 = scmp.eq.s32.totalorder %s119, 1
      %p226 = por %p224, %p225
      %p228 = scmp.ne.s32.totalorder %s213, %s227
      %p229 = scmp.eq.s32.totalorder %s119, 0
      %p230 = por %p228, %p229
      %s232 = sadd.s32 %s231, 1
      %p235 = scmp.eq.s32.totalorder %s113, 1
      %p236 = scmp.ne.s32.totalorder %s231, %s233
      %p237 = scmp.eq.s32.totalorder %s113, 0
      %p238 = por %p236, %p237
      %p239 = scmp.ne.s32.totalorder %s231, %s233
      %p240 = scmp.eq.s32.totalorder %s118, 1
      %p241 = por %p239, %p240
      %p242 = scmp.ne.s32.totalorder %s233, %s234
      %p243 = scmp.eq.s32.totalorder %s118, 0
      %p244 = por %p242, %p243
      %p245 = scmp.ne.s32.totalorder %s233, %s234
      %p246 = scmp.eq.s32.totalorder %s119, 1
      %p247 = por %p245, %p246
      %p249 = scmp.ne.s32.totalorder %s234, %s248
      %p250 = scmp.eq.s32.totalorder %s119, 0
      %p251 = por %p249, %p250
      %s253 = sadd.s32 %s252, 1
      %p256 = scmp.eq.s32.totalorder %s113, 1
      %p257 = scmp.ne.s32.totalorder %s252, %s254
      %p258 = scmp.eq.s32.totalorder %s113, 0
      %p259 = por %p257, %p258
      %p260 = scmp.ne.s32.totalorder %s252, %s254
      %p261 = scmp.eq.s32.totalorder %s118, 1
      %p262 = por %p260, %p261
      %p263 = scmp.ne.s32.totalorder %s254, %s255
      %p264 = scmp.eq.s32.totalorder %s118, 0
      %p265 = por %p263, %p264
      %p266 = scmp.ne.s32.totalorder %s254, %s255
      %p267 = scmp.eq.s32.totalorder %s119, 1
      %p268 = por %p266, %p267
      %p270 = scmp.ne.s32.totalorder %s255, %s269
      %p271 = scmp.eq.s32.totalorder %s119, 0
      %p272 = por %p270, %p271
      %s274 = sadd.s32 %s273, 1
      %p277 = scmp.eq.s32.totalorder %s113, 1
      %p278 = scmp.ne.s32.totalorder %s273, %s275
      %p279 = scmp.eq.s32.totalorder %s113, 0
      %p280 = por %p278, %p279
      %p281 = scmp.ne.s32.totalorder %s273, %s275
      %p282 = scmp.eq.s32.totalorder %s118, 1
      %p283 = por %p281, %p282
      %p284 = scmp.ne.s32.totalorder %s275, %s276
      %p285 = scmp.eq.s32.totalorder %s118, 0
      %p286 = por %p284, %p285
      %p287 = scmp.ne.s32.totalorder %s275, %s276
      %p288 = scmp.eq.s32.totalorder %s119, 1
      %p289 = por %p287, %p288
      %p291 = scmp.ne.s32.totalorder %s276, %s290
      %p292 = scmp.eq.s32.totalorder %s119, 0
      %p293 = por %p291, %p292
      %s295 = sadd.s32 %s294, 1
      %p298 = scmp.eq.s32.totalorder %s113, 1
      %p299 = scmp.ne.s32.totalorder %s294, %s296
      %p300 = scmp.eq.s32.totalorder %s113, 0
      %p301 = por %p299, %p300
      %p302 = scmp.ne.s32.totalorder %s294, %s296
      %p303 = scmp.eq.s32.totalorder %s118, 1
      %p304 = por %p302, %p303
      %p305 = scmp.ne.s32.totalorder %s296, %s297
      %p306 = scmp.eq.s32.totalorder %s118, 0
      %p307 = por %p305, %p306
      %p308 = scmp.ne.s32.totalorder %s296, %s297
      %p309 = scmp.eq.s32.totalorder %s119, 1
      %p310 = por %p308, %p309
      %p312 = scmp.ne.s32.totalorder %s297, %s311
      %p313 = scmp.eq.s32.totalorder %s119, 0
      %p314 = por %p312, %p313
      %s316 = sadd.s32 %s315, 1
      %p319 = scmp.eq.s32.totalorder %s113, 1
      %p320 = scmp.ne.s32.totalorder %s315, %s317
      %p321 = scmp.eq.s32.totalorder %s113, 0
      %p322 = por %p320, %p321
      %p323 = scmp.ne.s32.totalorder %s315, %s317
      %p324 = scmp.eq.s32.totalorder %s118, 1
      %p325 = por %p323, %p324
      %p326 = scmp.ne.s32.totalorder %s317, %s318
      %p327 = scmp.eq.s32.totalorder %s118, 0
      %p328 = por %p326, %p327
      %p329 = scmp.ne.s32.totalorder %s317, %s318
      %p330 = scmp.eq.s32.totalorder %s119, 1
      %p331 = por %p329, %p330
      %p333 = scmp.ne.s32.totalorder %s318, %s332
      %p334 = scmp.eq.s32.totalorder %s119, 0
      %p335 = por %p333, %p334
      %s337 = sadd.s32 %s336, 1
      %p340 = scmp.eq.s32.totalorder %s113, 1
      %p341 = scmp.ne.s32.totalorder %s336, %s338
      %p342 = scmp.eq.s32.totalorder %s113, 0
      %p343 = por %p341, %p342
      %p344 = scmp.ne.s32.totalorder %s336, %s338
      %p345 = scmp.eq.s32.totalorder %s118, 1
      %p346 = por %p344, %p345
      %p347 = scmp.ne.s32.totalorder %s338, %s339
      %p348 = scmp.eq.s32.totalorder %s118, 0
      %p349 = por %p347, %p348
      %p350 = scmp.ne.s32.totalorder %s338, %s339
      %p351 = scmp.eq.s32.totalorder %s119, 1
      %p352 = por %p350, %p351
      %p354 = scmp.ne.s32.totalorder %s339, %s353
      %p355 = scmp.eq.s32.totalorder %s119, 0
      %p356 = por %p354, %p355
      %s358 = sadd.s32 %s357, 1
      %p361 = scmp.eq.s32.totalorder %s113, 1
      %p362 = scmp.ne.s32.totalorder %s357, %s359
      %p363 = scmp.eq.s32.totalorder %s113, 0
      %p364 = por %p362, %p363
      %p365 = scmp.ne.s32.totalorder %s357, %s359
      %p366 = scmp.eq.s32.totalorder %s118, 1
      %p367 = por %p365, %p366
      %p368 = scmp.ne.s32.totalorder %s359, %s360
      %p369 = scmp.eq.s32.totalorder %s118, 0
      %p370 = por %p368, %p369
      %p371 = scmp.ne.s32.totalorder %s359, %s360
      %p372 = scmp.eq.s32.totalorder %s119, 1
      %p373 = por %p371, %p372
      %p375 = scmp.ne.s32.totalorder %s360, %s374
      %p376 = scmp.eq.s32.totalorder %s119, 0
      %p377 = por %p375, %p376
      %s379 = sadd.s32 %s378, 1
      %p382 = scmp.eq.s32.totalorder %s113, 1
      %p383 = scmp.ne.s32.totalorder %s378, %s380
      %p384 = scmp.eq.s32.totalorder %s113, 0
      %p385 = por %p383, %p384
      %p386 = scmp.ne.s32.totalorder %s378, %s380
      %p387 = scmp.eq.s32.totalorder %s118, 1
      %p388 = por %p386, %p387
      %p389 = scmp.ne.s32.totalorder %s380, %s381
      %p390 = scmp.eq.s32.totalorder %s118, 0
      %p391 = por %p389, %p390
      %p392 = scmp.ne.s32.totalorder %s380, %s381
      %p393 = scmp.eq.s32.totalorder %s119, 1
      %p394 = por %p392, %p393
      %p396 = scmp.ne.s32.totalorder %s381, %s395
      %p397 = scmp.eq.s32.totalorder %s119, 0
      %p398 = por %p396, %p397
      %s400 = sadd.s32 %s399, 1
      %p403 = scmp.eq.s32.totalorder %s113, 1
      %p404 = scmp.ne.s32.totalorder %s399, %s401
      %p405 = scmp.eq.s32.totalorder %s113, 0
      %p406 = por %p404, %p405
      %p407 = scmp.ne.s32.totalorder %s399, %s401
      %p408 = scmp.eq.s32.totalorder %s118, 1
      %p409 = por %p407, %p408
      %p410 = scmp.ne.s32.totalorder %s401, %s402
      %p411 = scmp.eq.s32.totalorder %s118, 0
      %p412 = por %p410, %p411
      %p413 = scmp.ne.s32.totalorder %s401, %s402
      %p414 = scmp.eq.s32.totalorder %s119, 1
      %p415 = por %p413, %p414
      %p417 = scmp.ne.s32.totalorder %s402, %s416
      %p418 = scmp.eq.s32.totalorder %s119, 0
      %p419 = por %p417, %p418
      %s421 = sadd.s32 %s420, 1
      %p424 = scmp.eq.s32.totalorder %s113, 1
      %p425 = scmp.ne.s32.totalorder %s420, %s422
      %p426 = scmp.eq.s32.totalorder %s113, 0
      %p427 = por %p425, %p426
      %p428 = scmp.ne.s32.totalorder %s420, %s422
      %p429 = scmp.eq.s32.totalorder %s118, 1
      %p430 = por %p428, %p429
      %p431 = scmp.ne.s32.totalorder %s422, %s423
      %p432 = scmp.eq.s32.totalorder %s118, 0
      %p433 = por %p431, %p432
      %p434 = scmp.ne.s32.totalorder %s422, %s423
      %p435 = scmp.eq.s32.totalorder %s119, 1
      %p436 = por %p434, %p435
      %p438 = scmp.ne.s32.totalorder %s423, %s437
      %p439 = scmp.eq.s32.totalorder %s119, 0
      %p440 = por %p438, %p439
      %s442 = sadd.s32 %s441, 1
      %p445 = scmp.eq.s32.totalorder %s113, 1
      %p446 = scmp.ne.s32.totalorder %s441, %s443
      %p447 = scmp.eq.s32.totalorder %s113, 0
      %p448 = por %p446, %p447
      %p449 = scmp.ne.s32.totalorder %s441, %s443
      %p450 = scmp.eq.s32.totalorder %s118, 1
      %p451 = por %p449, %p450
      %p452 = scmp.ne.s32.totalorder %s443, %s444
      %p453 = scmp.eq.s32.totalorder %s118, 0
      %p454 = por %p452, %p453
      %p455 = scmp.ne.s32.totalorder %s443, %s444
      %p456 = scmp.eq.s32.totalorder %s119, 1
      %p457 = por %p455, %p456
      %p459 = scmp.ne.s32.totalorder %s444, %s458
      %p460 = scmp.eq.s32.totalorder %s119, 0
      %p461 = por %p459, %p460
      %s463 = sadd.s32 %s462, 1
      %p466 = scmp.eq.s32.totalorder %s113, 1
      %p467 = scmp.ne.s32.totalorder %s462, %s464
      %p468 = scmp.eq.s32.totalorder %s113, 0
      %p469 = por %p467, %p468
      %p470 = scmp.ne.s32.totalorder %s462, %s464
      %p471 = scmp.eq.s32.totalorder %s118, 1
      %p472 = por %p470, %p471
      %p473 = scmp.ne.s32.totalorder %s464, %s465
      %p474 = scmp.eq.s32.totalorder %s118, 0
      %p475 = por %p473, %p474
      %p476 = scmp.ne.s32.totalorder %s464, %s465
      %p477 = scmp.eq.s32.totalorder %s119, 1
      %p478 = por %p476, %p477
      %p480 = scmp.ne.s32.totalorder %s465, %s479
      %p481 = scmp.eq.s32.totalorder %s119, 0
      %p482 = por %p480, %p481
      %s484 = sadd.s32 %s483, 1
      %p487 = scmp.eq.s32.totalorder %s113, 1
      %p488 = scmp.ne.s32.totalorder %s483, %s485
      %p489 = scmp.eq.s32.totalorder %s113, 0
      %p490 = por %p488, %p489
      %p491 = scmp.ne.s32.totalorder %s483, %s485
      %p492 = scmp.eq.s32.totalorder %s118, 1
      %p493 = por %p491, %p492
      %p494 = scmp.ne.s32.totalorder %s485, %s486
      %p495 = scmp.eq.s32.totalorder %s118, 0
      %p496 = por %p494, %p495
      %p497 = scmp.ne.s32.totalorder %s485, %s486
      %p498 = scmp.eq.s32.totalorder %s119, 1
      %p499 = por %p497, %p498
      %p501 = scmp.ne.s32.totalorder %s486, %s500
      %p502 = scmp.eq.s32.totalorder %s119, 0
      %p503 = por %p501, %p502
      %s505 = sadd.s32 %s504, 1
      %p508 = scmp.eq.s32.totalorder %s113, 1
      %p509 = scmp.ne.s32.totalorder %s504, %s506
      %p510 = scmp.eq.s32.totalorder %s113, 0
      %p511 = por %p509, %p510
      %p512 = scmp.ne.s32.totalorder %s504, %s506
      %p513 = scmp.eq.s32.totalorder %s118, 1
      %p514 = por %p512, %p513
      %p515 = scmp.ne.s32.totalorder %s506, %s507
      %p516 = scmp.eq.s32.totalorder %s118, 0
      %p517 = por %p515, %p516
      %p518 = scmp.ne.s32.totalorder %s506, %s507
      %p519 = scmp.eq.s32.totalorder %s119, 1
      %p520 = por %p518, %p519
      %p522 = scmp.ne.s32.totalorder %s507, %s521
      %p523 = scmp.eq.s32.totalorder %s119, 0
      %p524 = por %p522, %p523
      %s526 = sadd.s32 %s525, 1
      %p529 = scmp.eq.s32.totalorder %s113, 1
      %p530 = scmp.ne.s32.totalorder %s525, %s527
      %p531 = scmp.eq.s32.totalorder %s113, 0
      %p532 = por %p530, %p531
      %p533 = scmp.ne.s32.totalorder %s525, %s527
      %p534 = scmp.eq.s32.totalorder %s118, 1
      %p535 = por %p533, %p534
      %p536 = scmp.ne.s32.totalorder %s527, %s528
      %p537 = scmp.eq.s32.totalorder %s118, 0
      %p538 = por %p536, %p537
      %p539 = scmp.ne.s32.totalorder %s527, %s528
      %p540 = scmp.eq.s32.totalorder %s119, 1
      %p541 = por %p539, %p540
      %p543 = scmp.ne.s32.totalorder %s528, %s542
      %p544 = scmp.eq.s32.totalorder %s119, 0
      %p545 = por %p543, %p544
      %s547 = sadd.s32 %s546, 1
      %p550 = scmp.eq.s32.totalorder %s113, 1
      %p551 = scmp.ne.s32.totalorder %s546, %s548
      %p552 = scmp.eq.s32.totalorder %s113, 0
      %p553 = por %p551, %p552
      %p554 = scmp.ne.s32.totalorder %s546, %s548
      %p555 = scmp.eq.s32.totalorder %s118, 1
      %p556 = por %p554, %p555
      %p557 = scmp.ne.s32.totalorder %s548, %s549
      %p558 = scmp.eq.s32.totalorder %s118, 0
      %p559 = por %p557, %p558
      %p560 = scmp.ne.s32.totalorder %s548, %s549
      %p561 = scmp.eq.s32.totalorder %s119, 1
      %p562 = por %p560, %p561
      %p564 = scmp.ne.s32.totalorder %s549, %s563
      %p565 = scmp.eq.s32.totalorder %s119, 0
      %p566 = por %p564, %p565
      %s568 = sadd.s32 %s567, 1
      %p571 = scmp.eq.s32.totalorder %s113, 1
      %p572 = scmp.ne.s32.totalorder %s567, %s569
      %p573 = scmp.eq.s32.totalorder %s113, 0
      %p574 = por %p572, %p573
      %p575 = scmp.ne.s32.totalorder %s567, %s569
      %p576 = scmp.eq.s32.totalorder %s118, 1
      %p577 = por %p575, %p576
      %p578 = scmp.ne.s32.totalorder %s569, %s570
      %p579 = scmp.eq.s32.totalorder %s118, 0
      %p580 = por %p578, %p579
      %p581 = scmp.ne.s32.totalorder %s569, %s570
      %p582 = scmp.eq.s32.totalorder %s119, 1
      %p583 = por %p581, %p582
      %p585 = scmp.ne.s32.totalorder %s570, %s584
      %p586 = scmp.eq.s32.totalorder %s119, 0
      %p587 = por %p585, %p586
      %s589 = sadd.s32 %s588, 1
      %p592 = scmp.eq.s32.totalorder %s113, 1
      %p593 = scmp.ne.s32.totalorder %s588, %s590
      %p594 = scmp.eq.s32.totalorder %s113, 0
      %p595 = por %p593, %p594
      %p596 = scmp.ne.s32.totalorder %s588, %s590
      %p597 = scmp.eq.s32.totalorder %s118, 1
      %p598 = por %p596, %p597
      %p599 = scmp.ne.s32.totalorder %s590, %s591
      %p600 = scmp.eq.s32.totalorder %s118, 0
      %p601 = por %p599, %p600
      %p602 = scmp.ne.s32.totalorder %s590, %s591
      %p603 = scmp.eq.s32.totalorder %s119, 1
      %p604 = por %p602, %p603
      %p606 = scmp.ne.s32.totalorder %s591, %s605
      %p607 = scmp.eq.s32.totalorder %s119, 0
      %p608 = por %p606, %p607
      %s610 = sadd.s32 %s609, 1
      %p613 = scmp.eq.s32.totalorder %s113, 1
      %p614 = scmp.ne.s32.totalorder %s609, %s611
      %p615 = scmp.eq.s32.totalorder %s113, 0
      %p616 = por %p614, %p615
      %p617 = scmp.ne.s32.totalorder %s609, %s611
      %p618 = scmp.eq.s32.totalorder %s118, 1
      %p619 = por %p617, %p618
      %p620 = scmp.ne.s32.totalorder %s611, %s612
      %p621 = scmp.eq.s32.totalorder %s118, 0
      %p622 = por %p620, %p621
      %p623 = scmp.ne.s32.totalorder %s611, %s612
      %p624 = scmp.eq.s32.totalorder %s119, 1
      %p625 = por %p623, %p624
      %p627 = scmp.ne.s32.totalorder %s612, %s626
      %p628 = scmp.eq.s32.totalorder %s119, 0
      %p629 = por %p627, %p628
      %s631 = sadd.s32 %s630, 1
      %p634 = scmp.eq.s32.totalorder %s113, 1
      %p635 = scmp.ne.s32.totalorder %s630, %s632
      %p636 = scmp.eq.s32.totalorder %s113, 0
      %p637 = por %p635, %p636
      %p638 = scmp.ne.s32.totalorder %s630, %s632
      %p639 = scmp.eq.s32.totalorder %s118, 1
      %p640 = por %p638, %p639
      %p641 = scmp.ne.s32.totalorder %s632, %s633
      %p642 = scmp.eq.s32.totalorder %s118, 0
      %p643 = por %p641, %p642
      %p644 = scmp.ne.s32.totalorder %s632, %s633
      %p645 = scmp.eq.s32.totalorder %s119, 1
      %p646 = por %p644, %p645
      %p648 = scmp.ne.s32.totalorder %s633, %s647
      %p649 = scmp.eq.s32.totalorder %s119, 0
      %p650 = por %p648, %p649
      %s652 = sadd.s32 %s651, 1
      %p655 = scmp.eq.s32.totalorder %s113, 1
      %p656 = scmp.ne.s32.totalorder %s651, %s653
      %p657 = scmp.eq.s32.totalorder %s113, 0
      %p658 = por %p656, %p657
      %p659 = scmp.ne.s32.totalorder %s651, %s653
      %p660 = scmp.eq.s32.totalorder %s118, 1
      %p661 = por %p659, %p660
      %p662 = scmp.ne.s32.totalorder %s653, %s654
      %p663 = scmp.eq.s32.totalorder %s118, 0
      %p664 = por %p662, %p663
      %p665 = scmp.ne.s32.totalorder %s653, %s654
      %p666 = scmp.eq.s32.totalorder %s119, 1
      %p667 = por %p665, %p666
      %p669 = scmp.ne.s32.totalorder %s654, %s668
      %p670 = scmp.eq.s32.totalorder %s119, 0
      %p671 = por %p669, %p670
      %s673 = sadd.s32 %s672, 1
      %p676 = scmp.eq.s32.totalorder %s113, 1
      %p677 = scmp.ne.s32.totalorder %s672, %s674
      %p678 = scmp.eq.s32.totalorder %s113, 0
      %p679 = por %p677, %p678
      %p680 = scmp.ne.s32.totalorder %s672, %s674
      %p681 = scmp.eq.s32.totalorder %s118, 1
      %p682 = por %p680, %p681
      %p683 = scmp.ne.s32.totalorder %s674, %s675
      %p684 = scmp.eq.s32.totalorder %s118, 0
      %p685 = por %p683, %p684
      %p686 = scmp.ne.s32.totalorder %s674, %s675
      %p687 = scmp.eq.s32.totalorder %s119, 1
      %p688 = por %p686, %p687
      %p690 = scmp.ne.s32.totalorder %s675, %s689
      %p691 = scmp.eq.s32.totalorder %s119, 0
      %p692 = por %p690, %p691
      %s694 = sadd.s32 %s693, 1
      %p697 = scmp.eq.s32.totalorder %s113, 1
      %p698 = scmp.ne.s32.totalorder %s693, %s695
      %p699 = scmp.eq.s32.totalorder %s113, 0
      %p700 = por %p698, %p699
      %p701 = scmp.ne.s32.totalorder %s693, %s695
      %p702 = scmp.eq.s32.totalorder %s118, 1
      %p703 = por %p701, %p702
      %p704 = scmp.ne.s32.totalorder %s695, %s696
      %p705 = scmp.eq.s32.totalorder %s118, 0
      %p706 = por %p704, %p705
      %p707 = scmp.ne.s32.totalorder %s695, %s696
      %p708 = scmp.eq.s32.totalorder %s119, 1
      %p709 = por %p707, %p708
      %p711 = scmp.ne.s32.totalorder %s696, %s710
      %p712 = scmp.eq.s32.totalorder %s119, 0
      %p713 = por %p711, %p712
      %s715 = sadd.s32 %s714, 1
      %p718 = scmp.eq.s32.totalorder %s113, 1
      %p719 = scmp.ne.s32.totalorder %s714, %s716
      %p720 = scmp.eq.s32.totalorder %s113, 0
      %p721 = por %p719, %p720
      %p722 = scmp.ne.s32.totalorder %s714, %s716
      %p723 = scmp.eq.s32.totalorder %s118, 1
      %p724 = por %p722, %p723
      %p725 = scmp.ne.s32.totalorder %s716, %s717
      %p726 = scmp.eq.s32.totalorder %s118, 0
      %p727 = por %p725, %p726
      %p728 = scmp.ne.s32.totalorder %s716, %s717
      %p729 = scmp.eq.s32.totalorder %s119, 1
      %p730 = por %p728, %p729
      %p732 = scmp.ne.s32.totalorder %s717, %s731
      %p733 = scmp.eq.s32.totalorder %s119, 0
      %p734 = por %p732, %p733
      %s736 = sadd.s32 %s735, 1
      %p739 = scmp.eq.s32.totalorder %s113, 1
      %p740 = scmp.ne.s32.totalorder %s735, %s737
      %p741 = scmp.eq.s32.totalorder %s113, 0
      %p742 = por %p740, %p741
      %p743 = scmp.ne.s32.totalorder %s735, %s737
      %p744 = scmp.eq.s32.totalorder %s118, 1
      %p745 = por %p743, %p744
      %p746 = scmp.ne.s32.totalorder %s737, %s738
      %p747 = scmp.eq.s32.totalorder %s118, 0
      %p748 = por %p746, %p747
      %p749 = scmp.ne.s32.totalorder %s737, %s738
      %p750 = scmp.eq.s32.totalorder %s119, 1
      %p751 = por %p749, %p750
      %p753 = scmp.ne.s32.totalorder %s738, %s752
      %p754 = scmp.eq.s32.totalorder %s119, 0
      %p755 = por %p753, %p754
      %s757 = sadd.s32 %s756, 1
      %p760 = scmp.eq.s32.totalorder %s113, 1
      %p761 = scmp.ne.s32.totalorder %s756, %s758
      %p762 = scmp.eq.s32.totalorder %s113, 0
      %p763 = por %p761, %p762
      %p764 = scmp.ne.s32.totalorder %s756, %s758
      %p765 = scmp.eq.s32.totalorder %s118, 1
      %p766 = por %p764, %p765
      %p767 = scmp.ne.s32.totalorder %s758, %s759
      %p768 = scmp.eq.s32.totalorder %s118, 0
      %p769 = por %p767, %p768
      %p770 = scmp.ne.s32.totalorder %s758, %s759
      %p771 = scmp.eq.s32.totalorder %s119, 1
      %p772 = por %p770, %p771
      %p774 = scmp.ne.s32.totalorder %s759, %s773
      %p775 = scmp.eq.s32.totalorder %s119, 0
      %p776 = por %p774, %p775
      %s778 = sadd.s32 %s777, 1
      %p781 = scmp.eq.s32.totalorder %s113, 1
      %p782 = scmp.ne.s32.totalorder %s777, %s779
      %p783 = scmp.eq.s32.totalorder %s113, 0
      %p784 = por %p782, %p783
      %p785 = scmp.ne.s32.totalorder %s777, %s779
      %p786 = scmp.eq.s32.totalorder %s118, 1
      %p787 = por %p785, %p786
      %p788 = scmp.ne.s32.totalorder %s779, %s780
      %p789 = scmp.eq.s32.totalorder %s118, 0
      %p790 = por %p788, %p789
      %p791 = scmp.ne.s32.totalorder %s779, %s780
      %p792 = scmp.eq.s32.totalorder %s119, 1
      %p793 = por %p791, %p792
      %p795 = scmp.ne.s32.totalorder %s780, %s794
      %p796 = scmp.eq.s32.totalorder %s119, 0
      %p797 = por %p795, %p796
      %s799 = sadd.s32 %s798, 1
      %p802 = scmp.eq.s32.totalorder %s113, 1
      %p803 = scmp.ne.s32.totalorder %s798, %s800
      %p804 = scmp.eq.s32.totalorder %s113, 0
      %p805 = por %p803, %p804
      %p806 = scmp.ne.s32.totalorder %s798, %s800
      %p807 = scmp.eq.s32.totalorder %s118, 1
      %p808 = por %p806, %p807
      %p809 = scmp.ne.s32.totalorder %s800, %s801
      %p810 = scmp.eq.s32.totalorder %s118, 0
      %p811 = por %p809, %p810
      %p812 = scmp.ne.s32.totalorder %s800, %s801
      %p813 = scmp.eq.s32.totalorder %s119, 1
      %p814 = por %p812, %p813
      %p816 = scmp.ne.s32.totalorder %s801, %s815
      %p817 = scmp.eq.s32.totalorder %s119, 0
      %p818 = por %p816, %p817
      %s820 = sadd.s32 %s819, 1
      %p823 = scmp.eq.s32.totalorder %s113, 1
      %p824 = scmp.ne.s32.totalorder %s819, %s821
      %p825 = scmp.eq.s32.totalorder %s113, 0
      %p826 = por %p824, %p825
      %p827 = scmp.ne.s32.totalorder %s819, %s821
      %p828 = scmp.eq.s32.totalorder %s118, 1
      %p829 = por %p827, %p828
      %p830 = scmp.ne.s32.totalorder %s821, %s822
      %p831 = scmp.eq.s32.totalorder %s118, 0
      %p832 = por %p830, %p831
      %p833 = scmp.ne.s32.totalorder %s821, %s822
      %p834 = scmp.eq.s32.totalorder %s119, 1
      %p835 = por %p833, %p834
      %p837 = scmp.ne.s32.totalorder %s822, %s836
      %p838 = scmp.eq.s32.totalorder %s119, 0
      %p839 = por %p837, %p838
      %s841 = sadd.s32 %s840, 1
      %p844 = scmp.eq.s32.totalorder %s113, 1
      %p845 = scmp.ne.s32.totalorder %s840, %s842
      %p846 = scmp.eq.s32.totalorder %s113, 0
      %p847 = por %p845, %p846
      %p848 = scmp.ne.s32.totalorder %s840, %s842
      %p849 = scmp.eq.s32.totalorder %s118, 1
      %p850 = por %p848, %p849
      %p851 = scmp.ne.s32.totalorder %s842, %s843
      %p852 = scmp.eq.s32.totalorder %s118, 0
      %p853 = por %p851, %p852
      %p854 = scmp.ne.s32.totalorder %s842, %s843
      %p855 = scmp.eq.s32.totalorder %s119, 1
      %p856 = por %p854, %p855
      %p858 = scmp.ne.s32.totalorder %s843, %s857
      %p859 = scmp.eq.s32.totalorder %s119, 0
      %p860 = por %p858, %p859
      %s862 = sadd.s32 %s861, 1
      %p865 = scmp.eq.s32.totalorder %s113, 1
      %p866 = scmp.ne.s32.totalorder %s861, %s863
      %p867 = scmp.eq.s32.totalorder %s113, 0
      %p868 = por %p866, %p867
      %p869 = scmp.ne.s32.totalorder %s861, %s863
      %p870 = scmp.eq.s32.totalorder %s118, 1
      %p871 = por %p869, %p870
      %p872 = scmp.ne.s32.totalorder %s863, %s864
      %p873 = scmp.eq.s32.totalorder %s118, 0
      %p874 = por %p872, %p873
      %p875 = scmp.ne.s32.totalorder %s863, %s864
      %p876 = scmp.eq.s32.totalorder %s119, 1
      %p877 = por %p875, %p876
      %p879 = scmp.ne.s32.totalorder %s864, %s878
      %p880 = scmp.eq.s32.totalorder %s119, 0
      %p881 = por %p879, %p880
      %s883 = sadd.s32 %s882, 1
      %p886 = scmp.eq.s32.totalorder %s113, 1
      %p887 = scmp.ne.s32.totalorder %s882, %s884
      %p888 = scmp.eq.s32.totalorder %s113, 0
      %p889 = por %p887, %p888
      %p890 = scmp.ne.s32.totalorder %s882, %s884
      %p891 = scmp.eq.s32.totalorder %s118, 1
      %p892 = por %p890, %p891
      %p893 = scmp.ne.s32.totalorder %s884, %s885
      %p894 = scmp.eq.s32.totalorder %s118, 0
      %p895 = por %p893, %p894
      %p896 = scmp.ne.s32.totalorder %s884, %s885
      %p897 = scmp.eq.s32.totalorder %s119, 1
      %p898 = por %p896, %p897
      %p900 = scmp.ne.s32.totalorder %s885, %s899
      %p901 = scmp.eq.s32.totalorder %s119, 0
      %p902 = por %p900, %p901
      %s904 = sadd.s32 %s903, 1
      %p907 = scmp.eq.s32.totalorder %s113, 1
      %p908 = scmp.ne.s32.totalorder %s903, %s905
      %p909 = scmp.eq.s32.totalorder %s113, 0
      %p910 = por %p908, %p909
      %p911 = scmp.ne.s32.totalorder %s903, %s905
      %p912 = scmp.eq.s32.totalorder %s118, 1
      %p913 = por %p911, %p912
      %p914 = scmp.ne.s32.totalorder %s905, %s906
      %p915 = scmp.eq.s32.totalorder %s118, 0
      %p916 = por %p914, %p915
      %p917 = scmp.ne.s32.totalorder %s905, %s906
      %p918 = scmp.eq.s32.totalorder %s119, 1
      %p919 = por %p917, %p918
      %p921 = scmp.ne.s32.totalorder %s906, %s920
      %p922 = scmp.eq.s32.totalorder %s119, 0
      %p923 = por %p921, %p922
      %s925 = sadd.s32 %s924, 1
      %p928 = scmp.eq.s32.totalorder %s113, 1
      %p929 = scmp.ne.s32.totalorder %s924, %s926
      %p930 = scmp.eq.s32.totalorder %s113, 0
      %p931 = por %p929, %p930
      %p932 = scmp.ne.s32.totalorder %s924, %s926
      %p933 = scmp.eq.s32.totalorder %s118, 1
      %p934 = por %p932, %p933
      %p935 = scmp.ne.s32.totalorder %s926, %s927
      %p936 = scmp.eq.s32.totalorder %s118, 0
      %p937 = por %p935, %p936
      %p938 = scmp.ne.s32.totalorder %s926, %s927
      %p939 = scmp.eq.s32.totalorder %s119, 1
      %p940 = por %p938, %p939
      %p942 = scmp.ne.s32.totalorder %s927, %s941
      %p943 = scmp.eq.s32.totalorder %s119, 0
      %p944 = por %p942, %p943
      %s946 = sadd.s32 %s945, 1
      %p949 = scmp.eq.s32.totalorder %s113, 1
      %p950 = scmp.ne.s32.totalorder %s945, %s947
      %p951 = scmp.eq.s32.totalorder %s113, 0
      %p952 = por %p950, %p951
      %p953 = scmp.ne.s32.totalorder %s945, %s947
      %p954 = scmp.eq.s32.totalorder %s118, 1
      %p955 = por %p953, %p954
      %p956 = scmp.ne.s32.totalorder %s947, %s948
      %p957 = scmp.eq.s32.totalorder %s118, 0
      %p958 = por %p956, %p957
      %p959 = scmp.ne.s32.totalorder %s947, %s948
      %p960 = scmp.eq.s32.totalorder %s119, 1
      %p961 = por %p959, %p960
      %p963 = scmp.ne.s32.totalorder %s948, %s962
      %p964 = scmp.eq.s32.totalorder %s119, 0
      %p965 = por %p963, %p964
      %s967 = sadd.s32 %s966, 1
      %p970 = scmp.eq.s32.totalorder %s113, 1
      %p971 = scmp.ne.s32.totalorder %s966, %s968
      %p972 = scmp.eq.s32.totalorder %s113, 0
      %p973 = por %p971, %p972
      %p974 = scmp.ne.s32.totalorder %s966, %s968
      %p975 = scmp.eq.s32.totalorder %s118, 1
      %p976 = por %p974, %p975
      %p977 = scmp.ne.s32.totalorder %s968, %s969
      %p978 = scmp.eq.s32.totalorder %s118, 0
      %p979 = por %p977, %p978
      %p980 = scmp.ne.s32.totalorder %s968, %s969
      %p981 = scmp.eq.s32.totalorder %s119, 1
      %p982 = por %p980, %p981
      %p984 = scmp.ne.s32.totalorder %s969, %s983
      %p985 = scmp.eq.s32.totalorder %s119, 0
      %p986 = por %p984, %p985
      %s988 = sadd.s32 %s987, 1
      %p991 = scmp.eq.s32.totalorder %s113, 1
      %p992 = scmp.ne.s32.totalorder %s987, %s989
      %p993 = scmp.eq.s32.totalorder %s113, 0
      %p994 = por %p992, %p993
      %p995 = scmp.ne.s32.totalorder %s987, %s989
      %p996 = scmp.eq.s32.totalorder %s118, 1
      %p997 = por %p995, %p996
      %p998 = scmp.ne.s32.totalorder %s989, %s990
      %p999 = scmp.eq.s32.totalorder %s118, 0
      %p1000 = por %p998, %p999
      %p1001 = scmp.ne.s32.totalorder %s989, %s990
      %p1002 = scmp.eq.s32.totalorder %s119, 1
      %p1003 = por %p1001, %p1002
      %p1005 = scmp.ne.s32.totalorder %s990, %s1004
      %p1006 = scmp.eq.s32.totalorder %s119, 0
      %p1007 = por %p1005, %p1006
      %s1009 = sadd.s32 %s1008, 1
      %p1012 = scmp.eq.s32.totalorder %s113, 1
      %p1013 = scmp.ne.s32.totalorder %s1008, %s1010
      %p1014 = scmp.eq.s32.totalorder %s113, 0
      %p1015 = por %p1013, %p1014
      %p1016 = scmp.ne.s32.totalorder %s1008, %s1010
      %p1017 = scmp.eq.s32.totalorder %s118, 1
      %p1018 = por %p1016, %p1017
      %p1019 = scmp.ne.s32.totalorder %s1010, %s1011
      %p1020 = scmp.eq.s32.totalorder %s118, 0
      %p1021 = por %p1019, %p1020
      %p1022 = scmp.ne.s32.totalorder %s1010, %s1011
      %p1023 = scmp.eq.s32.totalorder %s119, 1
      %p1024 = por %p1022, %p1023
      %p1026 = scmp.ne.s32.totalorder %s1011, %s1025
      %p1027 = scmp.eq.s32.totalorder %s119, 0
      %p1028 = por %p1026, %p1027
      %s1030 = sadd.s32 %s1029, 1
      %p1033 = scmp.eq.s32.totalorder %s113, 1
      %p1034 = scmp.ne.s32.totalorder %s1029, %s1031
      %p1035 = scmp.eq.s32.totalorder %s113, 0
      %p1036 = por %p1034, %p1035
      %p1037 = scmp.ne.s32.totalorder %s1029, %s1031
      %p1038 = scmp.eq.s32.totalorder %s118, 1
      %p1039 = por %p1037, %p1038
      %p1040 = scmp.ne.s32.totalorder %s1031, %s1032
      %p1041 = scmp.eq.s32.totalorder %s118, 0
      %p1042 = por %p1040, %p1041
      %p1043 = scmp.ne.s32.totalorder %s1031, %s1032
      %p1044 = scmp.eq.s32.totalorder %s119, 1
      %p1045 = por %p1043, %p1044
      %p1047 = scmp.ne.s32.totalorder %s1032, %s1046
      %p1048 = scmp.eq.s32.totalorder %s119, 0
      %p1049 = por %p1047, %p1048
      %s1051 = sadd.s32 %s1050, 1
      %p1054 = scmp.eq.s32.totalorder %s113, 1
      %p1055 = scmp.ne.s32.totalorder %s1050, %s1052
      %p1056 = scmp.eq.s32.totalorder %s113, 0
      %p1057 = por %p1055, %p1056
      %p1058 = scmp.ne.s32.totalorder %s1050, %s1052
      %p1059 = scmp.eq.s32.totalorder %s118, 1
      %p1060 = por %p1058, %p1059
      %p1061 = scmp.ne.s32.totalorder %s1052, %s1053
      %p1062 = scmp.eq.s32.totalorder %s118, 0
      %p1063 = por %p1061, %p1062
      %p1064 = scmp.ne.s32.totalorder %s1052, %s1053
      %p1065 = scmp.eq.s32.totalorder %s119, 1
      %p1066 = por %p1064, %p1065
      %p1068 = scmp.ne.s32.totalorder %s1053, %s1067
      %p1069 = scmp.eq.s32.totalorder %s119, 0
      %p1070 = por %p1068, %p1069
      %s1071 = ssub.s32 %s113, %s120
      %p1072 = scmp.eq.s32.totalorder %s1071, 0
      %s1074 = sadd.s32 %s1073, 1
      %s1075 = scalar_select %p1072, %s1073, %s1074
      %p1078 = pneg %p1072
      %p1079 = scmp.eq.s32.totalorder %s113, 1
      %p1080 = por %p1078, %p1079
      %p1081 = scmp.ne.s32.totalorder %s1073, %s1076
      %p1082 = scmp.eq.s32.totalorder %s113, 0
      %p1083 = por %p1081, %p1082
      %p1084 = scmp.ne.s32.totalorder %s1073, %s1076
      %p1085 = scmp.eq.s32.totalorder %s118, 1
      %p1086 = por %p1084, %p1085
      %p1087 = scmp.ne.s32.totalorder %s1076, %s1077
      %p1088 = scmp.eq.s32.totalorder %s118, 0
      %p1089 = por %p1087, %p1088
      %p1090 = scmp.ne.s32.totalorder %s1076, %s1077
      %p1091 = scmp.eq.s32.totalorder %s119, 1
      %p1092 = por %p1090, %p1091
      %p1094 = scmp.ne.s32.totalorder %s1077, %s1093
      %p1095 = scmp.eq.s32.totalorder %s119, 0
      %p1096 = por %p1094, %p1095
      %p1097 = scmp.le.s32.totalorder 1, %s113
      %p1098 = scmp.lt.s32.totalorder %s113, 3
      %p1099 = pnand %p1097, %p1098
      %p1100 = pneg %p1099
      // Predicated region
      $region9: #{tpu_custom_call.1} parent=5 // pred_check
        _
      $region10: #{tpu_custom_call.1} parent=5 // pred_check_branch
        %1102 = sbr.rel (%p1099) target = $region12
      $region11: #{tpu_custom_call.1} parent=5 // pred_region
        %s1103 = ssub.s32 %s113, 1
        // Predicated region
        $region13: #{tpu_custom_call.1} parent=11 // pred_check
          %p1104 = pneg %p160
        $region14: #{tpu_custom_call.1} parent=11 // pred_check_branch
          %1106 = sbr.rel (%p1104) target = $region16
        $region15: #{tpu_custom_call.1} parent=11 // pred_region
          %s1108 = ssub.s32 512, 512
          %1109 = vsyncadd [#allocation6], %s1108
          %s1110 = sshll.u32 [#allocation5], 4
          %s1111 = int_to_ptr.vmem [resolvable:$true] %s1110
          %1116 = dma.hbm_to_vmem [thread:$0]  %s3, 512, %s1111, [#allocation6], 128, 128, 8
        $region16: #{tpu_custom_call.1} parent=11 // pred_fallthru
          _
        // Predicated region
        $region17: #{tpu_custom_call.1} parent=11 // pred_check
          %p1117 = pneg %p181
        $region18: #{tpu_custom_call.1} parent=11 // pred_check_branch
          %1119 = sbr.rel (%p1117) target = $region20
        $region19: #{tpu_custom_call.1} parent=11 // pred_region
          %s1121 = ssub.s32 16, 16
          %1122 = vsyncadd [#allocation6], %s1121
          %s1124 = sshll.u32 [#allocation7], 4
          %s1125 = int_to_ptr.vmem [resolvable:$true] %s1124
          %1127 = dma.hbm_to_vmem [thread:$0]  %s5, 16, %s1125, [#allocation6]
        $region20: #{tpu_custom_call.1} parent=11 // pred_fallthru
          _
        // Predicated region
        $region21: #{tpu_custom_call.1} parent=11 // pred_check
          %p1128 = pneg %p202
        $region22: #{tpu_custom_call.1} parent=11 // pred_check_branch
          %1130 = sbr.rel (%p1128) target = $region24
        $region23: #{tpu_custom_call.1} parent=11 // pred_region
          _
        $region24: #{tpu_custom_call.1} parent=11 // pred_fallthru
          _
        // Predicated region
        $region25: #{tpu_custom_call.1} parent=11 // pred_check
          %p1131 = pneg %p223
        $region26: #{tpu_custom_call.1} parent=11 // pred_check_branch
          %1133 = sbr.rel (%p1131) target = $region28
        $region27: #{tpu_custom_call.1} parent=11 // pred_region
          _
        $region28: #{tpu_custom_call.1} parent=11 // pred_fallthru
          _
        // Predicated region
        $region29: #{tpu_custom_call.1} parent=11 // pred_check
          %p1134 = pneg %p244
        $region30: #{tpu_custom_call.1} parent=11 // pred_check_branch
          %1136 = sbr.rel (%p1134) target = $region32
        $region31: #{tpu_custom_call.1} parent=11 // pred_region
          _
        $region32: #{tpu_custom_call.1} parent=11 // pred_fallthru
          _
        // Predicated region
        $region33: #{tpu_custom_call.1} parent=11 // pred_check
          %p1137 = pneg %p265
        $region34: #{tpu_custom_call.1} parent=11 // pred_check_branch
          %1139 = sbr.rel (%p1137) target = $region36
        $region35: #{tpu_custom_call.1} parent=11 // pred_region
          _
        $region36: #{tpu_custom_call.1} parent=11 // pred_fallthru
          _
        // Predicated region
        $region37: #{tpu_custom_call.1} parent=11 // pred_check
          %p1140 = pneg %p286
        $region38: #{tpu_custom_call.1} parent=11 // pred_check_branch
          %1142 = sbr.rel (%p1140) target = $region40
        $region39: #{tpu_custom_call.1} parent=11 // pred_region
          _
        $region40: #{tpu_custom_call.1} parent=11 // pred_fallthru
          _
        // Predicated region
        $region41: #{tpu_custom_call.1} parent=11 // pred_check
          %p1143 = pneg %p307
        $region42: #{tpu_custom_call.1} parent=11 // pred_check_branch
          %1145 = sbr.rel (%p1143) target = $region44
        $region43: #{tpu_custom_call.1} parent=11 // pred_region
          %s1147 = ssub.s32 32, 32
          %1148 = vsyncadd [#allocation9], %s1147
          %s1150 = sshll.u32 [#allocation8], 4
          %s1151 = int_to_ptr.vmem [resolvable:$true] %s1150
          %1153 = dma.hbm_to_vmem [thread:$0]  %s17, 32, %s1151, [#allocation9]
        $region44: #{tpu_custom_call.1} parent=11 // pred_fallthru
          _
        // Predicated region
        $region45: #{tpu_custom_call.1} parent=11 // pred_check
          %p1154 = pneg %p328
        $region46: #{tpu_custom_call.1} parent=11 // pred_check_branch
          %1156 = sbr.rel (%p1154) target = $region48
        $region47: #{tpu_custom_call.1} parent=11 // pred_region
          _
        $region48: #{tpu_custom_call.1} parent=11 // pred_fallthru
          _
        // Predicated region
        $region49: #{tpu_custom_call.1} parent=11 // pred_check
          %p1157 = pneg %p349
        $region50: #{tpu_custom_call.1} parent=11 // pred_check_branch
          %1159 = sbr.rel (%p1157) target = $region52
        $region51: #{tpu_custom_call.1} parent=11 // pred_region
          %s1161 = ssub.s32 32, 32
          %1162 = vsyncadd [#allocation9], %s1161
          %s1164 = sshll.u32 [#allocation10], 4
          %s1165 = int_to_ptr.vmem [resolvable:$true] %s1164
          %1167 = dma.hbm_to_vmem [thread:$0]  %s21, 32, %s1165, [#allocation9]
        $region52: #{tpu_custom_call.1} parent=11 // pred_fallthru
          _
        // Predicated region
        $region53: #{tpu_custom_call.1} parent=11 // pred_check
          %p1168 = pneg %p370
        $region54: #{tpu_custom_call.1} parent=11 // pred_check_branch
          %1170 = sbr.rel (%p1168) target = $region56
        $region55: #{tpu_custom_call.1} parent=11 // pred_region
          _
        $region56: #{tpu_custom_call.1} parent=11 // pred_fallthru
          _
        // Predicated region
        $region57: #{tpu_custom_call.1} parent=11 // pred_check
          %p1171 = pneg %p391
        $region58: #{tpu_custom_call.1} parent=11 // pred_check_branch
          %1173 = sbr.rel (%p1171) target = $region60
        $region59: #{tpu_custom_call.1} parent=11 // pred_region
          %s1175 = ssub.s32 32, 32
          %1176 = vsyncadd [#allocation12], %s1175
          %s1178 = sshll.u32 [#allocation11], 4
          %s1179 = int_to_ptr.vmem [resolvable:$true] %s1178
          %1181 = dma.hbm_to_vmem [thread:$0]  %s25, 32, %s1179, [#allocation12]
        $region60: #{tpu_custom_call.1} parent=11 // pred_fallthru
          _
        // Predicated region
        $region61: #{tpu_custom_call.1} parent=11 // pred_check
          %p1182 = pneg %p412
        $region62: #{tpu_custom_call.1} parent=11 // pred_check_branch
          %1184 = sbr.rel (%p1182) target = $region64
        $region63: #{tpu_custom_call.1} parent=11 // pred_region
          _
        $region64: #{tpu_custom_call.1} parent=11 // pred_fallthru
          _
        // Predicated region
        $region65: #{tpu_custom_call.1} parent=11 // pred_check
          %p1185 = pneg %p433
        $region66: #{tpu_custom_call.1} parent=11 // pred_check_branch
          %1187 = sbr.rel (%p1185) target = $region68
        $region67: #{tpu_custom_call.1} parent=11 // pred_region
          %s1189 = ssub.s32 32, 32
          %1190 = vsyncadd [#allocation12], %s1189
          %s1192 = sshll.u32 [#allocation13], 4
          %s1193 = int_to_ptr.vmem [resolvable:$true] %s1192
          %1195 = dma.hbm_to_vmem [thread:$0]  %s29, 32, %s1193, [#allocation12]
        $region68: #{tpu_custom_call.1} parent=11 // pred_fallthru
          _
        // Predicated region
        $region69: #{tpu_custom_call.1} parent=11 // pred_check
          %p1196 = pneg %p454
        $region70: #{tpu_custom_call.1} parent=11 // pred_check_branch
          %1198 = sbr.rel (%p1196) target = $region72
        $region71: #{tpu_custom_call.1} parent=11 // pred_region
          %s1200 = ssub.s32 32, 32
          %1201 = vsyncadd [#allocation15], %s1200
          %s1203 = sshll.u32 [#allocation14], 4
          %s1204 = int_to_ptr.vmem [resolvable:$true] %s1203
          %1206 = dma.hbm_to_vmem [thread:$0]  %s31, 32, %s1204, [#allocation15]
        $region72: #{tpu_custom_call.1} parent=11 // pred_fallthru
          _
        // Predicated region
        $region73: #{tpu_custom_call.1} parent=11 // pred_check
          %p1207 = pneg %p475
        $region74: #{tpu_custom_call.1} parent=11 // pred_check_branch
          %1209 = sbr.rel (%p1207) target = $region76
        $region75: #{tpu_custom_call.1} parent=11 // pred_region
          %s1211 = ssub.s32 32, 32
          %1212 = vsyncadd [#allocation15], %s1211
          %s1214 = sshll.u32 [#allocation16], 4
          %s1215 = int_to_ptr.vmem [resolvable:$true] %s1214
          %1217 = dma.hbm_to_vmem [thread:$0]  %s33, 32, %s1215, [#allocation15]
        $region76: #{tpu_custom_call.1} parent=11 // pred_fallthru
          _
        // Predicated region
        $region77: #{tpu_custom_call.1} parent=11 // pred_check
          %p1218 = pneg %p496
        $region78: #{tpu_custom_call.1} parent=11 // pred_check_branch
          %1220 = sbr.rel (%p1218) target = $region80
        $region79: #{tpu_custom_call.1} parent=11 // pred_region
          %s1222 = ssub.s32 32, 32
          %1223 = vsyncadd [#allocation18], %s1222
          %s1225 = sshll.u32 [#allocation17], 4
          %s1226 = int_to_ptr.vmem [resolvable:$true] %s1225
          %1228 = dma.hbm_to_vmem [thread:$0]  %s35, 32, %s1226, [#allocation18]
        $region80: #{tpu_custom_call.1} parent=11 // pred_fallthru
          _
        // Predicated region
        $region81: #{tpu_custom_call.1} parent=11 // pred_check
          %p1229 = pneg %p517
        $region82: #{tpu_custom_call.1} parent=11 // pred_check_branch
          %1231 = sbr.rel (%p1229) target = $region84
        $region83: #{tpu_custom_call.1} parent=11 // pred_region
          %s1233 = ssub.s32 32, 32
          %1234 = vsyncadd [#allocation18], %s1233
          %s1236 = sshll.u32 [#allocation19], 4
          %s1237 = int_to_ptr.vmem [resolvable:$true] %s1236
          %1239 = dma.hbm_to_vmem [thread:$0]  %s37, 32, %s1237, [#allocation18]
        $region84: #{tpu_custom_call.1} parent=11 // pred_fallthru
          _
        // Predicated region
        $region85: #{tpu_custom_call.1} parent=11 // pred_check
          %p1240 = pneg %p538
        $region86: #{tpu_custom_call.1} parent=11 // pred_check_branch
          %1242 = sbr.rel (%p1240) target = $region88
        $region87: #{tpu_custom_call.1} parent=11 // pred_region
          %s1244 = ssub.s32 32, 32
          %1245 = vsyncadd [#allocation21], %s1244
          %s1247 = sshll.u32 [#allocation20], 4
          %s1248 = int_to_ptr.vmem [resolvable:$true] %s1247
          %1250 = dma.hbm_to_vmem [thread:$0]  %s39, 32, %s1248, [#allocation21]
        $region88: #{tpu_custom_call.1} parent=11 // pred_fallthru
          _
        // Predicated region
        $region89: #{tpu_custom_call.1} parent=11 // pred_check
          %p1251 = pneg %p559
        $region90: #{tpu_custom_call.1} parent=11 // pred_check_branch
          %1253 = sbr.rel (%p1251) target = $region92
        $region91: #{tpu_custom_call.1} parent=11 // pred_region
          %s1255 = ssub.s32 32, 32
          %1256 = vsyncadd [#allocation21], %s1255
          %s1258 = sshll.u32 [#allocation22], 4
          %s1259 = int_to_ptr.vmem [resolvable:$true] %s1258
          %1261 = dma.hbm_to_vmem [thread:$0]  %s41, 32, %s1259, [#allocation21]
        $region92: #{tpu_custom_call.1} parent=11 // pred_fallthru
          _
        // Predicated region
        $region93: #{tpu_custom_call.1} parent=11 // pred_check
          %p1262 = pneg %p580
        $region94: #{tpu_custom_call.1} parent=11 // pred_check_branch
          %1264 = sbr.rel (%p1262) target = $region96
        $region95: #{tpu_custom_call.1} parent=11 // pred_region
          %s1266 = ssub.s32 16, 16
          %1267 = vsyncadd [#allocation24], %s1266
          %s1269 = sshll.u32 [#allocation23], 4
          %s1270 = int_to_ptr.vmem [resolvable:$true] %s1269
          %1272 = dma.hbm_to_vmem [thread:$0]  %s43, 16, %s1270, [#allocation24]
        $region96: #{tpu_custom_call.1} parent=11 // pred_fallthru
          _
        // Predicated region
        $region97: #{tpu_custom_call.1} parent=11 // pred_check
          %p1273 = pneg %p601
        $region98: #{tpu_custom_call.1} parent=11 // pred_check_branch
          %1275 = sbr.rel (%p1273) target = $region100
        $region99: #{tpu_custom_call.1} parent=11 // pred_region
          %s1277 = ssub.s32 16, 16
          %1278 = vsyncadd [#allocation24], %s1277
          %s1280 = sshll.u32 [#allocation25], 4
          %s1281 = int_to_ptr.vmem [resolvable:$true] %s1280
          %1283 = dma.hbm_to_vmem [thread:$0]  %s45, 16, %s1281, [#allocation24]
        $region100: #{tpu_custom_call.1} parent=11 // pred_fallthru
          _
        // Predicated region
        $region101: #{tpu_custom_call.1} parent=11 // pred_check
          %p1284 = pneg %p622
        $region102: #{tpu_custom_call.1} parent=11 // pred_check_branch
          %1286 = sbr.rel (%p1284) target = $region104
        $region103: #{tpu_custom_call.1} parent=11 // pred_region
          _
        $region104: #{tpu_custom_call.1} parent=11 // pred_fallthru
          _
        // Predicated region
        $region105: #{tpu_custom_call.1} parent=11 // pred_check
          %p1287 = pneg %p643
        $region106: #{tpu_custom_call.1} parent=11 // pred_check_branch
          %1289 = sbr.rel (%p1287) target = $region108
        $region107: #{tpu_custom_call.1} parent=11 // pred_region
          %s1291 = ssub.s32 16, 16
          %1292 = vsyncadd [#allocation27], %s1291
          %s1294 = sshll.u32 [#allocation26], 4
          %s1295 = int_to_ptr.vmem [resolvable:$true] %s1294
          %1297 = dma.hbm_to_vmem [thread:$0]  %s49, 16, %s1295, [#allocation27]
        $region108: #{tpu_custom_call.1} parent=11 // pred_fallthru
          _
        // Predicated region
        $region109: #{tpu_custom_call.1} parent=11 // pred_check
          %p1298 = pneg %p664
        $region110: #{tpu_custom_call.1} parent=11 // pred_check_branch
          %1300 = sbr.rel (%p1298) target = $region112
        $region111: #{tpu_custom_call.1} parent=11 // pred_region
          %s1302 = ssub.s32 2048, 2048
          %1303 = vsyncadd [#allocation27], %s1302
          %s1304 = sshll.u32 [#allocation28], 4
          %s1305 = int_to_ptr.vmem [resolvable:$true] %s1304
          %1310 = dma.hbm_to_vmem [thread:$0]  %s51, 2048, %s1305, [#allocation27], 128, 128, 8
        $region112: #{tpu_custom_call.1} parent=11 // pred_fallthru
          _
        // Predicated region
        $region113: #{tpu_custom_call.1} parent=11 // pred_check
          %p1311 = pneg %p685
        $region114: #{tpu_custom_call.1} parent=11 // pred_check_branch
          %1313 = sbr.rel (%p1311) target = $region116
        $region115: #{tpu_custom_call.1} parent=11 // pred_region
          _
        $region116: #{tpu_custom_call.1} parent=11 // pred_fallthru
          _
        // Predicated region
        $region117: #{tpu_custom_call.1} parent=11 // pred_check
          %p1314 = pneg %p706
        $region118: #{tpu_custom_call.1} parent=11 // pred_check_branch
          %1316 = sbr.rel (%p1314) target = $region120
        $region119: #{tpu_custom_call.1} parent=11 // pred_region
          %s1318 = ssub.s32 2048, 2048
          %1319 = vsyncadd [#allocation30], %s1318
          %s1320 = sshll.u32 [#allocation29], 4
          %s1321 = int_to_ptr.vmem [resolvable:$true] %s1320
          %1326 = dma.hbm_to_vmem [thread:$0]  %s55, 2048, %s1321, [#allocation30], 128, 128, 8
        $region120: #{tpu_custom_call.1} parent=11 // pred_fallthru
          _
        // Predicated region
        $region121: #{tpu_custom_call.1} parent=11 // pred_check
          %p1327 = pneg %p727
        $region122: #{tpu_custom_call.1} parent=11 // pred_check_branch
          %1329 = sbr.rel (%p1327) target = $region124
        $region123: #{tpu_custom_call.1} parent=11 // pred_region
          _
        $region124: #{tpu_custom_call.1} parent=11 // pred_fallthru
          _
        // Predicated region
        $region125: #{tpu_custom_call.1} parent=11 // pred_check
          %p1330 = pneg %p748
        $region126: #{tpu_custom_call.1} parent=11 // pred_check_branch
          %1332 = sbr.rel (%p1330) target = $region128
        $region127: #{tpu_custom_call.1} parent=11 // pred_region
          %s1334 = ssub.s32 2048, 2048
          %1335 = vsyncadd [#allocation30], %s1334
          %s1336 = sshll.u32 [#allocation31], 4
          %s1337 = int_to_ptr.vmem [resolvable:$true] %s1336
          %1342 = dma.hbm_to_vmem [thread:$0]  %s59, 2048, %s1337, [#allocation30], 128, 128, 8
        $region128: #{tpu_custom_call.1} parent=11 // pred_fallthru
          _
        // Predicated region
        $region129: #{tpu_custom_call.1} parent=11 // pred_check
          %p1343 = pneg %p769
        $region130: #{tpu_custom_call.1} parent=11 // pred_check_branch
          %1345 = sbr.rel (%p1343) target = $region132
        $region131: #{tpu_custom_call.1} parent=11 // pred_region
          _
        $region132: #{tpu_custom_call.1} parent=11 // pred_fallthru
          _
        // Predicated region
        $region133: #{tpu_custom_call.1} parent=11 // pred_check
          %p1346 = pneg %p790
        $region134: #{tpu_custom_call.1} parent=11 // pred_check_branch
          %1348 = sbr.rel (%p1346) target = $region136
        $region135: #{tpu_custom_call.1} parent=11 // pred_region
          %s1350 = ssub.s32 2048, 2048
          %1351 = vsyncadd [#allocation33], %s1350
          %s1352 = sshll.u32 [#allocation32], 4
          %s1353 = int_to_ptr.vmem [resolvable:$true] %s1352
          %1358 = dma.hbm_to_vmem [thread:$0]  %s63, 2048, %s1353, [#allocation33], 128, 128, 8
        $region136: #{tpu_custom_call.1} parent=11 // pred_fallthru
          _
        // Predicated region
        $region137: #{tpu_custom_call.1} parent=11 // pred_check
          %p1359 = pneg %p811
        $region138: #{tpu_custom_call.1} parent=11 // pred_check_branch
          %1361 = sbr.rel (%p1359) target = $region140
        $region139: #{tpu_custom_call.1} parent=11 // pred_region
          _
        $region140: #{tpu_custom_call.1} parent=11 // pred_fallthru
          _
        // Predicated region
        $region141: #{tpu_custom_call.1} parent=11 // pred_check
          %p1362 = pneg %p832
        $region142: #{tpu_custom_call.1} parent=11 // pred_check_branch
          %1364 = sbr.rel (%p1362) target = $region144
        $region143: #{tpu_custom_call.1} parent=11 // pred_region
          %s1366 = ssub.s32 2048, 2048
          %1367 = vsyncadd [#allocation33], %s1366
          %s1368 = sshll.u32 [#allocation34], 4
          %s1369 = int_to_ptr.vmem [resolvable:$true] %s1368
          %1374 = dma.hbm_to_vmem [thread:$0]  %s67, 2048, %s1369, [#allocation33], 128, 128, 8
        $region144: #{tpu_custom_call.1} parent=11 // pred_fallthru
          _
        // Predicated region
        $region145: #{tpu_custom_call.1} parent=11 // pred_check
          %p1375 = pneg %p853
        $region146: #{tpu_custom_call.1} parent=11 // pred_check_branch
          %1377 = sbr.rel (%p1375) target = $region148
        $region147: #{tpu_custom_call.1} parent=11 // pred_region
          _
        $region148: #{tpu_custom_call.1} parent=11 // pred_fallthru
          _
        // Predicated region
        $region149: #{tpu_custom_call.1} parent=11 // pred_check
          %p1378 = pneg %p874
        $region150: #{tpu_custom_call.1} parent=11 // pred_check_branch
          %1380 = sbr.rel (%p1378) target = $region152
        $region151: #{tpu_custom_call.1} parent=11 // pred_region
          _
        $region152: #{tpu_custom_call.1} parent=11 // pred_fallthru
          _
        // Predicated region
        $region153: #{tpu_custom_call.1} parent=11 // pred_check
          %p1381 = pneg %p895
        $region154: #{tpu_custom_call.1} parent=11 // pred_check_branch
          %1383 = sbr.rel (%p1381) target = $region156
        $region155: #{tpu_custom_call.1} parent=11 // pred_region
          _
        $region156: #{tpu_custom_call.1} parent=11 // pred_fallthru
          _
        // Predicated region
        $region157: #{tpu_custom_call.1} parent=11 // pred_check
          %p1384 = pneg %p916
        $region158: #{tpu_custom_call.1} parent=11 // pred_check_branch
          %1386 = sbr.rel (%p1384) target = $region160
        $region159: #{tpu_custom_call.1} parent=11 // pred_region
          _
        $region160: #{tpu_custom_call.1} parent=11 // pred_fallthru
          _
        // Predicated region
        $region161: #{tpu_custom_call.1} parent=11 // pred_check
          %p1387 = pneg %p937
        $region162: #{tpu_custom_call.1} parent=11 // pred_check_branch
          %1389 = sbr.rel (%p1387) target = $region164
        $region163: #{tpu_custom_call.1} parent=11 // pred_region
          _
        $region164: #{tpu_custom_call.1} parent=11 // pred_fallthru
          _
        // Predicated region
        $region165: #{tpu_custom_call.1} parent=11 // pred_check
          %p1390 = pneg %p958
        $region166: #{tpu_custom_call.1} parent=11 // pred_check_branch
          %1392 = sbr.rel (%p1390) target = $region168
        $region167: #{tpu_custom_call.1} parent=11 // pred_region
          _
        $region168: #{tpu_custom_call.1} parent=11 // pred_fallthru
          _
        // Predicated region
        $region169: #{tpu_custom_call.1} parent=11 // pred_check
          %p1393 = pneg %p979
        $region170: #{tpu_custom_call.1} parent=11 // pred_check_branch
          %1395 = sbr.rel (%p1393) target = $region172
        $region171: #{tpu_custom_call.1} parent=11 // pred_region
          _
        $region172: #{tpu_custom_call.1} parent=11 // pred_fallthru
          _
        // Predicated region
        $region173: #{tpu_custom_call.1} parent=11 // pred_check
          %p1396 = pneg %p1000
        $region174: #{tpu_custom_call.1} parent=11 // pred_check_branch
          %1398 = sbr.rel (%p1396) target = $region176
        $region175: #{tpu_custom_call.1} parent=11 // pred_region
          _
        $region176: #{tpu_custom_call.1} parent=11 // pred_fallthru
          _
        // Predicated region
        $region177: #{tpu_custom_call.1} parent=11 // pred_check
          %p1399 = pneg %p1021
        $region178: #{tpu_custom_call.1} parent=11 // pred_check_branch
          %1401 = sbr.rel (%p1399) target = $region180
        $region179: #{tpu_custom_call.1} parent=11 // pred_region
          _
        $region180: #{tpu_custom_call.1} parent=11 // pred_fallthru
          _
        // Predicated region
        $region181: #{tpu_custom_call.1} parent=11 // pred_check
          %p1402 = pneg %p1042
        $region182: #{tpu_custom_call.1} parent=11 // pred_check_branch
          %1404 = sbr.rel (%p1402) target = $region184
        $region183: #{tpu_custom_call.1} parent=11 // pred_region
          _
        $region184: #{tpu_custom_call.1} parent=11 // pred_fallthru
          _
        // Predicated region
        $region185: #{tpu_custom_call.1} parent=11 // pred_check
          %p1405 = pneg %p1063
        $region186: #{tpu_custom_call.1} parent=11 // pred_check_branch
          %1407 = sbr.rel (%p1405) target = $region188
        $region187: #{tpu_custom_call.1} parent=11 // pred_region
          _
        $region188: #{tpu_custom_call.1} parent=11 // pred_fallthru
          _
      $region12: #{tpu_custom_call.1} parent=5 // pred_fallthru
        _
      %p1408 = scmp.lt.s32.totalorder %s113, 2
      // Predicated region
      $region189: #{tpu_custom_call.1} parent=5 // pred_check
        %p1409 = pneg %p1408
      $region190: #{tpu_custom_call.1} parent=5 // pred_check_branch
        %1411 = sbr.rel (%p1409) target = $region192
      $region191: #{tpu_custom_call.1} parent=5 // pred_region
        // Predicated region
        $region193: #{tpu_custom_call.1} parent=191 // pred_check
          %p1412 = pneg %p133
        $region194: #{tpu_custom_call.1} parent=191 // pred_check_branch
          %1414 = sbr.rel (%p1412) target = $region196
        $region195: #{tpu_custom_call.1} parent=191 // pred_region
          %s1415 = sand.u32 %s123, 1
          %s1416 = scalar_lea.sflag [#allocation3], %s1415
          %s1417 = sand.u32 %s123, 1
          %s1418 = scalar_lea.vmem [#allocation2], %s1417
          %s1420 = ssub.s32 16, 16
          %1421 = vsyncadd %s1416, %s1420
          %s1422 = smul.addr %s113, 16
          %s1423 = scalar_lea.hbm %s1, %s1422
          %s1425 = sshll.u32 %s1418, 4
          %s1426 = int_to_ptr.vmem [resolvable:$true] %s1425
          %1428 = dma.hbm_to_vmem [thread:$0]  %s1423, 16, %s1426, %s1416
        $region196: #{tpu_custom_call.1} parent=191 // pred_fallthru
          _
      $region192: #{tpu_custom_call.1} parent=5 // pred_fallthru
        _
      %p1429 = scmp.le.s32.totalorder 1, %s113
      %p1430 = scmp.lt.s32.totalorder %s113, 3
      %p1431 = pnand %p1429, %p1430
      %p1432 = pneg %p1431
      // Predicated region
      $region197: #{tpu_custom_call.1} parent=5 // pred_check
        _
      $region198: #{tpu_custom_call.1} parent=5 // pred_check_branch
        %1434 = sbr.rel (%p1431) target = $region200
      $region199: #{tpu_custom_call.1} parent=5 // pred_region
        %s1435 = ssub.s32 %s113, 1
        %s1436 = sand.u32 %s126, 1
        %s1437 = scalar_lea.sflag [#allocation3], %s1436
        %s1438 = sand.u32 %s126, 1
        %s1439 = scalar_lea.vmem [#allocation2], %s1438
        // Predicated region
        $region201: #{tpu_custom_call.1} parent=199 // pred_check
          %p1440 = pneg %p139
        $region202: #{tpu_custom_call.1} parent=199 // pred_check_branch
          %1442 = sbr.rel (%p1440) target = $region204
        $region203: #{tpu_custom_call.1} parent=199 // pred_region
          %1443 = dma.done %s1437, 16
        $region204: #{tpu_custom_call.1} parent=199 // pred_fallthru
          _
        // Predicated region
        $region205: #{tpu_custom_call.1} parent=199 // pred_check
          %p1444 = pneg %p160
        $region206: #{tpu_custom_call.1} parent=199 // pred_check_branch
          %1446 = sbr.rel (%p1444) target = $region208
        $region207: #{tpu_custom_call.1} parent=199 // pred_region
          %1447 = dma.done [#allocation6], 512
        $region208: #{tpu_custom_call.1} parent=199 // pred_fallthru
          _
        // Predicated region
        $region209: #{tpu_custom_call.1} parent=199 // pred_check
          %p1448 = pneg %p181
        $region210: #{tpu_custom_call.1} parent=199 // pred_check_branch
          %1450 = sbr.rel (%p1448) target = $region212
        $region211: #{tpu_custom_call.1} parent=199 // pred_region
          %1451 = dma.done [#allocation6], 16
        $region212: #{tpu_custom_call.1} parent=199 // pred_fallthru
          _
        // Predicated region
        $region213: #{tpu_custom_call.1} parent=199 // pred_check
          %p1452 = pneg %p307
        $region214: #{tpu_custom_call.1} parent=199 // pred_check_branch
          %1454 = sbr.rel (%p1452) target = $region216
        $region215: #{tpu_custom_call.1} parent=199 // pred_region
          %1455 = dma.done [#allocation9], 32
        $region216: #{tpu_custom_call.1} parent=199 // pred_fallthru
          _
        // Predicated region
        $region217: #{tpu_custom_call.1} parent=199 // pred_check
          %p1456 = pneg %p349
        $region218: #{tpu_custom_call.1} parent=199 // pred_check_branch
          %1458 = sbr.rel (%p1456) target = $region220
        $region219: #{tpu_custom_call.1} parent=199 // pred_region
          %1459 = dma.done [#allocation9], 32
        $region220: #{tpu_custom_call.1} parent=199 // pred_fallthru
          _
        // Predicated region
        $region221: #{tpu_custom_call.1} parent=199 // pred_check
          %p1460 = pneg %p391
        $region222: #{tpu_custom_call.1} parent=199 // pred_check_branch
          %1462 = sbr.rel (%p1460) target = $region224
        $region223: #{tpu_custom_call.1} parent=199 // pred_region
          %1463 = dma.done [#allocation12], 32
        $region224: #{tpu_custom_call.1} parent=199 // pred_fallthru
          _
        // Predicated region
        $region225: #{tpu_custom_call.1} parent=199 // pred_check
          %p1464 = pneg %p433
        $region226: #{tpu_custom_call.1} parent=199 // pred_check_branch
          %1466 = sbr.rel (%p1464) target = $region228
        $region227: #{tpu_custom_call.1} parent=199 // pred_region
          %1467 = dma.done [#allocation12], 32
        $region228: #{tpu_custom_call.1} parent=199 // pred_fallthru
          _
        // Predicated region
        $region229: #{tpu_custom_call.1} parent=199 // pred_check
          %p1468 = pneg %p454
        $region230: #{tpu_custom_call.1} parent=199 // pred_check_branch
          %1470 = sbr.rel (%p1468) target = $region232
        $region231: #{tpu_custom_call.1} parent=199 // pred_region
          %1471 = dma.done [#allocation15], 32
        $region232: #{tpu_custom_call.1} parent=199 // pred_fallthru
          _
        // Predicated region
        $region233: #{tpu_custom_call.1} parent=199 // pred_check
          %p1472 = pneg %p475
        $region234: #{tpu_custom_call.1} parent=199 // pred_check_branch
          %1474 = sbr.rel (%p1472) target = $region236
        $region235: #{tpu_custom_call.1} parent=199 // pred_region
          %1475 = dma.done [#allocation15], 32
        $region236: #{tpu_custom_call.1} parent=199 // pred_fallthru
          _
        // Predicated region
        $region237: #{tpu_custom_call.1} parent=199 // pred_check
          %p1476 = pneg %p496
        $region238: #{tpu_custom_call.1} parent=199 // pred_check_branch
          %1478 = sbr.rel (%p1476) target = $region240
        $region239: #{tpu_custom_call.1} parent=199 // pred_region
          %1479 = dma.done [#allocation18], 32
        $region240: #{tpu_custom_call.1} parent=199 // pred_fallthru
          _
        // Predicated region
        $region241: #{tpu_custom_call.1} parent=199 // pred_check
          %p1480 = pneg %p517
        $region242: #{tpu_custom_call.1} parent=199 // pred_check_branch
          %1482 = sbr.rel (%p1480) target = $region244
        $region243: #{tpu_custom_call.1} parent=199 // pred_region
          %1483 = dma.done [#allocation18], 32
        $region244: #{tpu_custom_call.1} parent=199 // pred_fallthru
          _
        // Predicated region
        $region245: #{tpu_custom_call.1} parent=199 // pred_check
          %p1484 = pneg %p538
        $region246: #{tpu_custom_call.1} parent=199 // pred_check_branch
          %1486 = sbr.rel (%p1484) target = $region248
        $region247: #{tpu_custom_call.1} parent=199 // pred_region
          %1487 = dma.done [#allocation21], 32
        $region248: #{tpu_custom_call.1} parent=199 // pred_fallthru
          _
        // Predicated region
        $region249: #{tpu_custom_call.1} parent=199 // pred_check
          %p1488 = pneg %p559
        $region250: #{tpu_custom_call.1} parent=199 // pred_check_branch
          %1490 = sbr.rel (%p1488) target = $region252
        $region251: #{tpu_custom_call.1} parent=199 // pred_region
          %1491 = dma.done [#allocation21], 32
        $region252: #{tpu_custom_call.1} parent=199 // pred_fallthru
          _
        // Predicated region
        $region253: #{tpu_custom_call.1} parent=199 // pred_check
          %p1492 = pneg %p580
        $region254: #{tpu_custom_call.1} parent=199 // pred_check_branch
          %1494 = sbr.rel (%p1492) target = $region256
        $region255: #{tpu_custom_call.1} parent=199 // pred_region
          %1495 = dma.done [#allocation24], 16
        $region256: #{tpu_custom_call.1} parent=199 // pred_fallthru
          _
        // Predicated region
        $region257: #{tpu_custom_call.1} parent=199 // pred_check
          %p1496 = pneg %p601
        $region258: #{tpu_custom_call.1} parent=199 // pred_check_branch
          %1498 = sbr.rel (%p1496) target = $region260
        $region259: #{tpu_custom_call.1} parent=199 // pred_region
          %1499 = dma.done [#allocation24], 16
        $region260: #{tpu_custom_call.1} parent=199 // pred_fallthru
          _
        // Predicated region
        $region261: #{tpu_custom_call.1} parent=199 // pred_check
          %p1500 = pneg %p643
        $region262: #{tpu_custom_call.1} parent=199 // pred_check_branch
          %1502 = sbr.rel (%p1500) target = $region264
        $region263: #{tpu_custom_call.1} parent=199 // pred_region
          %1503 = dma.done [#allocation27], 16
        $region264: #{tpu_custom_call.1} parent=199 // pred_fallthru
          _
        // Predicated region
        $region265: #{tpu_custom_call.1} parent=199 // pred_check
          %p1504 = pneg %p664
        $region266: #{tpu_custom_call.1} parent=199 // pred_check_branch
          %1506 = sbr.rel (%p1504) target = $region268
        $region267: #{tpu_custom_call.1} parent=199 // pred_region
          %1507 = dma.done [#allocation27], 2048
        $region268: #{tpu_custom_call.1} parent=199 // pred_fallthru
          _
        // Predicated region
        $region269: #{tpu_custom_call.1} parent=199 // pred_check
          %p1508 = pneg %p706
        $region270: #{tpu_custom_call.1} parent=199 // pred_check_branch
          %1510 = sbr.rel (%p1508) target = $region272
        $region271: #{tpu_custom_call.1} parent=199 // pred_region
          %1511 = dma.done [#allocation30], 2048
        $region272: #{tpu_custom_call.1} parent=199 // pred_fallthru
          _
        // Predicated region
        $region273: #{tpu_custom_call.1} parent=199 // pred_check
          %p1512 = pneg %p748
        $region274: #{tpu_custom_call.1} parent=199 // pred_check_branch
          %1514 = sbr.rel (%p1512) target = $region276
        $region275: #{tpu_custom_call.1} parent=199 // pred_region
          %1515 = dma.done [#allocation30], 2048
        $region276: #{tpu_custom_call.1} parent=199 // pred_fallthru
          _
        // Predicated region
        $region277: #{tpu_custom_call.1} parent=199 // pred_check
          %p1516 = pneg %p790
        $region278: #{tpu_custom_call.1} parent=199 // pred_check_branch
          %1518 = sbr.rel (%p1516) target = $region280
        $region279: #{tpu_custom_call.1} parent=199 // pred_region
          %1519 = dma.done [#allocation33], 2048
        $region280: #{tpu_custom_call.1} parent=199 // pred_fallthru
          _
        // Predicated region
        $region281: #{tpu_custom_call.1} parent=199 // pred_check
          %p1520 = pneg %p832
        $region282: #{tpu_custom_call.1} parent=199 // pred_check_branch
          %1522 = sbr.rel (%p1520) target = $region284
        $region283: #{tpu_custom_call.1} parent=199 // pred_region
          %1523 = dma.done [#allocation33], 2048
        $region284: #{tpu_custom_call.1} parent=199 // pred_fallthru
          _
        %s1524 = sand.u32 %s126, 1
        %s1525 = scalar_lea.sflag [#allocation3], %s1524
        %s1526 = sand.u32 %s126, 1
        %s1527 = scalar_lea.vmem [#allocation2], %s1526
        %p1528 = pneg %p139
        %p1529 = pneg %p136
        %p1530 = pneg %p160
        %p1531 = pneg %p157
        %p1532 = pneg %p181
        %p1533 = pneg %p178
        %p1534 = pneg %p202
        %p1535 = pneg %p199
        %p1536 = pneg %p223
        %p1537 = pneg %p220
        %p1538 = pneg %p244
        %p1539 = pneg %p241
        %p1540 = pneg %p265
        %p1541 = pneg %p262
        %p1542 = pneg %p286
        %p1543 = pneg %p283
        %p1544 = pneg %p307
        %p1545 = pneg %p304
        %p1546 = pneg %p328
        %p1547 = pneg %p325
        %p1548 = pneg %p349
        %p1549 = pneg %p346
        %p1550 = pneg %p370
        %p1551 = pneg %p367
        %p1552 = pneg %p391
        %p1553 = pneg %p388
        %p1554 = pneg %p412
        %p1555 = pneg %p409
        %p1556 = pneg %p433
        %p1557 = pneg %p430
        %p1558 = pneg %p454
        %p1559 = pneg %p451
        %p1560 = pneg %p475
        %p1561 = pneg %p472
        %p1562 = pneg %p496
        %p1563 = pneg %p493
        %p1564 = pneg %p517
        %p1565 = pneg %p514
        %p1566 = pneg %p538
        %p1567 = pneg %p535
        %p1568 = pneg %p559
        %p1569 = pneg %p556
        %p1570 = pneg %p580
        %p1571 = pneg %p577
        %p1572 = pneg %p601
        %p1573 = pneg %p598
        %p1574 = pneg %p622
        %p1575 = pneg %p619
        %p1576 = pneg %p643
        %p1577 = pneg %p640
        %p1578 = pneg %p664
        %p1579 = pneg %p661
        %p1580 = pneg %p685
        %p1581 = pneg %p682
        %p1582 = pneg %p706
        %p1583 = pneg %p703
        %p1584 = pneg %p727
        %p1585 = pneg %p724
        %p1586 = pneg %p748
        %p1587 = pneg %p745
        %p1588 = pneg %p769
        %p1589 = pneg %p766
        %p1590 = pneg %p790
        %p1591 = pneg %p787
        %p1592 = pneg %p811
        %p1593 = pneg %p808
        %p1594 = pneg %p832
        %p1595 = pneg %p829
        %p1596 = pneg %p853
        %p1597 = pneg %p850
        %p1598 = pneg %p874
        %p1599 = pneg %p871
        %p1600 = pneg %p895
        %p1601 = pneg %p892
        %p1602 = pneg %p916
        %p1603 = pneg %p913
        %p1604 = pneg %p937
        %p1605 = pneg %p934
        %p1606 = pneg %p958
        %p1607 = pneg %p955
        %p1608 = pneg %p979
        %p1609 = pneg %p976
        %p1610 = pneg %p1000
        %p1611 = pneg %p997
        %p1612 = pneg %p1021
        %p1613 = pneg %p1018
        %p1614 = pneg %p1042
        %p1615 = pneg %p1039
        %p1616 = pneg %p1063
        %p1617 = pneg %p1060
        %p1618 = pneg %p1089
        %p1619 = pneg %p1086
        %s1620 = sand.u32 %s1076, 1
        %s1621 = scalar_lea.sflag [#allocation4], %s1620
        %s1622 = sand.u32 %s1076, 1
        %s1623 = smul.addr %s1622, 16
        %s1624 = scalar_lea.vmem [#allocation35], %s1623
        %s1625 = smul.u32 2, %s118
        %v1626 = vld [vmem:[%s1439] sm:$0x1]
        %v1627 = vld [vmem:[#allocation5] sm:$0xff]
        %v1628 = vld [vmem:[#allocation5 + $0x8] sm:$0xff]
        %v1629 = vld [vmem:[#allocation5 + $0x10] sm:$0xff]
        %v1630 = vld [vmem:[#allocation5 + $0x18] sm:$0xff]
        %v1631 = vld [vmem:[#allocation7] sm:$0x1]
        %vm1632 = vcmask 261120
        %v1634 = vsel %vm1632, %v1626, 0
        %1636 = vmatprep.subr.mxu0 0.0
        %1637 = vmatpush1.msra.mxu0 %v1627
        %1638 = vmatprep.subr.mxu0 0.0
        %1639 = vmatpush1.msra.mxu0 %v1628
        %1640 = vmatprep.subr.mxu0 0.0
        %1641 = vmatpush1.msra.mxu0 %v1629
        %1642 = vmatprep.subr.mxu0 0.0
        %1643 = vmatpush1.msra.mxu0 %v1630
        %1644 = vmatprep.subr.mxu0 0.0
        %1645 = vmatpush1.msra.mxu0 0.0
        %1646 = vmatprep.subr.mxu0 0.0
        %1647 = vmatpush1.msra.mxu0 0.0
        %1648 = vmatprep.subr.mxu0 0.0
        %1649 = vmatpush1.msra.mxu0 0.0
        %1650 = vmatprep.subr.mxu0 0.0
        %1651 = vmatpush1.msra.mxu0 0.0
        %1652 = vmatprep.subr.mxu0 0.0
        %1653 = vmatpush1.msra.mxu0 0.0
        %1654 = vmatprep.subr.mxu0 0.0
        %1655 = vmatpush1.msra.mxu0 0.0
        %1656 = vmatprep.subr.mxu0 0.0
        %1657 = vmatpush1.msra.mxu0 0.0
        %1658 = vmatprep.subr.mxu0 0.0
        %1659 = vmatpush1.msra.mxu0 0.0
        %1660 = vmatprep.subr.mxu0 0.0
        %1661 = vmatpush1.msra.mxu0 0.0
        %1662 = vmatprep.subr.mxu0 0.0
        %1663 = vmatpush1.msra.mxu0 0.0
        %1664 = vmatprep.subr.mxu0 0.0
        %1665 = vmatpush1.msra.mxu0 0.0
        %1666 = vmatprep.subr.mxu0 0.0
        %1667 = vmatpush1.msra.mxu0 0.0
        %1668 = vmatprep.subr.mxu0 0.0
        %1669 = vmatpush1.msra.mxu0 0.0
        %1670 = vmatprep.subr.mxu0 0.0
        %1671 = vmatpush1.msra.mxu0 0.0
        %1672 = vmatprep.subr.mxu0 0.0
        %1673 = vmatpush1.msra.mxu0 0.0
        %1674 = vmatprep.subr.mxu0 0.0
        %1675 = vmatpush1.msra.mxu0 0.0
        %1676 = vmatprep.subr.mxu0 0.0
        %1677 = vmatpush1.msra.mxu0 0.0
        %1678 = vmatprep.subr.mxu0 0.0
        %1679 = vmatpush1.msra.mxu0 0.0
        %1680 = vmatprep.subr.mxu0 0.0
        %1681 = vmatpush1.msra.mxu0 0.0
        %1682 = vmatprep.subr.mxu0 0.0
        %1683 = vmatpush1.msra.mxu0 0.0
        %1684 = vmatprep.subr.mxu0 0.0
        %1685 = vmatpush1.msra.mxu0 0.0
        %1686 = vmatprep.subr.mxu0 0.0
        %1687 = vmatpush1.msra.mxu0 0.0
        %1688 = vmatprep.subr.mxu0 0.0
        %1689 = vmatpush1.msra.mxu0 0.0
        %1690 = vmatprep.subr.mxu0 0.0
        %1691 = vmatpush1.msra.mxu0 0.0
        %1692 = vmatprep.subr.mxu0 0.0
        %1693 = vmatpush1.msra.mxu0 0.0
        %1694 = vmatprep.subr.mxu0 0.0
        %1695 = vmatpush1.msra.mxu0 0.0
        %1696 = vmatprep.subr.mxu0 0.0
        %1697 = vmatpush1.msra.mxu0 0.0
        %1698 = vmatprep.subr.mxu0 0.0
        %1699 = vmatpush1.msra.mxu0 0.0
        %1700 = vmatprep.mubr.f32.mxu0 0.0
        %1701 = vmatmul.mubr.f32.gmra.mrb[0].mxu0 %v1634
        %v1702 = vpop.f32.mrb[0].mxu0
        %v1703 = vadd.f32 %v1631, %v1702
        %v1704 = vpop.f32.mrb[0].mxu0
        %1705 = vdwg.mxu0
        %v1706 = vld [vmem:[%s9] sm:$0x1]
        %v1707 = vld [vmem:[%s11] sm:$0xff]
        %v1708 = vld [vmem:[%s11 + $0x8] sm:$0xff]
        %v1709 = vld [vmem:[%s11 + $0x10] sm:$0xff]
        %v1710 = vld [vmem:[%s11 + $0x18] sm:$0xff]
        %v1711 = vld [vmem:[%s11 + $0x20] sm:$0xff]
        %v1712 = vld [vmem:[%s11 + $0x28] sm:$0xff]
        %v1713 = vld [vmem:[%s11 + $0x30] sm:$0xff]
        %v1714 = vld [vmem:[%s11 + $0x38] sm:$0xff]
        %v1715 = vld [vmem:[%s13] sm:$0x1]
        %vm1716 = vcmask 523264
        %v1718 = vsel %vm1716, %v1706, 0
        %1720 = vmatprep.subr.mxu0 0.0
        %1721 = vmatpush1.msra.mxu0 %v1707
        %1722 = vmatprep.subr.mxu0 0.0
        %1723 = vmatpush1.msra.mxu0 %v1708
        %1724 = vmatprep.subr.mxu0 0.0
        %1725 = vmatpush1.msra.mxu0 %v1709
        %1726 = vmatprep.subr.mxu0 0.0
        %1727 = vmatpush1.msra.mxu0 %v1710
        %1728 = vmatprep.subr.mxu0 0.0
        %1729 = vmatpush1.msra.mxu0 %v1711
        %1730 = vmatprep.subr.mxu0 0.0
        %1731 = vmatpush1.msra.mxu0 %v1712
        %1732 = vmatprep.subr.mxu0 0.0
        %1733 = vmatpush1.msra.mxu0 %v1713
        %1734 = vmatprep.subr.mxu0 0.0
        %1735 = vmatpush1.msra.mxu0 %v1714
        %1736 = vmatprep.subr.mxu0 0.0
        %1737 = vmatpush1.msra.mxu0 0.0
        %1738 = vmatprep.subr.mxu0 0.0
        %1739 = vmatpush1.msra.mxu0 0.0
        %1740 = vmatprep.subr.mxu0 0.0
        %1741 = vmatpush1.msra.mxu0 0.0
        %1742 = vmatprep.subr.mxu0 0.0
        %1743 = vmatpush1.msra.mxu0 0.0
        %1744 = vmatprep.subr.mxu0 0.0
        %1745 = vmatpush1.msra.mxu0 0.0
        %1746 = vmatprep.subr.mxu0 0.0
        %1747 = vmatpush1.msra.mxu0 0.0
        %1748 = vmatprep.subr.mxu0 0.0
        %1749 = vmatpush1.msra.mxu0 0.0
        %1750 = vmatprep.subr.mxu0 0.0
        %1751 = vmatpush1.msra.mxu0 0.0
        %1752 = vmatprep.subr.mxu0 0.0
        %1753 = vmatpush1.msra.mxu0 0.0
        %1754 = vmatprep.subr.mxu0 0.0
        %1755 = vmatpush1.msra.mxu0 0.0
        %1756 = vmatprep.subr.mxu0 0.0
        %1757 = vmatpush1.msra.mxu0 0.0
        %1758 = vmatprep.subr.mxu0 0.0
        %1759 = vmatpush1.msra.mxu0 0.0
        %1760 = vmatprep.subr.mxu0 0.0
        %1761 = vmatpush1.msra.mxu0 0.0
        %1762 = vmatprep.subr.mxu0 0.0
        %1763 = vmatpush1.msra.mxu0 0.0
        %1764 = vmatprep.subr.mxu0 0.0
        %1765 = vmatpush1.msra.mxu0 0.0
        %1766 = vmatprep.subr.mxu0 0.0
        %1767 = vmatpush1.msra.mxu0 0.0
        %1768 = vmatprep.subr.mxu0 0.0
        %1769 = vmatpush1.msra.mxu0 0.0
        %1770 = vmatprep.subr.mxu0 0.0
        %1771 = vmatpush1.msra.mxu0 0.0
        %1772 = vmatprep.subr.mxu0 0.0
        %1773 = vmatpush1.msra.mxu0 0.0
        %1774 = vmatprep.subr.mxu0 0.0
        %1775 = vmatpush1.msra.mxu0 0.0
        %1776 = vmatprep.subr.mxu0 0.0
        %1777 = vmatpush1.msra.mxu0 0.0
        %1778 = vmatprep.subr.mxu0 0.0
        %1779 = vmatpush1.msra.mxu0 0.0
        %1780 = vmatprep.subr.mxu0 0.0
        %1781 = vmatpush1.msra.mxu0 0.0
        %1782 = vmatprep.subr.mxu0 0.0
        %1783 = vmatpush1.msra.mxu0 0.0
        %1784 = vmatprep.mubr.f32.mxu0 0.0
        %1785 = vmatmul.mubr.f32.gmra.mrb[0].mxu0 %v1718
        %v1786 = vpop.f32.mrb[0].mxu0
        %v1787 = vadd.f32 %v1715, %v1786
        %v1788 = vpop.f32.mrb[0].mxu0
        %1789 = vdwg.mxu0
        %v1790 = vld [vmem:[#allocation14] sm:$0x1]
        %v1791 = vld [vmem:[#allocation16] sm:$0x1]
        %vm1792 = vcmask 516096
        %v1793 = vsel %vm1792, %v1787, 0.0
        %1794 = vadd.xlane.f32.xlu0 %v1793
        %v1795 = vpop.xlane.xlu0 %1794
        %v1796 = vrcp.pop 64.0
        %v1797 = vmul.f32 %v1795, %v1796
        %v1798 = vsub.f32 %v1787, %v1797
        %v1799 = vmul.f32 %v1798, %v1798
        %v1800 = vsel %vm1792, %v1799, 0.0
        %1801 = vadd.xlane.f32.xlu0 %v1800
        %v1802 = vpop.xlane.xlu0 %1801
        %v1803 = vmul.f32 %v1802, %v1796
        %v1804 = vadd.f32 %v1803, 1e-05
        %v1805 = vrsqrt.pop %v1804
        %v1806 = vmul.f32 %v1798, %v1805
        %v1807 = vmul.f32 %v1806, %v1790
        %v1808 = vadd.f32 %v1807, %v1791
        %v1809 = vld [vmem:[%s15] sm:$0xff]
        %v1810 = vld [vmem:[%s15 + $0x8] sm:$0xff]
        %v1811 = vld [vmem:[%s15 + $0x10] sm:$0xff]
        %v1812 = vld [vmem:[%s15 + $0x18] sm:$0xff]
        %v1813 = vld [vmem:[%s15 + $0x20] sm:$0xff]
        %v1814 = vld [vmem:[%s15 + $0x28] sm:$0xff]
        %v1815 = vld [vmem:[%s15 + $0x30] sm:$0xff]
        %v1816 = vld [vmem:[%s15 + $0x38] sm:$0xff]
        %v1817 = vld [vmem:[#allocation8] sm:$0x1]
        %v1819 = vsel %vm1716, %v1703, 0
        %1821 = vmatprep.subr.mxu0 0.0
        %1822 = vmatpush1.msra.mxu0 %v1809
        %1823 = vmatprep.subr.mxu0 0.0
        %1824 = vmatpush1.msra.mxu0 %v1810
        %1825 = vmatprep.subr.mxu0 0.0
        %1826 = vmatpush1.msra.mxu0 %v1811
        %1827 = vmatprep.subr.mxu0 0.0
        %1828 = vmatpush1.msra.mxu0 %v1812
        %1829 = vmatprep.subr.mxu0 0.0
        %1830 = vmatpush1.msra.mxu0 %v1813
        %1831 = vmatprep.subr.mxu0 0.0
        %1832 = vmatpush1.msra.mxu0 %v1814
        %1833 = vmatprep.subr.mxu0 0.0
        %1834 = vmatpush1.msra.mxu0 %v1815
        %1835 = vmatprep.subr.mxu0 0.0
        %1836 = vmatpush1.msra.mxu0 %v1816
        %1837 = vmatprep.subr.mxu0 0.0
        %1838 = vmatpush1.msra.mxu0 0.0
        %1839 = vmatprep.subr.mxu0 0.0
        %1840 = vmatpush1.msra.mxu0 0.0
        %1841 = vmatprep.subr.mxu0 0.0
        %1842 = vmatpush1.msra.mxu0 0.0
        %1843 = vmatprep.subr.mxu0 0.0
        %1844 = vmatpush1.msra.mxu0 0.0
        %1845 = vmatprep.subr.mxu0 0.0
        %1846 = vmatpush1.msra.mxu0 0.0
        %1847 = vmatprep.subr.mxu0 0.0
        %1848 = vmatpush1.msra.mxu0 0.0
        %1849 = vmatprep.subr.mxu0 0.0
        %1850 = vmatpush1.msra.mxu0 0.0
        %1851 = vmatprep.subr.mxu0 0.0
        %1852 = vmatpush1.msra.mxu0 0.0
        %1853 = vmatprep.subr.mxu0 0.0
        %1854 = vmatpush1.msra.mxu0 0.0
        %1855 = vmatprep.subr.mxu0 0.0
        %1856 = vmatpush1.msra.mxu0 0.0
        %1857 = vmatprep.subr.mxu0 0.0
        %1858 = vmatpush1.msra.mxu0 0.0
        %1859 = vmatprep.subr.mxu0 0.0
        %1860 = vmatpush1.msra.mxu0 0.0
        %1861 = vmatprep.subr.mxu0 0.0
        %1862 = vmatpush1.msra.mxu0 0.0
        %1863 = vmatprep.subr.mxu0 0.0
        %1864 = vmatpush1.msra.mxu0 0.0
        %1865 = vmatprep.subr.mxu0 0.0
        %1866 = vmatpush1.msra.mxu0 0.0
        %1867 = vmatprep.subr.mxu0 0.0
        %1868 = vmatpush1.msra.mxu0 0.0
        %1869 = vmatprep.subr.mxu0 0.0
        %1870 = vmatpush1.msra.mxu0 0.0
        %1871 = vmatprep.subr.mxu0 0.0
        %1872 = vmatpush1.msra.mxu0 0.0
        %1873 = vmatprep.subr.mxu0 0.0
        %1874 = vmatpush1.msra.mxu0 0.0
        %1875 = vmatprep.subr.mxu0 0.0
        %1876 = vmatpush1.msra.mxu0 0.0
        %1877 = vmatprep.subr.mxu0 0.0
        %1878 = vmatpush1.msra.mxu0 0.0
        %1879 = vmatprep.subr.mxu0 0.0
        %1880 = vmatpush1.msra.mxu0 0.0
        %1881 = vmatprep.subr.mxu0 0.0
        %1882 = vmatpush1.msra.mxu0 0.0
        %1883 = vmatprep.subr.mxu0 0.0
        %1884 = vmatpush1.msra.mxu0 0.0
        %1885 = vmatprep.mubr.f32.mxu0 0.0
        %1886 = vmatmul.mubr.f32.gmra.mrb[0].mxu0 %v1819
        %v1887 = vpop.f32.mrb[0].mxu0
        %v1888 = vadd.f32 %v1817, %v1887
        %v1889 = vpop.f32.mrb[0].mxu0
        %1890 = vdwg.mxu0
        %v1891 = vld [vmem:[%s19] sm:$0xff]
        %v1892 = vld [vmem:[%s19 + $0x8] sm:$0xff]
        %v1893 = vld [vmem:[%s19 + $0x10] sm:$0xff]
        %v1894 = vld [vmem:[%s19 + $0x18] sm:$0xff]
        %v1895 = vld [vmem:[%s19 + $0x20] sm:$0xff]
        %v1896 = vld [vmem:[%s19 + $0x28] sm:$0xff]
        %v1897 = vld [vmem:[%s19 + $0x30] sm:$0xff]
        %v1898 = vld [vmem:[%s19 + $0x38] sm:$0xff]
        %v1899 = vld [vmem:[#allocation10] sm:$0x1]
        %v1901 = vsel %vm1716, %v1888, 0
        %1903 = vmatprep.subr.mxu0 0.0
        %1904 = vmatpush1.msra.mxu0 %v1891
        %1905 = vmatprep.subr.mxu0 0.0
        %1906 = vmatpush1.msra.mxu0 %v1892
        %1907 = vmatprep.subr.mxu0 0.0
        %1908 = vmatpush1.msra.mxu0 %v1893
        %1909 = vmatprep.subr.mxu0 0.0
        %1910 = vmatpush1.msra.mxu0 %v1894
        %1911 = vmatprep.subr.mxu0 0.0
        %1912 = vmatpush1.msra.mxu0 %v1895
        %1913 = vmatprep.subr.mxu0 0.0
        %1914 = vmatpush1.msra.mxu0 %v1896
        %1915 = vmatprep.subr.mxu0 0.0
        %1916 = vmatpush1.msra.mxu0 %v1897
        %1917 = vmatprep.subr.mxu0 0.0
        %1918 = vmatpush1.msra.mxu0 %v1898
        %1919 = vmatprep.subr.mxu0 0.0
        %1920 = vmatpush1.msra.mxu0 0.0
        %1921 = vmatprep.subr.mxu0 0.0
        %1922 = vmatpush1.msra.mxu0 0.0
        %1923 = vmatprep.subr.mxu0 0.0
        %1924 = vmatpush1.msra.mxu0 0.0
        %1925 = vmatprep.subr.mxu0 0.0
        %1926 = vmatpush1.msra.mxu0 0.0
        %1927 = vmatprep.subr.mxu0 0.0
        %1928 = vmatpush1.msra.mxu0 0.0
        %1929 = vmatprep.subr.mxu0 0.0
        %1930 = vmatpush1.msra.mxu0 0.0
        %1931 = vmatprep.subr.mxu0 0.0
        %1932 = vmatpush1.msra.mxu0 0.0
        %1933 = vmatprep.subr.mxu0 0.0
        %1934 = vmatpush1.msra.mxu0 0.0
        %1935 = vmatprep.subr.mxu0 0.0
        %1936 = vmatpush1.msra.mxu0 0.0
        %1937 = vmatprep.subr.mxu0 0.0
        %1938 = vmatpush1.msra.mxu0 0.0
        %1939 = vmatprep.subr.mxu0 0.0
        %1940 = vmatpush1.msra.mxu0 0.0
        %1941 = vmatprep.subr.mxu0 0.0
        %1942 = vmatpush1.msra.mxu0 0.0
        %1943 = vmatprep.subr.mxu0 0.0
        %1944 = vmatpush1.msra.mxu0 0.0
        %1945 = vmatprep.subr.mxu0 0.0
        %1946 = vmatpush1.msra.mxu0 0.0
        %1947 = vmatprep.subr.mxu0 0.0
        %1948 = vmatpush1.msra.mxu0 0.0
        %1949 = vmatprep.subr.mxu0 0.0
        %1950 = vmatpush1.msra.mxu0 0.0
        %1951 = vmatprep.subr.mxu0 0.0
        %1952 = vmatpush1.msra.mxu0 0.0
        %1953 = vmatprep.subr.mxu0 0.0
        %1954 = vmatpush1.msra.mxu0 0.0
        %1955 = vmatprep.subr.mxu0 0.0
        %1956 = vmatpush1.msra.mxu0 0.0
        %1957 = vmatprep.subr.mxu0 0.0
        %1958 = vmatpush1.msra.mxu0 0.0
        %1959 = vmatprep.subr.mxu0 0.0
        %1960 = vmatpush1.msra.mxu0 0.0
        %1961 = vmatprep.subr.mxu0 0.0
        %1962 = vmatpush1.msra.mxu0 0.0
        %1963 = vmatprep.subr.mxu0 0.0
        %1964 = vmatpush1.msra.mxu0 0.0
        %1965 = vmatprep.subr.mxu0 0.0
        %1966 = vmatpush1.msra.mxu0 0.0
        %1967 = vmatprep.mubr.f32.mxu0 0.0
        %1968 = vmatmul.mubr.f32.gmra.mrb[0].mxu0 %v1901
        %v1969 = vpop.f32.mrb[0].mxu0
        %v1970 = vadd.f32 %v1899, %v1969
        %v1971 = vpop.f32.mrb[0].mxu0
        %1972 = vdwg.mxu0
        %v1973 = vadd.f32 %v1808, %v1970
        %v1974 = vld [vmem:[#allocation17] sm:$0x1]
        %v1975 = vld [vmem:[#allocation19] sm:$0x1]
        %v1976 = vsel %vm1792, %v1973, 0.0
        %1977 = vadd.xlane.f32.xlu0 %v1976
        %v1978 = vpop.xlane.xlu0 %1977
        %v1979 = vmul.f32 %v1978, %v1796
        %v1980 = vsub.f32 %v1973, %v1979
        %v1981 = vmul.f32 %v1980, %v1980
        %v1982 = vsel %vm1792, %v1981, 0.0
        %1983 = vadd.xlane.f32.xlu0 %v1982
        %v1984 = vpop.xlane.xlu0 %1983
        %v1985 = vmul.f32 %v1984, %v1796
        %v1986 = vadd.f32 %v1985, 1e-05
        %v1987 = vrsqrt.pop %v1986
        %v1988 = vmul.f32 %v1980, %v1987
        %v1989 = vmul.f32 %v1988, %v1974
        %v1990 = vadd.f32 %v1989, %v1975
        %v1991 = vld [vmem:[%s23] sm:$0xff]
        %v1992 = vld [vmem:[%s23 + $0x8] sm:$0xff]
        %v1993 = vld [vmem:[%s23 + $0x10] sm:$0xff]
        %v1994 = vld [vmem:[%s23 + $0x18] sm:$0xff]
        %v1995 = vld [vmem:[%s23 + $0x20] sm:$0xff]
        %v1996 = vld [vmem:[%s23 + $0x28] sm:$0xff]
        %v1997 = vld [vmem:[%s23 + $0x30] sm:$0xff]
        %v1998 = vld [vmem:[%s23 + $0x38] sm:$0xff]
        %v1999 = vld [vmem:[#allocation11] sm:$0x1]
        %v2001 = vsel %vm1716, %v1990, 0
        %2003 = vmatprep.subr.mxu0 0.0
        %2004 = vmatpush1.msra.mxu0 %v1991
        %2005 = vmatprep.subr.mxu0 0.0
        %2006 = vmatpush1.msra.mxu0 %v1992
        %2007 = vmatprep.subr.mxu0 0.0
        %2008 = vmatpush1.msra.mxu0 %v1993
        %2009 = vmatprep.subr.mxu0 0.0
        %2010 = vmatpush1.msra.mxu0 %v1994
        %2011 = vmatprep.subr.mxu0 0.0
        %2012 = vmatpush1.msra.mxu0 %v1995
        %2013 = vmatprep.subr.mxu0 0.0
        %2014 = vmatpush1.msra.mxu0 %v1996
        %2015 = vmatprep.subr.mxu0 0.0
        %2016 = vmatpush1.msra.mxu0 %v1997
        %2017 = vmatprep.subr.mxu0 0.0
        %2018 = vmatpush1.msra.mxu0 %v1998
        %2019 = vmatprep.subr.mxu0 0.0
        %2020 = vmatpush1.msra.mxu0 0.0
        %2021 = vmatprep.subr.mxu0 0.0
        %2022 = vmatpush1.msra.mxu0 0.0
        %2023 = vmatprep.subr.mxu0 0.0
        %2024 = vmatpush1.msra.mxu0 0.0
        %2025 = vmatprep.subr.mxu0 0.0
        %2026 = vmatpush1.msra.mxu0 0.0
        %2027 = vmatprep.subr.mxu0 0.0
        %2028 = vmatpush1.msra.mxu0 0.0
        %2029 = vmatprep.subr.mxu0 0.0
        %2030 = vmatpush1.msra.mxu0 0.0
        %2031 = vmatprep.subr.mxu0 0.0
        %2032 = vmatpush1.msra.mxu0 0.0
        %2033 = vmatprep.subr.mxu0 0.0
        %2034 = vmatpush1.msra.mxu0 0.0
        %2035 = vmatprep.subr.mxu0 0.0
        %2036 = vmatpush1.msra.mxu0 0.0
        %2037 = vmatprep.subr.mxu0 0.0
        %2038 = vmatpush1.msra.mxu0 0.0
        %2039 = vmatprep.subr.mxu0 0.0
        %2040 = vmatpush1.msra.mxu0 0.0
        %2041 = vmatprep.subr.mxu0 0.0
        %2042 = vmatpush1.msra.mxu0 0.0
        %2043 = vmatprep.subr.mxu0 0.0
        %2044 = vmatpush1.msra.mxu0 0.0
        %2045 = vmatprep.subr.mxu0 0.0
        %2046 = vmatpush1.msra.mxu0 0.0
        %2047 = vmatprep.subr.mxu0 0.0
        %2048 = vmatpush1.msra.mxu0 0.0
        %2049 = vmatprep.subr.mxu0 0.0
        %2050 = vmatpush1.msra.mxu0 0.0
        %2051 = vmatprep.subr.mxu0 0.0
        %2052 = vmatpush1.msra.mxu0 0.0
        %2053 = vmatprep.subr.mxu0 0.0
        %2054 = vmatpush1.msra.mxu0 0.0
        %2055 = vmatprep.subr.mxu0 0.0
        %2056 = vmatpush1.msra.mxu0 0.0
        %2057 = vmatprep.subr.mxu0 0.0
        %2058 = vmatpush1.msra.mxu0 0.0
        %2059 = vmatprep.subr.mxu0 0.0
        %2060 = vmatpush1.msra.mxu0 0.0
        %2061 = vmatprep.subr.mxu0 0.0
        %2062 = vmatpush1.msra.mxu0 0.0
        %2063 = vmatprep.subr.mxu0 0.0
        %2064 = vmatpush1.msra.mxu0 0.0
        %2065 = vmatprep.subr.mxu0 0.0
        %2066 = vmatpush1.msra.mxu0 0.0
        %2067 = vmatprep.mubr.f32.mxu0 0.0
        %2068 = vmatmul.mubr.f32.gmra.mrb[0].mxu0 %v2001
        %v2069 = vpop.f32.mrb[0].mxu0
        %v2070 = vadd.f32 %v1999, %v2069
        %v2071 = vpop.f32.mrb[0].mxu0
        %2072 = vdwg.mxu0
        %v2073 = vmax.f32 %v2070, 0.0
        %v2074 = vld [vmem:[%s27] sm:$0xff]
        %v2075 = vld [vmem:[%s27 + $0x8] sm:$0xff]
        %v2076 = vld [vmem:[%s27 + $0x10] sm:$0xff]
        %v2077 = vld [vmem:[%s27 + $0x18] sm:$0xff]
        %v2078 = vld [vmem:[%s27 + $0x20] sm:$0xff]
        %v2079 = vld [vmem:[%s27 + $0x28] sm:$0xff]
        %v2080 = vld [vmem:[%s27 + $0x30] sm:$0xff]
        %v2081 = vld [vmem:[%s27 + $0x38] sm:$0xff]
        %v2082 = vld [vmem:[%s27 + $0x40] sm:$0xff]
        %v2083 = vld [vmem:[%s27 + $0x48] sm:$0xff]
        %v2084 = vld [vmem:[%s27 + $0x50] sm:$0xff]
        %v2085 = vld [vmem:[%s27 + $0x58] sm:$0xff]
        %v2086 = vld [vmem:[%s27 + $0x60] sm:$0xff]
        %v2087 = vld [vmem:[%s27 + $0x68] sm:$0xff]
        %v2088 = vld [vmem:[%s27 + $0x70] sm:$0xff]
        %v2089 = vld [vmem:[%s27 + $0x78] sm:$0xff]
        %v2090 = vld [vmem:[#allocation13] sm:$0x1]
        %2091 = vmatprep.subr.mxu0 0.0
        %2092 = vmatpush1.msra.mxu0 %v2074
        %2093 = vmatprep.subr.mxu0 0.0
        %2094 = vmatpush1.msra.mxu0 %v2075
        %2095 = vmatprep.subr.mxu0 0.0
        %2096 = vmatpush1.msra.mxu0 %v2076
        %2097 = vmatprep.subr.mxu0 0.0
        %2098 = vmatpush1.msra.mxu0 %v2077
        %2099 = vmatprep.subr.mxu0 0.0
        %2100 = vmatpush1.msra.mxu0 %v2078
        %2101 = vmatprep.subr.mxu0 0.0
        %2102 = vmatpush1.msra.mxu0 %v2079
        %2103 = vmatprep.subr.mxu0 0.0
        %2104 = vmatpush1.msra.mxu0 %v2080
        %2105 = vmatprep.subr.mxu0 0.0
        %2106 = vmatpush1.msra.mxu0 %v2081
        %2107 = vmatprep.subr.mxu0 0.0
        %2108 = vmatpush1.msra.mxu0 %v2082
        %2109 = vmatprep.subr.mxu0 0.0
        %2110 = vmatpush1.msra.mxu0 %v2083
        %2111 = vmatprep.subr.mxu0 0.0
        %2112 = vmatpush1.msra.mxu0 %v2084
        %2113 = vmatprep.subr.mxu0 0.0
        %2114 = vmatpush1.msra.mxu0 %v2085
        %2115 = vmatprep.subr.mxu0 0.0
        %2116 = vmatpush1.msra.mxu0 %v2086
        %2117 = vmatprep.subr.mxu0 0.0
        %2118 = vmatpush1.msra.mxu0 %v2087
        %2119 = vmatprep.subr.mxu0 0.0
        %2120 = vmatpush1.msra.mxu0 %v2088
        %2121 = vmatprep.subr.mxu0 0.0
        %2122 = vmatpush1.msra.mxu0 %v2089
        %2123 = vmatprep.subr.mxu0 0.0
        %2124 = vmatpush1.msra.mxu0 0.0
        %2125 = vmatprep.subr.mxu0 0.0
        %2126 = vmatpush1.msra.mxu0 0.0
        %2127 = vmatprep.subr.mxu0 0.0
        %2128 = vmatpush1.msra.mxu0 0.0
        %2129 = vmatprep.subr.mxu0 0.0
        %2130 = vmatpush1.msra.mxu0 0.0
        %2131 = vmatprep.subr.mxu0 0.0
        %2132 = vmatpush1.msra.mxu0 0.0
        %2133 = vmatprep.subr.mxu0 0.0
        %2134 = vmatpush1.msra.mxu0 0.0
        %2135 = vmatprep.subr.mxu0 0.0
        %2136 = vmatpush1.msra.mxu0 0.0
        %2137 = vmatprep.subr.mxu0 0.0
        %2138 = vmatpush1.msra.mxu0 0.0
        %2139 = vmatprep.subr.mxu0 0.0
        %2140 = vmatpush1.msra.mxu0 0.0
        %2141 = vmatprep.subr.mxu0 0.0
        %2142 = vmatpush1.msra.mxu0 0.0
        %2143 = vmatprep.subr.mxu0 0.0
        %2144 = vmatpush1.msra.mxu0 0.0
        %2145 = vmatprep.subr.mxu0 0.0
        %2146 = vmatpush1.msra.mxu0 0.0
        %2147 = vmatprep.subr.mxu0 0.0
        %2148 = vmatpush1.msra.mxu0 0.0
        %2149 = vmatprep.subr.mxu0 0.0
        %2150 = vmatpush1.msra.mxu0 0.0
        %2151 = vmatprep.subr.mxu0 0.0
        %2152 = vmatpush1.msra.mxu0 0.0
        %2153 = vmatprep.subr.mxu0 0.0
        %2154 = vmatpush1.msra.mxu0 0.0
        %2155 = vmatprep.mubr.f32.mxu0 0.0
        %2156 = vmatmul.mubr.f32.gmra.mrb[0].mxu0 %v2073
        %v2157 = vpop.f32.mrb[0].mxu0
        %v2158 = vadd.f32 %v2090, %v2157
        %v2159 = vpop.f32.mrb[0].mxu0
        %2160 = vdwg.mxu0
        %v2161 = vadd.f32 %v1990, %v2158
        %v2162 = vld [vmem:[#allocation20] sm:$0x1]
        %v2163 = vld [vmem:[#allocation22] sm:$0x1]
        %v2164 = vsel %vm1792, %v2161, 0.0
        %2165 = vadd.xlane.f32.xlu0 %v2164
        %v2166 = vpop.xlane.xlu0 %2165
        %v2167 = vmul.f32 %v2166, %v1796
        %v2168 = vsub.f32 %v2161, %v2167
        %v2169 = vmul.f32 %v2168, %v2168
        %v2170 = vsel %vm1792, %v2169, 0.0
        %2171 = vadd.xlane.f32.xlu0 %v2170
        %v2172 = vpop.xlane.xlu0 %2171
        %v2173 = vmul.f32 %v2172, %v1796
        %v2174 = vadd.f32 %v2173, 1e-05
        %v2175 = vrsqrt.pop %v2174
        %v2176 = vmul.f32 %v2168, %v2175
        %v2177 = vmul.f32 %v2176, %v2162
        %v2178 = vadd.f32 %v2177, %v2163
        %s2179 = scalar_lea.vmem %s7, 64
        %v2180 = vld [vmem:[%s2179] sm:$0xff]
        %v2181 = vld [vmem:[%s2179 + $0x8] sm:$0xff]
        %v2182 = vld [vmem:[%s2179 + $0x10] sm:$0xff]
        %v2183 = vld [vmem:[%s2179 + $0x18] sm:$0xff]
        %v2184 = vld [vmem:[%s2179 + $0x20] sm:$0xff]
        %v2185 = vld [vmem:[%s2179 + $0x28] sm:$0xff]
        %v2186 = vld [vmem:[%s2179 + $0x30] sm:$0xff]
        %v2187 = vld [vmem:[%s2179 + $0x38] sm:$0xff]
        %v2188 = vld [vmem:[%s9 + $0x1] sm:$0x1]
        %v2190 = vsel %vm1716, %v2178, 0
        %2192 = vmatprep.subr.mxu0 0.0
        %2193 = vmatpush1.msra.mxu0 %v2180
        %2194 = vmatprep.subr.mxu0 0.0
        %2195 = vmatpush1.msra.mxu0 %v2181
        %2196 = vmatprep.subr.mxu0 0.0
        %2197 = vmatpush1.msra.mxu0 %v2182
        %2198 = vmatprep.subr.mxu0 0.0
        %2199 = vmatpush1.msra.mxu0 %v2183
        %2200 = vmatprep.subr.mxu0 0.0
        %2201 = vmatpush1.msra.mxu0 %v2184
        %2202 = vmatprep.subr.mxu0 0.0
        %2203 = vmatpush1.msra.mxu0 %v2185
        %2204 = vmatprep.subr.mxu0 0.0
        %2205 = vmatpush1.msra.mxu0 %v2186
        %2206 = vmatprep.subr.mxu0 0.0
        %2207 = vmatpush1.msra.mxu0 %v2187
        %2208 = vmatprep.subr.mxu0 0.0
        %2209 = vmatpush1.msra.mxu0 0.0
        %2210 = vmatprep.subr.mxu0 0.0
        %2211 = vmatpush1.msra.mxu0 0.0
        %2212 = vmatprep.subr.mxu0 0.0
        %2213 = vmatpush1.msra.mxu0 0.0
        %2214 = vmatprep.subr.mxu0 0.0
        %2215 = vmatpush1.msra.mxu0 0.0
        %2216 = vmatprep.subr.mxu0 0.0
        %2217 = vmatpush1.msra.mxu0 0.0
        %2218 = vmatprep.subr.mxu0 0.0
        %2219 = vmatpush1.msra.mxu0 0.0
        %2220 = vmatprep.subr.mxu0 0.0
        %2221 = vmatpush1.msra.mxu0 0.0
        %2222 = vmatprep.subr.mxu0 0.0
        %2223 = vmatpush1.msra.mxu0 0.0
        %2224 = vmatprep.subr.mxu0 0.0
        %2225 = vmatpush1.msra.mxu0 0.0
        %2226 = vmatprep.subr.mxu0 0.0
        %2227 = vmatpush1.msra.mxu0 0.0
        %2228 = vmatprep.subr.mxu0 0.0
        %2229 = vmatpush1.msra.mxu0 0.0
        %2230 = vmatprep.subr.mxu0 0.0
        %2231 = vmatpush1.msra.mxu0 0.0
        %2232 = vmatprep.subr.mxu0 0.0
        %2233 = vmatpush1.msra.mxu0 0.0
        %2234 = vmatprep.subr.mxu0 0.0
        %2235 = vmatpush1.msra.mxu0 0.0
        %2236 = vmatprep.subr.mxu0 0.0
        %2237 = vmatpush1.msra.mxu0 0.0
        %2238 = vmatprep.subr.mxu0 0.0
        %2239 = vmatpush1.msra.mxu0 0.0
        %2240 = vmatprep.subr.mxu0 0.0
        %2241 = vmatpush1.msra.mxu0 0.0
        %2242 = vmatprep.subr.mxu0 0.0
        %2243 = vmatpush1.msra.mxu0 0.0
        %2244 = vmatprep.subr.mxu0 0.0
        %2245 = vmatpush1.msra.mxu0 0.0
        %2246 = vmatprep.subr.mxu0 0.0
        %2247 = vmatpush1.msra.mxu0 0.0
        %2248 = vmatprep.subr.mxu0 0.0
        %2249 = vmatpush1.msra.mxu0 0.0
        %2250 = vmatprep.subr.mxu0 0.0
        %2251 = vmatpush1.msra.mxu0 0.0
        %2252 = vmatprep.subr.mxu0 0.0
        %2253 = vmatpush1.msra.mxu0 0.0
        %2254 = vmatprep.subr.mxu0 0.0
        %2255 = vmatpush1.msra.mxu0 0.0
        %2256 = vmatprep.mubr.f32.mxu0 0.0
        %2257 = vmatmul.mubr.f32.gmra.mrb[0].mxu0 %v2190
        %v2258 = vpop.f32.mrb[0].mxu0
        %v2259 = vadd.f32 %v2188, %v2258
        %v2260 = vpop.f32.mrb[0].mxu0
        %2261 = vdwg.mxu0
        %s2262 = scalar_lea.vmem %s11, 64
        %v2263 = vld [vmem:[%s2262] sm:$0xff]
        %v2264 = vld [vmem:[%s2262 + $0x8] sm:$0xff]
        %v2265 = vld [vmem:[%s2262 + $0x10] sm:$0xff]
        %v2266 = vld [vmem:[%s2262 + $0x18] sm:$0xff]
        %v2267 = vld [vmem:[%s2262 + $0x20] sm:$0xff]
        %v2268 = vld [vmem:[%s2262 + $0x28] sm:$0xff]
        %v2269 = vld [vmem:[%s2262 + $0x30] sm:$0xff]
        %v2270 = vld [vmem:[%s2262 + $0x38] sm:$0xff]
        %v2271 = vld [vmem:[%s13 + $0x1] sm:$0x1]
        %v2273 = vsel %vm1716, %v2259, 0
        %2275 = vmatprep.subr.mxu0 0.0
        %2276 = vmatpush1.msra.mxu0 %v2263
        %2277 = vmatprep.subr.mxu0 0.0
        %2278 = vmatpush1.msra.mxu0 %v2264
        %2279 = vmatprep.subr.mxu0 0.0
        %2280 = vmatpush1.msra.mxu0 %v2265
        %2281 = vmatprep.subr.mxu0 0.0
        %2282 = vmatpush1.msra.mxu0 %v2266
        %2283 = vmatprep.subr.mxu0 0.0
        %2284 = vmatpush1.msra.mxu0 %v2267
        %2285 = vmatprep.subr.mxu0 0.0
        %2286 = vmatpush1.msra.mxu0 %v2268
        %2287 = vmatprep.subr.mxu0 0.0
        %2288 = vmatpush1.msra.mxu0 %v2269
        %2289 = vmatprep.subr.mxu0 0.0
        %2290 = vmatpush1.msra.mxu0 %v2270
        %2291 = vmatprep.subr.mxu0 0.0
        %2292 = vmatpush1.msra.mxu0 0.0
        %2293 = vmatprep.subr.mxu0 0.0
        %2294 = vmatpush1.msra.mxu0 0.0
        %2295 = vmatprep.subr.mxu0 0.0
        %2296 = vmatpush1.msra.mxu0 0.0
        %2297 = vmatprep.subr.mxu0 0.0
        %2298 = vmatpush1.msra.mxu0 0.0
        %2299 = vmatprep.subr.mxu0 0.0
        %2300 = vmatpush1.msra.mxu0 0.0
        %2301 = vmatprep.subr.mxu0 0.0
        %2302 = vmatpush1.msra.mxu0 0.0
        %2303 = vmatprep.subr.mxu0 0.0
        %2304 = vmatpush1.msra.mxu0 0.0
        %2305 = vmatprep.subr.mxu0 0.0
        %2306 = vmatpush1.msra.mxu0 0.0
        %2307 = vmatprep.subr.mxu0 0.0
        %2308 = vmatpush1.msra.mxu0 0.0
        %2309 = vmatprep.subr.mxu0 0.0
        %2310 = vmatpush1.msra.mxu0 0.0
        %2311 = vmatprep.subr.mxu0 0.0
        %2312 = vmatpush1.msra.mxu0 0.0
        %2313 = vmatprep.subr.mxu0 0.0
        %2314 = vmatpush1.msra.mxu0 0.0
        %2315 = vmatprep.subr.mxu0 0.0
        %2316 = vmatpush1.msra.mxu0 0.0
        %2317 = vmatprep.subr.mxu0 0.0
        %2318 = vmatpush1.msra.mxu0 0.0
        %2319 = vmatprep.subr.mxu0 0.0
        %2320 = vmatpush1.msra.mxu0 0.0
        %2321 = vmatprep.subr.mxu0 0.0
        %2322 = vmatpush1.msra.mxu0 0.0
        %2323 = vmatprep.subr.mxu0 0.0
        %2324 = vmatpush1.msra.mxu0 0.0
        %2325 = vmatprep.subr.mxu0 0.0
        %2326 = vmatpush1.msra.mxu0 0.0
        %2327 = vmatprep.subr.mxu0 0.0
        %2328 = vmatpush1.msra.mxu0 0.0
        %2329 = vmatprep.subr.mxu0 0.0
        %2330 = vmatpush1.msra.mxu0 0.0
        %2331 = vmatprep.subr.mxu0 0.0
        %2332 = vmatpush1.msra.mxu0 0.0
        %2333 = vmatprep.subr.mxu0 0.0
        %2334 = vmatpush1.msra.mxu0 0.0
        %2335 = vmatprep.subr.mxu0 0.0
        %2336 = vmatpush1.msra.mxu0 0.0
        %2337 = vmatprep.subr.mxu0 0.0
        %2338 = vmatpush1.msra.mxu0 0.0
        %2339 = vmatprep.mubr.f32.mxu0 0.0
        %2340 = vmatmul.mubr.f32.gmra.mrb[0].mxu0 %v2273
        %v2341 = vpop.f32.mrb[0].mxu0
        %v2342 = vadd.f32 %v2271, %v2341
        %v2343 = vpop.f32.mrb[0].mxu0
        %2344 = vdwg.mxu0
        %v2345 = vadd.f32 %v2178, %v2342
        %v2346 = vld [vmem:[#allocation14 + $0x1] sm:$0x1]
        %v2347 = vld [vmem:[#allocation16 + $0x1] sm:$0x1]
        %v2348 = vsel %vm1792, %v2345, 0.0
        %2349 = vadd.xlane.f32.xlu0 %v2348
        %v2350 = vpop.xlane.xlu0 %2349
        %v2351 = vmul.f32 %v2350, %v1796
        %v2352 = vsub.f32 %v2345, %v2351
        %v2353 = vmul.f32 %v2352, %v2352
        %v2354 = vsel %vm1792, %v2353, 0.0
        %2355 = vadd.xlane.f32.xlu0 %v2354
        %v2356 = vpop.xlane.xlu0 %2355
        %v2357 = vmul.f32 %v2356, %v1796
        %v2358 = vadd.f32 %v2357, 1e-05
        %v2359 = vrsqrt.pop %v2358
        %v2360 = vmul.f32 %v2352, %v2359
        %v2361 = vmul.f32 %v2360, %v2346
        %v2362 = vadd.f32 %v2361, %v2347
        %s2363 = scalar_lea.vmem %s15, 64
        %v2364 = vld [vmem:[%s2363] sm:$0xff]
        %v2365 = vld [vmem:[%s2363 + $0x8] sm:$0xff]
        %v2366 = vld [vmem:[%s2363 + $0x10] sm:$0xff]
        %v2367 = vld [vmem:[%s2363 + $0x18] sm:$0xff]
        %v2368 = vld [vmem:[%s2363 + $0x20] sm:$0xff]
        %v2369 = vld [vmem:[%s2363 + $0x28] sm:$0xff]
        %v2370 = vld [vmem:[%s2363 + $0x30] sm:$0xff]
        %v2371 = vld [vmem:[%s2363 + $0x38] sm:$0xff]
        %v2372 = vld [vmem:[#allocation8 + $0x1] sm:$0x1]
        %2373 = vmatprep.subr.mxu0 0.0
        %2374 = vmatpush1.msra.mxu0 %v2364
        %2375 = vmatprep.subr.mxu0 0.0
        %2376 = vmatpush1.msra.mxu0 %v2365
        %2377 = vmatprep.subr.mxu0 0.0
        %2378 = vmatpush1.msra.mxu0 %v2366
        %2379 = vmatprep.subr.mxu0 0.0
        %2380 = vmatpush1.msra.mxu0 %v2367
        %2381 = vmatprep.subr.mxu0 0.0
        %2382 = vmatpush1.msra.mxu0 %v2368
        %2383 = vmatprep.subr.mxu0 0.0
        %2384 = vmatpush1.msra.mxu0 %v2369
        %2385 = vmatprep.subr.mxu0 0.0
        %2386 = vmatpush1.msra.mxu0 %v2370
        %2387 = vmatprep.subr.mxu0 0.0
        %2388 = vmatpush1.msra.mxu0 %v2371
        %2389 = vmatprep.subr.mxu0 0.0
        %2390 = vmatpush1.msra.mxu0 0.0
        %2391 = vmatprep.subr.mxu0 0.0
        %2392 = vmatpush1.msra.mxu0 0.0
        %2393 = vmatprep.subr.mxu0 0.0
        %2394 = vmatpush1.msra.mxu0 0.0
        %2395 = vmatprep.subr.mxu0 0.0
        %2396 = vmatpush1.msra.mxu0 0.0
        %2397 = vmatprep.subr.mxu0 0.0
        %2398 = vmatpush1.msra.mxu0 0.0
        %2399 = vmatprep.subr.mxu0 0.0
        %2400 = vmatpush1.msra.mxu0 0.0
        %2401 = vmatprep.subr.mxu0 0.0
        %2402 = vmatpush1.msra.mxu0 0.0
        %2403 = vmatprep.subr.mxu0 0.0
        %2404 = vmatpush1.msra.mxu0 0.0
        %2405 = vmatprep.subr.mxu0 0.0
        %2406 = vmatpush1.msra.mxu0 0.0
        %2407 = vmatprep.subr.mxu0 0.0
        %2408 = vmatpush1.msra.mxu0 0.0
        %2409 = vmatprep.subr.mxu0 0.0
        %2410 = vmatpush1.msra.mxu0 0.0
        %2411 = vmatprep.subr.mxu0 0.0
        %2412 = vmatpush1.msra.mxu0 0.0
        %2413 = vmatprep.subr.mxu0 0.0
        %2414 = vmatpush1.msra.mxu0 0.0
        %2415 = vmatprep.subr.mxu0 0.0
        %2416 = vmatpush1.msra.mxu0 0.0
        %2417 = vmatprep.subr.mxu0 0.0
        %2418 = vmatpush1.msra.mxu0 0.0
        %2419 = vmatprep.subr.mxu0 0.0
        %2420 = vmatpush1.msra.mxu0 0.0
        %2421 = vmatprep.subr.mxu0 0.0
        %2422 = vmatpush1.msra.mxu0 0.0
        %2423 = vmatprep.subr.mxu0 0.0
        %2424 = vmatpush1.msra.mxu0 0.0
        %2425 = vmatprep.subr.mxu0 0.0
        %2426 = vmatpush1.msra.mxu0 0.0
        %2427 = vmatprep.subr.mxu0 0.0
        %2428 = vmatpush1.msra.mxu0 0.0
        %2429 = vmatprep.subr.mxu0 0.0
        %2430 = vmatpush1.msra.mxu0 0.0
        %2431 = vmatprep.subr.mxu0 0.0
        %2432 = vmatpush1.msra.mxu0 0.0
        %2433 = vmatprep.subr.mxu0 0.0
        %2434 = vmatpush1.msra.mxu0 0.0
        %2435 = vmatprep.subr.mxu0 0.0
        %2436 = vmatpush1.msra.mxu0 0.0
        %2437 = vmatprep.mubr.f32.mxu0 0.0
        %2438 = vmatmul.mubr.f32.gmra.mrb[0].mxu0 %v1819
        %v2439 = vpop.f32.mrb[0].mxu0
        %v2440 = vadd.f32 %v2372, %v2439
        %v2441 = vpop.f32.mrb[0].mxu0
        %2442 = vdwg.mxu0
        %s2443 = scalar_lea.vmem %s19, 64
        %v2444 = vld [vmem:[%s2443] sm:$0xff]
        %v2445 = vld [vmem:[%s2443 + $0x8] sm:$0xff]
        %v2446 = vld [vmem:[%s2443 + $0x10] sm:$0xff]
        %v2447 = vld [vmem:[%s2443 + $0x18] sm:$0xff]
        %v2448 = vld [vmem:[%s2443 + $0x20] sm:$0xff]
        %v2449 = vld [vmem:[%s2443 + $0x28] sm:$0xff]
        %v2450 = vld [vmem:[%s2443 + $0x30] sm:$0xff]
        %v2451 = vld [vmem:[%s2443 + $0x38] sm:$0xff]
        %v2452 = vld [vmem:[#allocation10 + $0x1] sm:$0x1]
        %v2454 = vsel %vm1716, %v2440, 0
        %2456 = vmatprep.subr.mxu0 0.0
        %2457 = vmatpush1.msra.mxu0 %v2444
        %2458 = vmatprep.subr.mxu0 0.0
        %2459 = vmatpush1.msra.mxu0 %v2445
        %2460 = vmatprep.subr.mxu0 0.0
        %2461 = vmatpush1.msra.mxu0 %v2446
        %2462 = vmatprep.subr.mxu0 0.0
        %2463 = vmatpush1.msra.mxu0 %v2447
        %2464 = vmatprep.subr.mxu0 0.0
        %2465 = vmatpush1.msra.mxu0 %v2448
        %2466 = vmatprep.subr.mxu0 0.0
        %2467 = vmatpush1.msra.mxu0 %v2449
        %2468 = vmatprep.subr.mxu0 0.0
        %2469 = vmatpush1.msra.mxu0 %v2450
        %2470 = vmatprep.subr.mxu0 0.0
        %2471 = vmatpush1.msra.mxu0 %v2451
        %2472 = vmatprep.subr.mxu0 0.0
        %2473 = vmatpush1.msra.mxu0 0.0
        %2474 = vmatprep.subr.mxu0 0.0
        %2475 = vmatpush1.msra.mxu0 0.0
        %2476 = vmatprep.subr.mxu0 0.0
        %2477 = vmatpush1.msra.mxu0 0.0
        %2478 = vmatprep.subr.mxu0 0.0
        %2479 = vmatpush1.msra.mxu0 0.0
        %2480 = vmatprep.subr.mxu0 0.0
        %2481 = vmatpush1.msra.mxu0 0.0
        %2482 = vmatprep.subr.mxu0 0.0
        %2483 = vmatpush1.msra.mxu0 0.0
        %2484 = vmatprep.subr.mxu0 0.0
        %2485 = vmatpush1.msra.mxu0 0.0
        %2486 = vmatprep.subr.mxu0 0.0
        %2487 = vmatpush1.msra.mxu0 0.0
        %2488 = vmatprep.subr.mxu0 0.0
        %2489 = vmatpush1.msra.mxu0 0.0
        %2490 = vmatprep.subr.mxu0 0.0
        %2491 = vmatpush1.msra.mxu0 0.0
        %2492 = vmatprep.subr.mxu0 0.0
        %2493 = vmatpush1.msra.mxu0 0.0
        %2494 = vmatprep.subr.mxu0 0.0
        %2495 = vmatpush1.msra.mxu0 0.0
        %2496 = vmatprep.subr.mxu0 0.0
        %2497 = vmatpush1.msra.mxu0 0.0
        %2498 = vmatprep.subr.mxu0 0.0
        %2499 = vmatpush1.msra.mxu0 0.0
        %2500 = vmatprep.subr.mxu0 0.0
        %2501 = vmatpush1.msra.mxu0 0.0
        %2502 = vmatprep.subr.mxu0 0.0
        %2503 = vmatpush1.msra.mxu0 0.0
        %2504 = vmatprep.subr.mxu0 0.0
        %2505 = vmatpush1.msra.mxu0 0.0
        %2506 = vmatprep.subr.mxu0 0.0
        %2507 = vmatpush1.msra.mxu0 0.0
        %2508 = vmatprep.subr.mxu0 0.0
        %2509 = vmatpush1.msra.mxu0 0.0
        %2510 = vmatprep.subr.mxu0 0.0
        %2511 = vmatpush1.msra.mxu0 0.0
        %2512 = vmatprep.subr.mxu0 0.0
        %2513 = vmatpush1.msra.mxu0 0.0
        %2514 = vmatprep.subr.mxu0 0.0
        %2515 = vmatpush1.msra.mxu0 0.0
        %2516 = vmatprep.subr.mxu0 0.0
        %2517 = vmatpush1.msra.mxu0 0.0
        %2518 = vmatprep.subr.mxu0 0.0
        %2519 = vmatpush1.msra.mxu0 0.0
        %2520 = vmatprep.mubr.f32.mxu0 0.0
        %2521 = vmatmul.mubr.f32.gmra.mrb[0].mxu0 %v2454
        %v2522 = vpop.f32.mrb[0].mxu0
        %v2523 = vadd.f32 %v2452, %v2522
        %v2524 = vpop.f32.mrb[0].mxu0
        %2525 = vdwg.mxu0
        %v2526 = vadd.f32 %v2362, %v2523
        %v2527 = vld [vmem:[#allocation17 + $0x1] sm:$0x1]
        %v2528 = vld [vmem:[#allocation19 + $0x1] sm:$0x1]
        %v2529 = vsel %vm1792, %v2526, 0.0
        %2530 = vadd.xlane.f32.xlu0 %v2529
        %v2531 = vpop.xlane.xlu0 %2530
        %v2532 = vmul.f32 %v2531, %v1796
        %v2533 = vsub.f32 %v2526, %v2532
        %v2534 = vmul.f32 %v2533, %v2533
        %v2535 = vsel %vm1792, %v2534, 0.0
        %2536 = vadd.xlane.f32.xlu0 %v2535
        %v2537 = vpop.xlane.xlu0 %2536
        %v2538 = vmul.f32 %v2537, %v1796
        %v2539 = vadd.f32 %v2538, 1e-05
        %v2540 = vrsqrt.pop %v2539
        %v2541 = vmul.f32 %v2533, %v2540
        %v2542 = vmul.f32 %v2541, %v2527
        %v2543 = vadd.f32 %v2542, %v2528
        %s2544 = scalar_lea.vmem %s23, 64
        %v2545 = vld [vmem:[%s2544] sm:$0xff]
        %v2546 = vld [vmem:[%s2544 + $0x8] sm:$0xff]
        %v2547 = vld [vmem:[%s2544 + $0x10] sm:$0xff]
        %v2548 = vld [vmem:[%s2544 + $0x18] sm:$0xff]
        %v2549 = vld [vmem:[%s2544 + $0x20] sm:$0xff]
        %v2550 = vld [vmem:[%s2544 + $0x28] sm:$0xff]
        %v2551 = vld [vmem:[%s2544 + $0x30] sm:$0xff]
        %v2552 = vld [vmem:[%s2544 + $0x38] sm:$0xff]
        %v2553 = vld [vmem:[#allocation11 + $0x1] sm:$0x1]
        %v2555 = vsel %vm1716, %v2543, 0
        %2557 = vmatprep.subr.mxu0 0.0
        %2558 = vmatpush1.msra.mxu0 %v2545
        %2559 = vmatprep.subr.mxu0 0.0
        %2560 = vmatpush1.msra.mxu0 %v2546
        %2561 = vmatprep.subr.mxu0 0.0
        %2562 = vmatpush1.msra.mxu0 %v2547
        %2563 = vmatprep.subr.mxu0 0.0
        %2564 = vmatpush1.msra.mxu0 %v2548
        %2565 = vmatprep.subr.mxu0 0.0
        %2566 = vmatpush1.msra.mxu0 %v2549
        %2567 = vmatprep.subr.mxu0 0.0
        %2568 = vmatpush1.msra.mxu0 %v2550
        %2569 = vmatprep.subr.mxu0 0.0
        %2570 = vmatpush1.msra.mxu0 %v2551
        %2571 = vmatprep.subr.mxu0 0.0
        %2572 = vmatpush1.msra.mxu0 %v2552
        %2573 = vmatprep.subr.mxu0 0.0
        %2574 = vmatpush1.msra.mxu0 0.0
        %2575 = vmatprep.subr.mxu0 0.0
        %2576 = vmatpush1.msra.mxu0 0.0
        %2577 = vmatprep.subr.mxu0 0.0
        %2578 = vmatpush1.msra.mxu0 0.0
        %2579 = vmatprep.subr.mxu0 0.0
        %2580 = vmatpush1.msra.mxu0 0.0
        %2581 = vmatprep.subr.mxu0 0.0
        %2582 = vmatpush1.msra.mxu0 0.0
        %2583 = vmatprep.subr.mxu0 0.0
        %2584 = vmatpush1.msra.mxu0 0.0
        %2585 = vmatprep.subr.mxu0 0.0
        %2586 = vmatpush1.msra.mxu0 0.0
        %2587 = vmatprep.subr.mxu0 0.0
        %2588 = vmatpush1.msra.mxu0 0.0
        %2589 = vmatprep.subr.mxu0 0.0
        %2590 = vmatpush1.msra.mxu0 0.0
        %2591 = vmatprep.subr.mxu0 0.0
        %2592 = vmatpush1.msra.mxu0 0.0
        %2593 = vmatprep.subr.mxu0 0.0
        %2594 = vmatpush1.msra.mxu0 0.0
        %2595 = vmatprep.subr.mxu0 0.0
        %2596 = vmatpush1.msra.mxu0 0.0
        %2597 = vmatprep.subr.mxu0 0.0
        %2598 = vmatpush1.msra.mxu0 0.0
        %2599 = vmatprep.subr.mxu0 0.0
        %2600 = vmatpush1.msra.mxu0 0.0
        %2601 = vmatprep.subr.mxu0 0.0
        %2602 = vmatpush1.msra.mxu0 0.0
        %2603 = vmatprep.subr.mxu0 0.0
        %2604 = vmatpush1.msra.mxu0 0.0
        %2605 = vmatprep.subr.mxu0 0.0
        %2606 = vmatpush1.msra.mxu0 0.0
        %2607 = vmatprep.subr.mxu0 0.0
        %2608 = vmatpush1.msra.mxu0 0.0
        %2609 = vmatprep.subr.mxu0 0.0
        %2610 = vmatpush1.msra.mxu0 0.0
        %2611 = vmatprep.subr.mxu0 0.0
        %2612 = vmatpush1.msra.mxu0 0.0
        %2613 = vmatprep.subr.mxu0 0.0
        %2614 = vmatpush1.msra.mxu0 0.0
        %2615 = vmatprep.subr.mxu0 0.0
        %2616 = vmatpush1.msra.mxu0 0.0
        %2617 = vmatprep.subr.mxu0 0.0
        %2618 = vmatpush1.msra.mxu0 0.0
        %2619 = vmatprep.subr.mxu0 0.0
        %2620 = vmatpush1.msra.mxu0 0.0
        %2621 = vmatprep.mubr.f32.mxu0 0.0
        %2622 = vmatmul.mubr.f32.gmra.mrb[0].mxu0 %v2555
        %v2623 = vpop.f32.mrb[0].mxu0
        %v2624 = vadd.f32 %v2553, %v2623
        %v2625 = vpop.f32.mrb[0].mxu0
        %2626 = vdwg.mxu0
        %v2627 = vmax.f32 %v2624, 0.0
        %s2628 = scalar_lea.vmem %s27, 128
        %v2629 = vld [vmem:[%s2628] sm:$0xff]
        %v2630 = vld [vmem:[%s2628 + $0x8] sm:$0xff]
        %v2631 = vld [vmem:[%s2628 + $0x10] sm:$0xff]
        %v2632 = vld [vmem:[%s2628 + $0x18] sm:$0xff]
        %v2633 = vld [vmem:[%s2628 + $0x20] sm:$0xff]
        %v2634 = vld [vmem:[%s2628 + $0x28] sm:$0xff]
        %v2635 = vld [vmem:[%s2628 + $0x30] sm:$0xff]
        %v2636 = vld [vmem:[%s2628 + $0x38] sm:$0xff]
        %v2637 = vld [vmem:[%s2628 + $0x40] sm:$0xff]
        %v2638 = vld [vmem:[%s2628 + $0x48] sm:$0xff]
        %v2639 = vld [vmem:[%s2628 + $0x50] sm:$0xff]
        %v2640 = vld [vmem:[%s2628 + $0x58] sm:$0xff]
        %v2641 = vld [vmem:[%s2628 + $0x60] sm:$0xff]
        %v2642 = vld [vmem:[%s2628 + $0x68] sm:$0xff]
        %v2643 = vld [vmem:[%s2628 + $0x70] sm:$0xff]
        %v2644 = vld [vmem:[%s2628 + $0x78] sm:$0xff]
        %v2645 = vld [vmem:[#allocation13 + $0x1] sm:$0x1]
        %2646 = vmatprep.subr.mxu0 0.0
        %2647 = vmatpush1.msra.mxu0 %v2629
        %2648 = vmatprep.subr.mxu0 0.0
        %2649 = vmatpush1.msra.mxu0 %v2630
        %2650 = vmatprep.subr.mxu0 0.0
        %2651 = vmatpush1.msra.mxu0 %v2631
        %2652 = vmatprep.subr.mxu0 0.0
        %2653 = vmatpush1.msra.mxu0 %v2632
        %2654 = vmatprep.subr.mxu0 0.0
        %2655 = vmatpush1.msra.mxu0 %v2633
        %2656 = vmatprep.subr.mxu0 0.0
        %2657 = vmatpush1.msra.mxu0 %v2634
        %2658 = vmatprep.subr.mxu0 0.0
        %2659 = vmatpush1.msra.mxu0 %v2635
        %2660 = vmatprep.subr.mxu0 0.0
        %2661 = vmatpush1.msra.mxu0 %v2636
        %2662 = vmatprep.subr.mxu0 0.0
        %2663 = vmatpush1.msra.mxu0 %v2637
        %2664 = vmatprep.subr.mxu0 0.0
        %2665 = vmatpush1.msra.mxu0 %v2638
        %2666 = vmatprep.subr.mxu0 0.0
        %2667 = vmatpush1.msra.mxu0 %v2639
        %2668 = vmatprep.subr.mxu0 0.0
        %2669 = vmatpush1.msra.mxu0 %v2640
        %2670 = vmatprep.subr.mxu0 0.0
        %2671 = vmatpush1.msra.mxu0 %v2641
        %2672 = vmatprep.subr.mxu0 0.0
        %2673 = vmatpush1.msra.mxu0 %v2642
        %2674 = vmatprep.subr.mxu0 0.0
        %2675 = vmatpush1.msra.mxu0 %v2643
        %2676 = vmatprep.subr.mxu0 0.0
        %2677 = vmatpush1.msra.mxu0 %v2644
        %2678 = vmatprep.subr.mxu0 0.0
        %2679 = vmatpush1.msra.mxu0 0.0
        %2680 = vmatprep.subr.mxu0 0.0
        %2681 = vmatpush1.msra.mxu0 0.0
        %2682 = vmatprep.subr.mxu0 0.0
        %2683 = vmatpush1.msra.mxu0 0.0
        %2684 = vmatprep.subr.mxu0 0.0
        %2685 = vmatpush1.msra.mxu0 0.0
        %2686 = vmatprep.subr.mxu0 0.0
        %2687 = vmatpush1.msra.mxu0 0.0
        %2688 = vmatprep.subr.mxu0 0.0
        %2689 = vmatpush1.msra.mxu0 0.0
        %2690 = vmatprep.subr.mxu0 0.0
        %2691 = vmatpush1.msra.mxu0 0.0
        %2692 = vmatprep.subr.mxu0 0.0
        %2693 = vmatpush1.msra.mxu0 0.0
        %2694 = vmatprep.subr.mxu0 0.0
        %2695 = vmatpush1.msra.mxu0 0.0
        %2696 = vmatprep.subr.mxu0 0.0
        %2697 = vmatpush1.msra.mxu0 0.0
        %2698 = vmatprep.subr.mxu0 0.0
        %2699 = vmatpush1.msra.mxu0 0.0
        %2700 = vmatprep.subr.mxu0 0.0
        %2701 = vmatpush1.msra.mxu0 0.0
        %2702 = vmatprep.subr.mxu0 0.0
        %2703 = vmatpush1.msra.mxu0 0.0
        %2704 = vmatprep.subr.mxu0 0.0
        %2705 = vmatpush1.msra.mxu0 0.0
        %2706 = vmatprep.subr.mxu0 0.0
        %2707 = vmatpush1.msra.mxu0 0.0
        %2708 = vmatprep.subr.mxu0 0.0
        %2709 = vmatpush1.msra.mxu0 0.0
        %2710 = vmatprep.mubr.f32.mxu0 0.0
        %2711 = vmatmul.mubr.f32.gmra.mrb[0].mxu0 %v2627
        %v2712 = vpop.f32.mrb[0].mxu0
        %v2713 = vadd.f32 %v2645, %v2712
        %v2714 = vpop.f32.mrb[0].mxu0
        %2715 = vdwg.mxu0
        %v2716 = vadd.f32 %v2543, %v2713
        %v2717 = vld [vmem:[#allocation20 + $0x1] sm:$0x1]
        %v2718 = vld [vmem:[#allocation22 + $0x1] sm:$0x1]
        %v2719 = vsel %vm1792, %v2716, 0.0
        %2720 = vadd.xlane.f32.xlu0 %v2719
        %v2721 = vpop.xlane.xlu0 %2720
        %v2722 = vmul.f32 %v2721, %v1796
        %v2723 = vsub.f32 %v2716, %v2722
        %v2724 = vmul.f32 %v2723, %v2723
        %v2725 = vsel %vm1792, %v2724, 0.0
        %2726 = vadd.xlane.f32.xlu0 %v2725
        %v2727 = vpop.xlane.xlu0 %2726
        %v2728 = vmul.f32 %v2727, %v1796
        %v2729 = vadd.f32 %v2728, 1e-05
        %v2730 = vrsqrt.pop %v2729
        %v2731 = vmul.f32 %v2723, %v2730
        %v2732 = vmul.f32 %v2731, %v2717
        %v2733 = vadd.f32 %v2732, %v2718
        %v2734 = vld [vmem:[#allocation23] sm:$0x1]
        %v2735 = vld [vmem:[#allocation25] sm:$0x1]
        %v2736 = vsel %vm1792, %v2733, 0.0
        %2737 = vadd.xlane.f32.xlu0 %v2736
        %v2738 = vpop.xlane.xlu0 %2737
        %v2739 = vmul.f32 %v2738, %v1796
        %v2740 = vsub.f32 %v2733, %v2739
        %v2741 = vmul.f32 %v2740, %v2740
        %v2742 = vsel %vm1792, %v2741, 0.0
        %2743 = vadd.xlane.f32.xlu0 %v2742
        %v2744 = vpop.xlane.xlu0 %2743
        %v2745 = vmul.f32 %v2744, %v1796
        %v2746 = vadd.f32 %v2745, 1e-05
        %v2747 = vrsqrt.pop %v2746
        %v2748 = vmul.f32 %v2740, %v2747
        %v2749 = vmul.f32 %v2748, %v2734
        %v2750 = vadd.f32 %v2749, %v2735
        %v2751 = vlaneseq
        %v2752 = vshrl.u32 %v2751, 7
        %v2753 = vsub.s32 0, %v2752
        %v2754 = vrot.slane %v2750, %v2753
        %v2755 = vld [vmem:[%s47] sm:$0xff]
        %v2756 = vld [vmem:[%s47 + $0x8] sm:$0xff]
        %v2757 = vld [vmem:[%s47 + $0x10] sm:$0xff]
        %v2758 = vld [vmem:[%s47 + $0x18] sm:$0xff]
        %v2759 = vld [vmem:[%s47 + $0x20] sm:$0xff]
        %v2760 = vld [vmem:[%s47 + $0x28] sm:$0xff]
        %v2761 = vld [vmem:[%s47 + $0x30] sm:$0xff]
        %v2762 = vld [vmem:[%s47 + $0x38] sm:$0xff]
        %v2763 = vld [vmem:[#allocation26] sm:$0x1]
        %v2765 = vlaneseq
        %v2766 = vshrl.u32 %v2765, 7
        %v2767 = vsub.s32 0, %v2766
        %v2768 = vrot.slane %v2763, %v2767
        %v2771 = vsel %vm1716, %v2754, 0
        %2773 = vmatprep.subr.mxu0 0.0
        %2774 = vmatpush1.msra.mxu0 %v2755
        %2775 = vmatprep.subr.mxu0 0.0
        %2776 = vmatpush1.msra.mxu0 %v2756
        %2777 = vmatprep.subr.mxu0 0.0
        %2778 = vmatpush1.msra.mxu0 %v2757
        %2779 = vmatprep.subr.mxu0 0.0
        %2780 = vmatpush1.msra.mxu0 %v2758
        %2781 = vmatprep.subr.mxu0 0.0
        %2782 = vmatpush1.msra.mxu0 %v2759
        %2783 = vmatprep.subr.mxu0 0.0
        %2784 = vmatpush1.msra.mxu0 %v2760
        %2785 = vmatprep.subr.mxu0 0.0
        %2786 = vmatpush1.msra.mxu0 %v2761
        %2787 = vmatprep.subr.mxu0 0.0
        %2788 = vmatpush1.msra.mxu0 %v2762
        %2789 = vmatprep.subr.mxu0 0.0
        %2790 = vmatpush1.msra.mxu0 0.0
        %2791 = vmatprep.subr.mxu0 0.0
        %2792 = vmatpush1.msra.mxu0 0.0
        %2793 = vmatprep.subr.mxu0 0.0
        %2794 = vmatpush1.msra.mxu0 0.0
        %2795 = vmatprep.subr.mxu0 0.0
        %2796 = vmatpush1.msra.mxu0 0.0
        %2797 = vmatprep.subr.mxu0 0.0
        %2798 = vmatpush1.msra.mxu0 0.0
        %2799 = vmatprep.subr.mxu0 0.0
        %2800 = vmatpush1.msra.mxu0 0.0
        %2801 = vmatprep.subr.mxu0 0.0
        %2802 = vmatpush1.msra.mxu0 0.0
        %2803 = vmatprep.subr.mxu0 0.0
        %2804 = vmatpush1.msra.mxu0 0.0
        %2805 = vmatprep.subr.mxu0 0.0
        %2806 = vmatpush1.msra.mxu0 0.0
        %2807 = vmatprep.subr.mxu0 0.0
        %2808 = vmatpush1.msra.mxu0 0.0
        %2809 = vmatprep.subr.mxu0 0.0
        %2810 = vmatpush1.msra.mxu0 0.0
        %2811 = vmatprep.subr.mxu0 0.0
        %2812 = vmatpush1.msra.mxu0 0.0
        %2813 = vmatprep.subr.mxu0 0.0
        %2814 = vmatpush1.msra.mxu0 0.0
        %2815 = vmatprep.subr.mxu0 0.0
        %2816 = vmatpush1.msra.mxu0 0.0
        %2817 = vmatprep.subr.mxu0 0.0
        %2818 = vmatpush1.msra.mxu0 0.0
        %2819 = vmatprep.subr.mxu0 0.0
        %2820 = vmatpush1.msra.mxu0 0.0
        %2821 = vmatprep.subr.mxu0 0.0
        %2822 = vmatpush1.msra.mxu0 0.0
        %2823 = vmatprep.subr.mxu0 0.0
        %2824 = vmatpush1.msra.mxu0 0.0
        %2825 = vmatprep.subr.mxu0 0.0
        %2826 = vmatpush1.msra.mxu0 0.0
        %2827 = vmatprep.subr.mxu0 0.0
        %2828 = vmatpush1.msra.mxu0 0.0
        %2829 = vmatprep.subr.mxu0 0.0
        %2830 = vmatpush1.msra.mxu0 0.0
        %2831 = vmatprep.subr.mxu0 0.0
        %2832 = vmatpush1.msra.mxu0 0.0
        %2833 = vmatprep.subr.mxu0 0.0
        %2834 = vmatpush1.msra.mxu0 0.0
        %2835 = vmatprep.subr.mxu0 0.0
        %2836 = vmatpush1.msra.mxu0 0.0
        %2837 = vmatprep.mubr.f32.mxu0 0.0
        %2838 = vmatmul.mubr.f32.gmra.mrb[0].mxu0 %v2771
        %v2839 = vpop.f32.mrb[0].mxu0
        %v2840 = vadd.f32 %v2768, %v2839
        %v2841 = vpop.f32.mrb[0].mxu0
        %2842 = vdwg.mxu0
        %v2843 = vld [vmem:[%s53] sm:$0x1]
        %v2844 = vld [vmem:[#allocation29] sm:$0xff]
        %v2845 = vld [vmem:[#allocation29 + $0x8] sm:$0xff]
        %v2846 = vld [vmem:[#allocation29 + $0x10] sm:$0xff]
        %v2847 = vld [vmem:[#allocation29 + $0x18] sm:$0xff]
        %v2848 = vld [vmem:[#allocation29 + $0x20] sm:$0xff]
        %v2849 = vld [vmem:[#allocation29 + $0x28] sm:$0xff]
        %v2850 = vld [vmem:[#allocation29 + $0x30] sm:$0xff]
        %v2851 = vld [vmem:[#allocation29 + $0x38] sm:$0xff]
        %v2852 = vld [vmem:[%s57] sm:$0x1]
        %v2854 = vsel %vm1716, %v2843, 0
        %2856 = vmatprep.subr.mxu0 0.0
        %2857 = vmatpush1.msra.mxu0 %v2844
        %2858 = vmatprep.subr.mxu0 0.0
        %2859 = vmatpush1.msra.mxu0 %v2845
        %2860 = vmatprep.subr.mxu0 0.0
        %2861 = vmatpush1.msra.mxu0 %v2846
        %2862 = vmatprep.subr.mxu0 0.0
        %2863 = vmatpush1.msra.mxu0 %v2847
        %2864 = vmatprep.subr.mxu0 0.0
        %2865 = vmatpush1.msra.mxu0 %v2848
        %2866 = vmatprep.subr.mxu0 0.0
        %2867 = vmatpush1.msra.mxu0 %v2849
        %2868 = vmatprep.subr.mxu0 0.0
        %2869 = vmatpush1.msra.mxu0 %v2850
        %2870 = vmatprep.subr.mxu0 0.0
        %2871 = vmatpush1.msra.mxu0 %v2851
        %2872 = vmatprep.subr.mxu0 0.0
        %2873 = vmatpush1.msra.mxu0 0.0
        %2874 = vmatprep.subr.mxu0 0.0
        %2875 = vmatpush1.msra.mxu0 0.0
        %2876 = vmatprep.subr.mxu0 0.0
        %2877 = vmatpush1.msra.mxu0 0.0
        %2878 = vmatprep.subr.mxu0 0.0
        %2879 = vmatpush1.msra.mxu0 0.0
        %2880 = vmatprep.subr.mxu0 0.0
        %2881 = vmatpush1.msra.mxu0 0.0
        %2882 = vmatprep.subr.mxu0 0.0
        %2883 = vmatpush1.msra.mxu0 0.0
        %2884 = vmatprep.subr.mxu0 0.0
        %2885 = vmatpush1.msra.mxu0 0.0
        %2886 = vmatprep.subr.mxu0 0.0
        %2887 = vmatpush1.msra.mxu0 0.0
        %2888 = vmatprep.subr.mxu0 0.0
        %2889 = vmatpush1.msra.mxu0 0.0
        %2890 = vmatprep.subr.mxu0 0.0
        %2891 = vmatpush1.msra.mxu0 0.0
        %2892 = vmatprep.subr.mxu0 0.0
        %2893 = vmatpush1.msra.mxu0 0.0
        %2894 = vmatprep.subr.mxu0 0.0
        %2895 = vmatpush1.msra.mxu0 0.0
        %2896 = vmatprep.subr.mxu0 0.0
        %2897 = vmatpush1.msra.mxu0 0.0
        %2898 = vmatprep.subr.mxu0 0.0
        %2899 = vmatpush1.msra.mxu0 0.0
        %2900 = vmatprep.subr.mxu0 0.0
        %2901 = vmatpush1.msra.mxu0 0.0
        %2902 = vmatprep.subr.mxu0 0.0
        %2903 = vmatpush1.msra.mxu0 0.0
        %2904 = vmatprep.subr.mxu0 0.0
        %2905 = vmatpush1.msra.mxu0 0.0
        %2906 = vmatprep.subr.mxu0 0.0
        %2907 = vmatpush1.msra.mxu0 0.0
        %2908 = vmatprep.subr.mxu0 0.0
        %2909 = vmatpush1.msra.mxu0 0.0
        %2910 = vmatprep.subr.mxu0 0.0
        %2911 = vmatpush1.msra.mxu0 0.0
        %2912 = vmatprep.subr.mxu0 0.0
        %2913 = vmatpush1.msra.mxu0 0.0
        %2914 = vmatprep.subr.mxu0 0.0
        %2915 = vmatpush1.msra.mxu0 0.0
        %2916 = vmatprep.subr.mxu0 0.0
        %2917 = vmatpush1.msra.mxu0 0.0
        %2918 = vmatprep.subr.mxu0 0.0
        %2919 = vmatpush1.msra.mxu0 0.0
        %2920 = vmatprep.mubr.f32.mxu0 0.0
        %2921 = vmatmul.mubr.f32.gmra.mrb[0].mxu0 %v2854
        %v2922 = vpop.f32.mrb[0].mxu0
        %v2923 = vadd.f32 %v2852, %v2922
        %v2924 = vpop.f32.mrb[0].mxu0
        %2925 = vdwg.mxu0
        %v2926 = vld [vmem:[%s75] sm:$0x1]
        %v2927 = vld [vmem:[%s77] sm:$0x1]
        %v2928 = vsel %vm1792, %v2923, 0.0
        %2929 = vadd.xlane.f32.xlu0 %v2928
        %v2930 = vpop.xlane.xlu0 %2929
        %v2931 = vmul.f32 %v2930, %v1796
        %v2932 = vsub.f32 %v2923, %v2931
        %v2933 = vmul.f32 %v2932, %v2932
        %v2934 = vsel %vm1792, %v2933, 0.0
        %2935 = vadd.xlane.f32.xlu0 %v2934
        %v2936 = vpop.xlane.xlu0 %2935
        %v2937 = vmul.f32 %v2936, %v1796
        %v2938 = vadd.f32 %v2937, 1e-05
        %v2939 = vrsqrt.pop %v2938
        %v2940 = vmul.f32 %v2932, %v2939
        %v2941 = vmul.f32 %v2940, %v2926
        %v2942 = vadd.f32 %v2941, %v2927
        %v2943 = vlaneseq
        %v2944 = vshrl.u32 %v2943, 7
        %v2945 = vsub.s32 0, %v2944
        %v2946 = vrot.slane %v2942, %v2945
        %v2947 = vld [vmem:[#allocation31] sm:$0xff]
        %v2948 = vld [vmem:[#allocation31 + $0x8] sm:$0xff]
        %v2949 = vld [vmem:[#allocation31 + $0x10] sm:$0xff]
        %v2950 = vld [vmem:[#allocation31 + $0x18] sm:$0xff]
        %v2951 = vld [vmem:[#allocation31 + $0x20] sm:$0xff]
        %v2952 = vld [vmem:[#allocation31 + $0x28] sm:$0xff]
        %v2953 = vld [vmem:[#allocation31 + $0x30] sm:$0xff]
        %v2954 = vld [vmem:[#allocation31 + $0x38] sm:$0xff]
        %v2955 = vld [vmem:[%s61] sm:$0x1]
        %v2956 = vlaneseq
        %v2957 = vshrl.u32 %v2956, 7
        %v2958 = vsub.s32 0, %v2957
        %v2959 = vrot.slane %v2955, %v2958
        %v2961 = vsel %vm1716, %v2840, 0
        %2963 = vmatprep.subr.mxu0 0.0
        %2964 = vmatpush1.msra.mxu0 %v2947
        %2965 = vmatprep.subr.mxu0 0.0
        %2966 = vmatpush1.msra.mxu0 %v2948
        %2967 = vmatprep.subr.mxu0 0.0
        %2968 = vmatpush1.msra.mxu0 %v2949
        %2969 = vmatprep.subr.mxu0 0.0
        %2970 = vmatpush1.msra.mxu0 %v2950
        %2971 = vmatprep.subr.mxu0 0.0
        %2972 = vmatpush1.msra.mxu0 %v2951
        %2973 = vmatprep.subr.mxu0 0.0
        %2974 = vmatpush1.msra.mxu0 %v2952
        %2975 = vmatprep.subr.mxu0 0.0
        %2976 = vmatpush1.msra.mxu0 %v2953
        %2977 = vmatprep.subr.mxu0 0.0
        %2978 = vmatpush1.msra.mxu0 %v2954
        %2979 = vmatprep.subr.mxu0 0.0
        %2980 = vmatpush1.msra.mxu0 0.0
        %2981 = vmatprep.subr.mxu0 0.0
        %2982 = vmatpush1.msra.mxu0 0.0
        %2983 = vmatprep.subr.mxu0 0.0
        %2984 = vmatpush1.msra.mxu0 0.0
        %2985 = vmatprep.subr.mxu0 0.0
        %2986 = vmatpush1.msra.mxu0 0.0
        %2987 = vmatprep.subr.mxu0 0.0
        %2988 = vmatpush1.msra.mxu0 0.0
        %2989 = vmatprep.subr.mxu0 0.0
        %2990 = vmatpush1.msra.mxu0 0.0
        %2991 = vmatprep.subr.mxu0 0.0
        %2992 = vmatpush1.msra.mxu0 0.0
        %2993 = vmatprep.subr.mxu0 0.0
        %2994 = vmatpush1.msra.mxu0 0.0
        %2995 = vmatprep.subr.mxu0 0.0
        %2996 = vmatpush1.msra.mxu0 0.0
        %2997 = vmatprep.subr.mxu0 0.0
        %2998 = vmatpush1.msra.mxu0 0.0
        %2999 = vmatprep.subr.mxu0 0.0
        %3000 = vmatpush1.msra.mxu0 0.0
        %3001 = vmatprep.subr.mxu0 0.0
        %3002 = vmatpush1.msra.mxu0 0.0
        %3003 = vmatprep.subr.mxu0 0.0
        %3004 = vmatpush1.msra.mxu0 0.0
        %3005 = vmatprep.subr.mxu0 0.0
        %3006 = vmatpush1.msra.mxu0 0.0
        %3007 = vmatprep.subr.mxu0 0.0
        %3008 = vmatpush1.msra.mxu0 0.0
        %3009 = vmatprep.subr.mxu0 0.0
        %3010 = vmatpush1.msra.mxu0 0.0
        %3011 = vmatprep.subr.mxu0 0.0
        %3012 = vmatpush1.msra.mxu0 0.0
        %3013 = vmatprep.subr.mxu0 0.0
        %3014 = vmatpush1.msra.mxu0 0.0
        %3015 = vmatprep.subr.mxu0 0.0
        %3016 = vmatpush1.msra.mxu0 0.0
        %3017 = vmatprep.subr.mxu0 0.0
        %3018 = vmatpush1.msra.mxu0 0.0
        %3019 = vmatprep.subr.mxu0 0.0
        %3020 = vmatpush1.msra.mxu0 0.0
        %3021 = vmatprep.subr.mxu0 0.0
        %3022 = vmatpush1.msra.mxu0 0.0
        %3023 = vmatprep.subr.mxu0 0.0
        %3024 = vmatpush1.msra.mxu0 0.0
        %3025 = vmatprep.subr.mxu0 0.0
        %3026 = vmatpush1.msra.mxu0 0.0
        %3027 = vmatprep.mubr.f32.mxu0 0.0
        %3028 = vmatmul.mubr.f32.gmra.mrb[0].mxu0 %v2961
        %v3029 = vpop.f32.mrb[0].mxu0
        %v3030 = vadd.f32 %v2959, %v3029
        %v3031 = vpop.f32.mrb[0].mxu0
        %3032 = vdwg.mxu0
        %v3033 = vld [vmem:[#allocation32] sm:$0xff]
        %v3034 = vld [vmem:[#allocation32 + $0x8] sm:$0xff]
        %v3035 = vld [vmem:[#allocation32 + $0x10] sm:$0xff]
        %v3036 = vld [vmem:[#allocation32 + $0x18] sm:$0xff]
        %v3037 = vld [vmem:[#allocation32 + $0x20] sm:$0xff]
        %v3038 = vld [vmem:[#allocation32 + $0x28] sm:$0xff]
        %v3039 = vld [vmem:[#allocation32 + $0x30] sm:$0xff]
        %v3040 = vld [vmem:[#allocation32 + $0x38] sm:$0xff]
        %v3041 = vld [vmem:[%s65] sm:$0x1]
        %v3042 = vlaneseq
        %v3043 = vshrl.u32 %v3042, 7
        %v3044 = vsub.s32 0, %v3043
        %v3045 = vrot.slane %v3041, %v3044
        %v3047 = vsel %vm1716, %v3030, 0
        %3049 = vmatprep.subr.mxu0 0.0
        %3050 = vmatpush1.msra.mxu0 %v3033
        %3051 = vmatprep.subr.mxu0 0.0
        %3052 = vmatpush1.msra.mxu0 %v3034
        %3053 = vmatprep.subr.mxu0 0.0
        %3054 = vmatpush1.msra.mxu0 %v3035
        %3055 = vmatprep.subr.mxu0 0.0
        %3056 = vmatpush1.msra.mxu0 %v3036
        %3057 = vmatprep.subr.mxu0 0.0
        %3058 = vmatpush1.msra.mxu0 %v3037
        %3059 = vmatprep.subr.mxu0 0.0
        %3060 = vmatpush1.msra.mxu0 %v3038
        %3061 = vmatprep.subr.mxu0 0.0
        %3062 = vmatpush1.msra.mxu0 %v3039
        %3063 = vmatprep.subr.mxu0 0.0
        %3064 = vmatpush1.msra.mxu0 %v3040
        %3065 = vmatprep.subr.mxu0 0.0
        %3066 = vmatpush1.msra.mxu0 0.0
        %3067 = vmatprep.subr.mxu0 0.0
        %3068 = vmatpush1.msra.mxu0 0.0
        %3069 = vmatprep.subr.mxu0 0.0
        %3070 = vmatpush1.msra.mxu0 0.0
        %3071 = vmatprep.subr.mxu0 0.0
        %3072 = vmatpush1.msra.mxu0 0.0
        %3073 = vmatprep.subr.mxu0 0.0
        %3074 = vmatpush1.msra.mxu0 0.0
        %3075 = vmatprep.subr.mxu0 0.0
        %3076 = vmatpush1.msra.mxu0 0.0
        %3077 = vmatprep.subr.mxu0 0.0
        %3078 = vmatpush1.msra.mxu0 0.0
        %3079 = vmatprep.subr.mxu0 0.0
        %3080 = vmatpush1.msra.mxu0 0.0
        %3081 = vmatprep.subr.mxu0 0.0
        %3082 = vmatpush1.msra.mxu0 0.0
        %3083 = vmatprep.subr.mxu0 0.0
        %3084 = vmatpush1.msra.mxu0 0.0
        %3085 = vmatprep.subr.mxu0 0.0
        %3086 = vmatpush1.msra.mxu0 0.0
        %3087 = vmatprep.subr.mxu0 0.0
        %3088 = vmatpush1.msra.mxu0 0.0
        %3089 = vmatprep.subr.mxu0 0.0
        %3090 = vmatpush1.msra.mxu0 0.0
        %3091 = vmatprep.subr.mxu0 0.0
        %3092 = vmatpush1.msra.mxu0 0.0
        %3093 = vmatprep.subr.mxu0 0.0
        %3094 = vmatpush1.msra.mxu0 0.0
        %3095 = vmatprep.subr.mxu0 0.0
        %3096 = vmatpush1.msra.mxu0 0.0
        %3097 = vmatprep.subr.mxu0 0.0
        %3098 = vmatpush1.msra.mxu0 0.0
        %3099 = vmatprep.subr.mxu0 0.0
        %3100 = vmatpush1.msra.mxu0 0.0
        %3101 = vmatprep.subr.mxu0 0.0
        %3102 = vmatpush1.msra.mxu0 0.0
        %3103 = vmatprep.subr.mxu0 0.0
        %3104 = vmatpush1.msra.mxu0 0.0
        %3105 = vmatprep.subr.mxu0 0.0
        %3106 = vmatpush1.msra.mxu0 0.0
        %3107 = vmatprep.subr.mxu0 0.0
        %3108 = vmatpush1.msra.mxu0 0.0
        %3109 = vmatprep.subr.mxu0 0.0
        %3110 = vmatpush1.msra.mxu0 0.0
        %3111 = vmatprep.subr.mxu0 0.0
        %3112 = vmatpush1.msra.mxu0 0.0
        %3113 = vmatprep.mubr.f32.mxu0 0.0
        %3114 = vmatmul.mubr.f32.gmra.mrb[0].mxu0 %v3047
        %v3115 = vpop.f32.mrb[0].mxu0
        %v3116 = vadd.f32 %v3045, %v3115
        %v3117 = vpop.f32.mrb[0].mxu0
        %3118 = vdwg.mxu0
        %v3119 = vadd.f32 %v2946, %v3116
        %v3120 = vld [vmem:[%s79] sm:$0x1]
        %v3121 = vld [vmem:[%s81] sm:$0x1]
        %vm3122 = vcmask 519168
        %v3123 = vsel %vm3122, %v3119, 0.0
        %3124 = vadd.xlane.f32.xlu0 %v3123
        %v3125 = vpop.xlane.xlu0 %3124
        %v3126 = vmul.f32 %v3125, %v1796
        %v3127 = vsub.f32 %v3119, %v3126
        %v3128 = vmul.f32 %v3127, %v3127
        %v3129 = vsel %vm3122, %v3128, 0.0
        %3130 = vadd.xlane.f32.xlu0 %v3129
        %v3131 = vpop.xlane.xlu0 %3130
        %v3132 = vmul.f32 %v3131, %v1796
        %v3133 = vadd.f32 %v3132, 1e-05
        %v3134 = vrsqrt.pop %v3133
        %v3135 = vmul.f32 %v3127, %v3134
        %v3136 = vlaneseq
        %v3137 = vshrl.u32 %v3136, 7
        %v3138 = vsub.s32 0, %v3137
        %v3139 = vrot.slane %v3120, %v3138
        %v3140 = vmul.f32 %v3135, %v3139
        %v3141 = vlaneseq
        %v3142 = vshrl.u32 %v3141, 7
        %v3143 = vsub.s32 0, %v3142
        %v3144 = vrot.slane %v3121, %v3143
        %v3145 = vadd.f32 %v3140, %v3144
        %v3146 = vld [vmem:[#allocation34] sm:$0xff]
        %v3147 = vld [vmem:[#allocation34 + $0x8] sm:$0xff]
        %v3148 = vld [vmem:[#allocation34 + $0x10] sm:$0xff]
        %v3149 = vld [vmem:[#allocation34 + $0x18] sm:$0xff]
        %v3150 = vld [vmem:[#allocation34 + $0x20] sm:$0xff]
        %v3151 = vld [vmem:[#allocation34 + $0x28] sm:$0xff]
        %v3152 = vld [vmem:[#allocation34 + $0x30] sm:$0xff]
        %v3153 = vld [vmem:[#allocation34 + $0x38] sm:$0xff]
        %v3154 = vld [vmem:[%s69] sm:$0x1]
        %v3155 = vlaneseq
        %v3156 = vshrl.u32 %v3155, 7
        %v3157 = vsub.s32 0, %v3156
        %v3158 = vrot.slane %v3154, %v3157
        %v3160 = vsel %vm1716, %v3145, 0
        %3162 = vmatprep.subr.mxu0 0.0
        %3163 = vmatpush1.msra.mxu0 %v3146
        %3164 = vmatprep.subr.mxu0 0.0
        %3165 = vmatpush1.msra.mxu0 %v3147
        %3166 = vmatprep.subr.mxu0 0.0
        %3167 = vmatpush1.msra.mxu0 %v3148
        %3168 = vmatprep.subr.mxu0 0.0
        %3169 = vmatpush1.msra.mxu0 %v3149
        %3170 = vmatprep.subr.mxu0 0.0
        %3171 = vmatpush1.msra.mxu0 %v3150
        %3172 = vmatprep.subr.mxu0 0.0
        %3173 = vmatpush1.msra.mxu0 %v3151
        %3174 = vmatprep.subr.mxu0 0.0
        %3175 = vmatpush1.msra.mxu0 %v3152
        %3176 = vmatprep.subr.mxu0 0.0
        %3177 = vmatpush1.msra.mxu0 %v3153
        %3178 = vmatprep.subr.mxu0 0.0
        %3179 = vmatpush1.msra.mxu0 0.0
        %3180 = vmatprep.subr.mxu0 0.0
        %3181 = vmatpush1.msra.mxu0 0.0
        %3182 = vmatprep.subr.mxu0 0.0
        %3183 = vmatpush1.msra.mxu0 0.0
        %3184 = vmatprep.subr.mxu0 0.0
        %3185 = vmatpush1.msra.mxu0 0.0
        %3186 = vmatprep.subr.mxu0 0.0
        %3187 = vmatpush1.msra.mxu0 0.0
        %3188 = vmatprep.subr.mxu0 0.0
        %3189 = vmatpush1.msra.mxu0 0.0
        %3190 = vmatprep.subr.mxu0 0.0
        %3191 = vmatpush1.msra.mxu0 0.0
        %3192 = vmatprep.subr.mxu0 0.0
        %3193 = vmatpush1.msra.mxu0 0.0
        %3194 = vmatprep.subr.mxu0 0.0
        %3195 = vmatpush1.msra.mxu0 0.0
        %3196 = vmatprep.subr.mxu0 0.0
        %3197 = vmatpush1.msra.mxu0 0.0
        %3198 = vmatprep.subr.mxu0 0.0
        %3199 = vmatpush1.msra.mxu0 0.0
        %3200 = vmatprep.subr.mxu0 0.0
        %3201 = vmatpush1.msra.mxu0 0.0
        %3202 = vmatprep.subr.mxu0 0.0
        %3203 = vmatpush1.msra.mxu0 0.0
        %3204 = vmatprep.subr.mxu0 0.0
        %3205 = vmatpush1.msra.mxu0 0.0
        %3206 = vmatprep.subr.mxu0 0.0
        %3207 = vmatpush1.msra.mxu0 0.0
        %3208 = vmatprep.subr.mxu0 0.0
        %3209 = vmatpush1.msra.mxu0 0.0
        %3210 = vmatprep.subr.mxu0 0.0
        %3211 = vmatpush1.msra.mxu0 0.0
        %3212 = vmatprep.subr.mxu0 0.0
        %3213 = vmatpush1.msra.mxu0 0.0
        %3214 = vmatprep.subr.mxu0 0.0
        %3215 = vmatpush1.msra.mxu0 0.0
        %3216 = vmatprep.subr.mxu0 0.0
        %3217 = vmatpush1.msra.mxu0 0.0
        %3218 = vmatprep.subr.mxu0 0.0
        %3219 = vmatpush1.msra.mxu0 0.0
        %3220 = vmatprep.subr.mxu0 0.0
        %3221 = vmatpush1.msra.mxu0 0.0
        %3222 = vmatprep.subr.mxu0 0.0
        %3223 = vmatpush1.msra.mxu0 0.0
        %3224 = vmatprep.subr.mxu0 0.0
        %3225 = vmatpush1.msra.mxu0 0.0
        %3226 = vmatprep.mubr.f32.mxu0 0.0
        %3227 = vmatmul.mubr.f32.gmra.mrb[0].mxu0 %v3160
        %v3228 = vpop.f32.mrb[0].mxu0
        %v3229 = vadd.f32 %v3158, %v3228
        %v3230 = vpop.f32.mrb[0].mxu0
        %3231 = vdwg.mxu0
        %v3232 = vmax.f32 %v3229, 0.0
        %v3233 = vld [vmem:[%s71] sm:$0xff]
        %v3234 = vld [vmem:[%s71 + $0x8] sm:$0xff]
        %v3235 = vld [vmem:[%s71 + $0x10] sm:$0xff]
        %v3236 = vld [vmem:[%s71 + $0x18] sm:$0xff]
        %v3237 = vld [vmem:[%s71 + $0x20] sm:$0xff]
        %v3238 = vld [vmem:[%s71 + $0x28] sm:$0xff]
        %v3239 = vld [vmem:[%s71 + $0x30] sm:$0xff]
        %v3240 = vld [vmem:[%s71 + $0x38] sm:$0xff]
        %v3241 = vld [vmem:[%s71 + $0x40] sm:$0xff]
        %v3242 = vld [vmem:[%s71 + $0x48] sm:$0xff]
        %v3243 = vld [vmem:[%s71 + $0x50] sm:$0xff]
        %v3244 = vld [vmem:[%s71 + $0x58] sm:$0xff]
        %v3245 = vld [vmem:[%s71 + $0x60] sm:$0xff]
        %v3246 = vld [vmem:[%s71 + $0x68] sm:$0xff]
        %v3247 = vld [vmem:[%s71 + $0x70] sm:$0xff]
        %v3248 = vld [vmem:[%s71 + $0x78] sm:$0xff]
        %v3249 = vld [vmem:[%s73] sm:$0x1]
        %v3250 = vlaneseq
        %v3251 = vshrl.u32 %v3250, 7
        %v3252 = vsub.s32 0, %v3251
        %v3253 = vrot.slane %v3249, %v3252
        %3254 = vmatprep.subr.mxu0 0.0
        %3255 = vmatpush1.msra.mxu0 %v3233
        %3256 = vmatprep.subr.mxu0 0.0
        %3257 = vmatpush1.msra.mxu0 %v3234
        %3258 = vmatprep.subr.mxu0 0.0
        %3259 = vmatpush1.msra.mxu0 %v3235
        %3260 = vmatprep.subr.mxu0 0.0
        %3261 = vmatpush1.msra.mxu0 %v3236
        %3262 = vmatprep.subr.mxu0 0.0
        %3263 = vmatpush1.msra.mxu0 %v3237
        %3264 = vmatprep.subr.mxu0 0.0
        %3265 = vmatpush1.msra.mxu0 %v3238
        %3266 = vmatprep.subr.mxu0 0.0
        %3267 = vmatpush1.msra.mxu0 %v3239
        %3268 = vmatprep.subr.mxu0 0.0
        %3269 = vmatpush1.msra.mxu0 %v3240
        %3270 = vmatprep.subr.mxu0 0.0
        %3271 = vmatpush1.msra.mxu0 %v3241
        %3272 = vmatprep.subr.mxu0 0.0
        %3273 = vmatpush1.msra.mxu0 %v3242
        %3274 = vmatprep.subr.mxu0 0.0
        %3275 = vmatpush1.msra.mxu0 %v3243
        %3276 = vmatprep.subr.mxu0 0.0
        %3277 = vmatpush1.msra.mxu0 %v3244
        %3278 = vmatprep.subr.mxu0 0.0
        %3279 = vmatpush1.msra.mxu0 %v3245
        %3280 = vmatprep.subr.mxu0 0.0
        %3281 = vmatpush1.msra.mxu0 %v3246
        %3282 = vmatprep.subr.mxu0 0.0
        %3283 = vmatpush1.msra.mxu0 %v3247
        %3284 = vmatprep.subr.mxu0 0.0
        %3285 = vmatpush1.msra.mxu0 %v3248
        %3286 = vmatprep.subr.mxu0 0.0
        %3287 = vmatpush1.msra.mxu0 0.0
        %3288 = vmatprep.subr.mxu0 0.0
        %3289 = vmatpush1.msra.mxu0 0.0
        %3290 = vmatprep.subr.mxu0 0.0
        %3291 = vmatpush1.msra.mxu0 0.0
        %3292 = vmatprep.subr.mxu0 0.0
        %3293 = vmatpush1.msra.mxu0 0.0
        %3294 = vmatprep.subr.mxu0 0.0
        %3295 = vmatpush1.msra.mxu0 0.0
        %3296 = vmatprep.subr.mxu0 0.0
        %3297 = vmatpush1.msra.mxu0 0.0
        %3298 = vmatprep.subr.mxu0 0.0
        %3299 = vmatpush1.msra.mxu0 0.0
        %3300 = vmatprep.subr.mxu0 0.0
        %3301 = vmatpush1.msra.mxu0 0.0
        %3302 = vmatprep.subr.mxu0 0.0
        %3303 = vmatpush1.msra.mxu0 0.0
        %3304 = vmatprep.subr.mxu0 0.0
        %3305 = vmatpush1.msra.mxu0 0.0
        %3306 = vmatprep.subr.mxu0 0.0
        %3307 = vmatpush1.msra.mxu0 0.0
        %3308 = vmatprep.subr.mxu0 0.0
        %3309 = vmatpush1.msra.mxu0 0.0
        %3310 = vmatprep.subr.mxu0 0.0
        %3311 = vmatpush1.msra.mxu0 0.0
        %3312 = vmatprep.subr.mxu0 0.0
        %3313 = vmatpush1.msra.mxu0 0.0
        %3314 = vmatprep.subr.mxu0 0.0
        %3315 = vmatpush1.msra.mxu0 0.0
        %3316 = vmatprep.subr.mxu0 0.0
        %3317 = vmatpush1.msra.mxu0 0.0
        %3318 = vmatprep.mubr.f32.mxu0 0.0
        %3319 = vmatmul.mubr.f32.gmra.mrb[0].mxu0 %v3232
        %v3320 = vpop.f32.mrb[0].mxu0
        %v3321 = vadd.f32 %v3253, %v3320
        %v3322 = vpop.f32.mrb[0].mxu0
        %3323 = vdwg.mxu0
        %v3324 = vadd.f32 %v3145, %v3321
        %v3325 = vld [vmem:[%s83] sm:$0x1]
        %v3326 = vld [vmem:[%s85] sm:$0x1]
        %v3327 = vsel %vm3122, %v3324, 0.0
        %3328 = vadd.xlane.f32.xlu0 %v3327
        %v3329 = vpop.xlane.xlu0 %3328
        %v3330 = vmul.f32 %v3329, %v1796
        %v3331 = vsub.f32 %v3324, %v3330
        %v3332 = vmul.f32 %v3331, %v3331
        %v3333 = vsel %vm3122, %v3332, 0.0
        %3334 = vadd.xlane.f32.xlu0 %v3333
        %v3335 = vpop.xlane.xlu0 %3334
        %v3336 = vmul.f32 %v3335, %v1796
        %v3337 = vadd.f32 %v3336, 1e-05
        %v3338 = vrsqrt.pop %v3337
        %v3339 = vmul.f32 %v3331, %v3338
        %v3340 = vlaneseq
        %v3341 = vshrl.u32 %v3340, 7
        %v3342 = vsub.s32 0, %v3341
        %v3343 = vrot.slane %v3325, %v3342
        %v3344 = vmul.f32 %v3339, %v3343
        %v3345 = vlaneseq
        %v3346 = vshrl.u32 %v3345, 7
        %v3347 = vsub.s32 0, %v3346
        %v3348 = vrot.slane %v3326, %v3347
        %v3349 = vadd.f32 %v3344, %v3348
        %s3350 = scalar_lea.vmem [#allocation28], 64
        %v3351 = vld [vmem:[%s3350] sm:$0xff]
        %v3352 = vld [vmem:[%s3350 + $0x8] sm:$0xff]
        %v3353 = vld [vmem:[%s3350 + $0x10] sm:$0xff]
        %v3354 = vld [vmem:[%s3350 + $0x18] sm:$0xff]
        %v3355 = vld [vmem:[%s3350 + $0x20] sm:$0xff]
        %v3356 = vld [vmem:[%s3350 + $0x28] sm:$0xff]
        %v3357 = vld [vmem:[%s3350 + $0x30] sm:$0xff]
        %v3358 = vld [vmem:[%s3350 + $0x38] sm:$0xff]
        %v3359 = vld [vmem:[%s53 + $0x1] sm:$0x1]
        %v3360 = vlaneseq
        %v3361 = vshrl.u32 %v3360, 7
        %v3362 = vsub.s32 0, %v3361
        %v3363 = vrot.slane %v3359, %v3362
        %v3365 = vsel %vm1716, %v3349, 0
        %3367 = vmatprep.subr.mxu0 0.0
        %3368 = vmatpush1.msra.mxu0 %v3351
        %3369 = vmatprep.subr.mxu0 0.0
        %3370 = vmatpush1.msra.mxu0 %v3352
        %3371 = vmatprep.subr.mxu0 0.0
        %3372 = vmatpush1.msra.mxu0 %v3353
        %3373 = vmatprep.subr.mxu0 0.0
        %3374 = vmatpush1.msra.mxu0 %v3354
        %3375 = vmatprep.subr.mxu0 0.0
        %3376 = vmatpush1.msra.mxu0 %v3355
        %3377 = vmatprep.subr.mxu0 0.0
        %3378 = vmatpush1.msra.mxu0 %v3356
        %3379 = vmatprep.subr.mxu0 0.0
        %3380 = vmatpush1.msra.mxu0 %v3357
        %3381 = vmatprep.subr.mxu0 0.0
        %3382 = vmatpush1.msra.mxu0 %v3358
        %3383 = vmatprep.subr.mxu0 0.0
        %3384 = vmatpush1.msra.mxu0 0.0
        %3385 = vmatprep.subr.mxu0 0.0
        %3386 = vmatpush1.msra.mxu0 0.0
        %3387 = vmatprep.subr.mxu0 0.0
        %3388 = vmatpush1.msra.mxu0 0.0
        %3389 = vmatprep.subr.mxu0 0.0
        %3390 = vmatpush1.msra.mxu0 0.0
        %3391 = vmatprep.subr.mxu0 0.0
        %3392 = vmatpush1.msra.mxu0 0.0
        %3393 = vmatprep.subr.mxu0 0.0
        %3394 = vmatpush1.msra.mxu0 0.0
        %3395 = vmatprep.subr.mxu0 0.0
        %3396 = vmatpush1.msra.mxu0 0.0
        %3397 = vmatprep.subr.mxu0 0.0
        %3398 = vmatpush1.msra.mxu0 0.0
        %3399 = vmatprep.subr.mxu0 0.0
        %3400 = vmatpush1.msra.mxu0 0.0
        %3401 = vmatprep.subr.mxu0 0.0
        %3402 = vmatpush1.msra.mxu0 0.0
        %3403 = vmatprep.subr.mxu0 0.0
        %3404 = vmatpush1.msra.mxu0 0.0
        %3405 = vmatprep.subr.mxu0 0.0
        %3406 = vmatpush1.msra.mxu0 0.0
        %3407 = vmatprep.subr.mxu0 0.0
        %3408 = vmatpush1.msra.mxu0 0.0
        %3409 = vmatprep.subr.mxu0 0.0
        %3410 = vmatpush1.msra.mxu0 0.0
        %3411 = vmatprep.subr.mxu0 0.0
        %3412 = vmatpush1.msra.mxu0 0.0
        %3413 = vmatprep.subr.mxu0 0.0
        %3414 = vmatpush1.msra.mxu0 0.0
        %3415 = vmatprep.subr.mxu0 0.0
        %3416 = vmatpush1.msra.mxu0 0.0
        %3417 = vmatprep.subr.mxu0 0.0
        %3418 = vmatpush1.msra.mxu0 0.0
        %3419 = vmatprep.subr.mxu0 0.0
        %3420 = vmatpush1.msra.mxu0 0.0
        %3421 = vmatprep.subr.mxu0 0.0
        %3422 = vmatpush1.msra.mxu0 0.0
        %3423 = vmatprep.subr.mxu0 0.0
        %3424 = vmatpush1.msra.mxu0 0.0
        %3425 = vmatprep.subr.mxu0 0.0
        %3426 = vmatpush1.msra.mxu0 0.0
        %3427 = vmatprep.subr.mxu0 0.0
        %3428 = vmatpush1.msra.mxu0 0.0
        %3429 = vmatprep.subr.mxu0 0.0
        %3430 = vmatpush1.msra.mxu0 0.0
        %3431 = vmatprep.mubr.f32.mxu0 0.0
        %3432 = vmatmul.mubr.f32.gmra.mrb[0].mxu0 %v3365
        %v3433 = vpop.f32.mrb[0].mxu0
        %v3434 = vadd.f32 %v3363, %v3433
        %v3435 = vpop.f32.mrb[0].mxu0
        %3436 = vdwg.mxu0
        %s3437 = scalar_lea.vmem [#allocation29], 64
        %v3438 = vld [vmem:[%s3437] sm:$0xff]
        %v3439 = vld [vmem:[%s3437 + $0x8] sm:$0xff]
        %v3440 = vld [vmem:[%s3437 + $0x10] sm:$0xff]
        %v3441 = vld [vmem:[%s3437 + $0x18] sm:$0xff]
        %v3442 = vld [vmem:[%s3437 + $0x20] sm:$0xff]
        %v3443 = vld [vmem:[%s3437 + $0x28] sm:$0xff]
        %v3444 = vld [vmem:[%s3437 + $0x30] sm:$0xff]
        %v3445 = vld [vmem:[%s3437 + $0x38] sm:$0xff]
        %v3446 = vld [vmem:[%s57 + $0x1] sm:$0x1]
        %v3447 = vlaneseq
        %v3448 = vshrl.u32 %v3447, 7
        %v3449 = vsub.s32 0, %v3448
        %v3450 = vrot.slane %v3446, %v3449
        %v3452 = vsel %vm1716, %v3434, 0
        %3454 = vmatprep.subr.mxu0 0.0
        %3455 = vmatpush1.msra.mxu0 %v3438
        %3456 = vmatprep.subr.mxu0 0.0
        %3457 = vmatpush1.msra.mxu0 %v3439
        %3458 = vmatprep.subr.mxu0 0.0
        %3459 = vmatpush1.msra.mxu0 %v3440
        %3460 = vmatprep.subr.mxu0 0.0
        %3461 = vmatpush1.msra.mxu0 %v3441
        %3462 = vmatprep.subr.mxu0 0.0
        %3463 = vmatpush1.msra.mxu0 %v3442
        %3464 = vmatprep.subr.mxu0 0.0
        %3465 = vmatpush1.msra.mxu0 %v3443
        %3466 = vmatprep.subr.mxu0 0.0
        %3467 = vmatpush1.msra.mxu0 %v3444
        %3468 = vmatprep.subr.mxu0 0.0
        %3469 = vmatpush1.msra.mxu0 %v3445
        %3470 = vmatprep.subr.mxu0 0.0
        %3471 = vmatpush1.msra.mxu0 0.0
        %3472 = vmatprep.subr.mxu0 0.0
        %3473 = vmatpush1.msra.mxu0 0.0
        %3474 = vmatprep.subr.mxu0 0.0
        %3475 = vmatpush1.msra.mxu0 0.0
        %3476 = vmatprep.subr.mxu0 0.0
        %3477 = vmatpush1.msra.mxu0 0.0
        %3478 = vmatprep.subr.mxu0 0.0
        %3479 = vmatpush1.msra.mxu0 0.0
        %3480 = vmatprep.subr.mxu0 0.0
        %3481 = vmatpush1.msra.mxu0 0.0
        %3482 = vmatprep.subr.mxu0 0.0
        %3483 = vmatpush1.msra.mxu0 0.0
        %3484 = vmatprep.subr.mxu0 0.0
        %3485 = vmatpush1.msra.mxu0 0.0
        %3486 = vmatprep.subr.mxu0 0.0
        %3487 = vmatpush1.msra.mxu0 0.0
        %3488 = vmatprep.subr.mxu0 0.0
        %3489 = vmatpush1.msra.mxu0 0.0
        %3490 = vmatprep.subr.mxu0 0.0
        %3491 = vmatpush1.msra.mxu0 0.0
        %3492 = vmatprep.subr.mxu0 0.0
        %3493 = vmatpush1.msra.mxu0 0.0
        %3494 = vmatprep.subr.mxu0 0.0
        %3495 = vmatpush1.msra.mxu0 0.0
        %3496 = vmatprep.subr.mxu0 0.0
        %3497 = vmatpush1.msra.mxu0 0.0
        %3498 = vmatprep.subr.mxu0 0.0
        %3499 = vmatpush1.msra.mxu0 0.0
        %3500 = vmatprep.subr.mxu0 0.0
        %3501 = vmatpush1.msra.mxu0 0.0
        %3502 = vmatprep.subr.mxu0 0.0
        %3503 = vmatpush1.msra.mxu0 0.0
        %3504 = vmatprep.subr.mxu0 0.0
        %3505 = vmatpush1.msra.mxu0 0.0
        %3506 = vmatprep.subr.mxu0 0.0
        %3507 = vmatpush1.msra.mxu0 0.0
        %3508 = vmatprep.subr.mxu0 0.0
        %3509 = vmatpush1.msra.mxu0 0.0
        %3510 = vmatprep.subr.mxu0 0.0
        %3511 = vmatpush1.msra.mxu0 0.0
        %3512 = vmatprep.subr.mxu0 0.0
        %3513 = vmatpush1.msra.mxu0 0.0
        %3514 = vmatprep.subr.mxu0 0.0
        %3515 = vmatpush1.msra.mxu0 0.0
        %3516 = vmatprep.subr.mxu0 0.0
        %3517 = vmatpush1.msra.mxu0 0.0
        %3518 = vmatprep.mubr.f32.mxu0 0.0
        %3519 = vmatmul.mubr.f32.gmra.mrb[0].mxu0 %v3452
        %v3520 = vpop.f32.mrb[0].mxu0
        %v3521 = vadd.f32 %v3450, %v3520
        %v3522 = vpop.f32.mrb[0].mxu0
        %3523 = vdwg.mxu0
        %v3524 = vadd.f32 %v3349, %v3521
        %v3525 = vld [vmem:[%s75 + $0x1] sm:$0x1]
        %v3526 = vld [vmem:[%s77 + $0x1] sm:$0x1]
        %v3527 = vsel %vm3122, %v3524, 0.0
        %3528 = vadd.xlane.f32.xlu0 %v3527
        %v3529 = vpop.xlane.xlu0 %3528
        %v3530 = vmul.f32 %v3529, %v1796
        %v3531 = vsub.f32 %v3524, %v3530
        %v3532 = vmul.f32 %v3531, %v3531
        %v3533 = vsel %vm3122, %v3532, 0.0
        %3534 = vadd.xlane.f32.xlu0 %v3533
        %v3535 = vpop.xlane.xlu0 %3534
        %v3536 = vmul.f32 %v3535, %v1796
        %v3537 = vadd.f32 %v3536, 1e-05
        %v3538 = vrsqrt.pop %v3537
        %v3539 = vmul.f32 %v3531, %v3538
        %v3540 = vlaneseq
        %v3541 = vshrl.u32 %v3540, 7
        %v3542 = vsub.s32 0, %v3541
        %v3543 = vrot.slane %v3525, %v3542
        %v3544 = vmul.f32 %v3539, %v3543
        %v3545 = vlaneseq
        %v3546 = vshrl.u32 %v3545, 7
        %v3547 = vsub.s32 0, %v3546
        %v3548 = vrot.slane %v3526, %v3547
        %v3549 = vadd.f32 %v3544, %v3548
        %s3550 = scalar_lea.vmem [#allocation31], 64
        %v3551 = vld [vmem:[%s3550] sm:$0xff]
        %v3552 = vld [vmem:[%s3550 + $0x8] sm:$0xff]
        %v3553 = vld [vmem:[%s3550 + $0x10] sm:$0xff]
        %v3554 = vld [vmem:[%s3550 + $0x18] sm:$0xff]
        %v3555 = vld [vmem:[%s3550 + $0x20] sm:$0xff]
        %v3556 = vld [vmem:[%s3550 + $0x28] sm:$0xff]
        %v3557 = vld [vmem:[%s3550 + $0x30] sm:$0xff]
        %v3558 = vld [vmem:[%s3550 + $0x38] sm:$0xff]
        %v3559 = vld [vmem:[%s61 + $0x1] sm:$0x1]
        %v3560 = vlaneseq
        %v3561 = vshrl.u32 %v3560, 7
        %v3562 = vsub.s32 0, %v3561
        %v3563 = vrot.slane %v3559, %v3562
        %3564 = vmatprep.subr.mxu0 0.0
        %3565 = vmatpush1.msra.mxu0 %v3551
        %3566 = vmatprep.subr.mxu0 0.0
        %3567 = vmatpush1.msra.mxu0 %v3552
        %3568 = vmatprep.subr.mxu0 0.0
        %3569 = vmatpush1.msra.mxu0 %v3553
        %3570 = vmatprep.subr.mxu0 0.0
        %3571 = vmatpush1.msra.mxu0 %v3554
        %3572 = vmatprep.subr.mxu0 0.0
        %3573 = vmatpush1.msra.mxu0 %v3555
        %3574 = vmatprep.subr.mxu0 0.0
        %3575 = vmatpush1.msra.mxu0 %v3556
        %3576 = vmatprep.subr.mxu0 0.0
        %3577 = vmatpush1.msra.mxu0 %v3557
        %3578 = vmatprep.subr.mxu0 0.0
        %3579 = vmatpush1.msra.mxu0 %v3558
        %3580 = vmatprep.subr.mxu0 0.0
        %3581 = vmatpush1.msra.mxu0 0.0
        %3582 = vmatprep.subr.mxu0 0.0
        %3583 = vmatpush1.msra.mxu0 0.0
        %3584 = vmatprep.subr.mxu0 0.0
        %3585 = vmatpush1.msra.mxu0 0.0
        %3586 = vmatprep.subr.mxu0 0.0
        %3587 = vmatpush1.msra.mxu0 0.0
        %3588 = vmatprep.subr.mxu0 0.0
        %3589 = vmatpush1.msra.mxu0 0.0
        %3590 = vmatprep.subr.mxu0 0.0
        %3591 = vmatpush1.msra.mxu0 0.0
        %3592 = vmatprep.subr.mxu0 0.0
        %3593 = vmatpush1.msra.mxu0 0.0
        %3594 = vmatprep.subr.mxu0 0.0
        %3595 = vmatpush1.msra.mxu0 0.0
        %3596 = vmatprep.subr.mxu0 0.0
        %3597 = vmatpush1.msra.mxu0 0.0
        %3598 = vmatprep.subr.mxu0 0.0
        %3599 = vmatpush1.msra.mxu0 0.0
        %3600 = vmatprep.subr.mxu0 0.0
        %3601 = vmatpush1.msra.mxu0 0.0
        %3602 = vmatprep.subr.mxu0 0.0
        %3603 = vmatpush1.msra.mxu0 0.0
        %3604 = vmatprep.subr.mxu0 0.0
        %3605 = vmatpush1.msra.mxu0 0.0
        %3606 = vmatprep.subr.mxu0 0.0
        %3607 = vmatpush1.msra.mxu0 0.0
        %3608 = vmatprep.subr.mxu0 0.0
        %3609 = vmatpush1.msra.mxu0 0.0
        %3610 = vmatprep.subr.mxu0 0.0
        %3611 = vmatpush1.msra.mxu0 0.0
        %3612 = vmatprep.subr.mxu0 0.0
        %3613 = vmatpush1.msra.mxu0 0.0
        %3614 = vmatprep.subr.mxu0 0.0
        %3615 = vmatpush1.msra.mxu0 0.0
        %3616 = vmatprep.subr.mxu0 0.0
        %3617 = vmatpush1.msra.mxu0 0.0
        %3618 = vmatprep.subr.mxu0 0.0
        %3619 = vmatpush1.msra.mxu0 0.0
        %3620 = vmatprep.subr.mxu0 0.0
        %3621 = vmatpush1.msra.mxu0 0.0
        %3622 = vmatprep.subr.mxu0 0.0
        %3623 = vmatpush1.msra.mxu0 0.0
        %3624 = vmatprep.subr.mxu0 0.0
        %3625 = vmatpush1.msra.mxu0 0.0
        %3626 = vmatprep.subr.mxu0 0.0
        %3627 = vmatpush1.msra.mxu0 0.0
        %3628 = vmatprep.mubr.f32.mxu0 0.0
        %3629 = vmatmul.mubr.f32.gmra.mrb[0].mxu0 %v2961
        %v3630 = vpop.f32.mrb[0].mxu0
        %v3631 = vadd.f32 %v3563, %v3630
        %v3632 = vpop.f32.mrb[0].mxu0
        %3633 = vdwg.mxu0
        %s3634 = scalar_lea.vmem [#allocation32], 64
        %v3635 = vld [vmem:[%s3634] sm:$0xff]
        %v3636 = vld [vmem:[%s3634 + $0x8] sm:$0xff]
        %v3637 = vld [vmem:[%s3634 + $0x10] sm:$0xff]
        %v3638 = vld [vmem:[%s3634 + $0x18] sm:$0xff]
        %v3639 = vld [vmem:[%s3634 + $0x20] sm:$0xff]
        %v3640 = vld [vmem:[%s3634 + $0x28] sm:$0xff]
        %v3641 = vld [vmem:[%s3634 + $0x30] sm:$0xff]
        %v3642 = vld [vmem:[%s3634 + $0x38] sm:$0xff]
        %v3643 = vld [vmem:[%s65 + $0x1] sm:$0x1]
        %v3644 = vlaneseq
        %v3645 = vshrl.u32 %v3644, 7
        %v3646 = vsub.s32 0, %v3645
        %v3647 = vrot.slane %v3643, %v3646
        %v3649 = vsel %vm1716, %v3631, 0
        %3651 = vmatprep.subr.mxu0 0.0
        %3652 = vmatpush1.msra.mxu0 %v3635
        %3653 = vmatprep.subr.mxu0 0.0
        %3654 = vmatpush1.msra.mxu0 %v3636
        %3655 = vmatprep.subr.mxu0 0.0
        %3656 = vmatpush1.msra.mxu0 %v3637
        %3657 = vmatprep.subr.mxu0 0.0
        %3658 = vmatpush1.msra.mxu0 %v3638
        %3659 = vmatprep.subr.mxu0 0.0
        %3660 = vmatpush1.msra.mxu0 %v3639
        %3661 = vmatprep.subr.mxu0 0.0
        %3662 = vmatpush1.msra.mxu0 %v3640
        %3663 = vmatprep.subr.mxu0 0.0
        %3664 = vmatpush1.msra.mxu0 %v3641
        %3665 = vmatprep.subr.mxu0 0.0
        %3666 = vmatpush1.msra.mxu0 %v3642
        %3667 = vmatprep.subr.mxu0 0.0
        %3668 = vmatpush1.msra.mxu0 0.0
        %3669 = vmatprep.subr.mxu0 0.0
        %3670 = vmatpush1.msra.mxu0 0.0
        %3671 = vmatprep.subr.mxu0 0.0
        %3672 = vmatpush1.msra.mxu0 0.0
        %3673 = vmatprep.subr.mxu0 0.0
        %3674 = vmatpush1.msra.mxu0 0.0
        %3675 = vmatprep.subr.mxu0 0.0
        %3676 = vmatpush1.msra.mxu0 0.0
        %3677 = vmatprep.subr.mxu0 0.0
        %3678 = vmatpush1.msra.mxu0 0.0
        %3679 = vmatprep.subr.mxu0 0.0
        %3680 = vmatpush1.msra.mxu0 0.0
        %3681 = vmatprep.subr.mxu0 0.0
        %3682 = vmatpush1.msra.mxu0 0.0
        %3683 = vmatprep.subr.mxu0 0.0
        %3684 = vmatpush1.msra.mxu0 0.0
        %3685 = vmatprep.subr.mxu0 0.0
        %3686 = vmatpush1.msra.mxu0 0.0
        %3687 = vmatprep.subr.mxu0 0.0
        %3688 = vmatpush1.msra.mxu0 0.0
        %3689 = vmatprep.subr.mxu0 0.0
        %3690 = vmatpush1.msra.mxu0 0.0
        %3691 = vmatprep.subr.mxu0 0.0
        %3692 = vmatpush1.msra.mxu0 0.0
        %3693 = vmatprep.subr.mxu0 0.0
        %3694 = vmatpush1.msra.mxu0 0.0
        %3695 = vmatprep.subr.mxu0 0.0
        %3696 = vmatpush1.msra.mxu0 0.0
        %3697 = vmatprep.subr.mxu0 0.0
        %3698 = vmatpush1.msra.mxu0 0.0
        %3699 = vmatprep.subr.mxu0 0.0
        %3700 = vmatpush1.msra.mxu0 0.0
        %3701 = vmatprep.subr.mxu0 0.0
        %3702 = vmatpush1.msra.mxu0 0.0
        %3703 = vmatprep.subr.mxu0 0.0
        %3704 = vmatpush1.msra.mxu0 0.0
        %3705 = vmatprep.subr.mxu0 0.0
        %3706 = vmatpush1.msra.mxu0 0.0
        %3707 = vmatprep.subr.mxu0 0.0
        %3708 = vmatpush1.msra.mxu0 0.0
        %3709 = vmatprep.subr.mxu0 0.0
        %3710 = vmatpush1.msra.mxu0 0.0
        %3711 = vmatprep.subr.mxu0 0.0
        %3712 = vmatpush1.msra.mxu0 0.0
        %3713 = vmatprep.subr.mxu0 0.0
        %3714 = vmatpush1.msra.mxu0 0.0
        %3715 = vmatprep.mubr.f32.mxu0 0.0
        %3716 = vmatmul.mubr.f32.gmra.mrb[0].mxu0 %v3649
        %v3717 = vpop.f32.mrb[0].mxu0
        %v3718 = vadd.f32 %v3647, %v3717
        %v3719 = vpop.f32.mrb[0].mxu0
        %3720 = vdwg.mxu0
        %v3721 = vadd.f32 %v3549, %v3718
        %v3722 = vld [vmem:[%s79 + $0x1] sm:$0x1]
        %v3723 = vld [vmem:[%s81 + $0x1] sm:$0x1]
        %v3724 = vsel %vm3122, %v3721, 0.0
        %3725 = vadd.xlane.f32.xlu0 %v3724
        %v3726 = vpop.xlane.xlu0 %3725
        %v3727 = vmul.f32 %v3726, %v1796
        %v3728 = vsub.f32 %v3721, %v3727
        %v3729 = vmul.f32 %v3728, %v3728
        %v3730 = vsel %vm3122, %v3729, 0.0
        %3731 = vadd.xlane.f32.xlu0 %v3730
        %v3732 = vpop.xlane.xlu0 %3731
        %v3733 = vmul.f32 %v3732, %v1796
        %v3734 = vadd.f32 %v3733, 1e-05
        %v3735 = vrsqrt.pop %v3734
        %v3736 = vmul.f32 %v3728, %v3735
        %v3737 = vlaneseq
        %v3738 = vshrl.u32 %v3737, 7
        %v3739 = vsub.s32 0, %v3738
        %v3740 = vrot.slane %v3722, %v3739
        %v3741 = vmul.f32 %v3736, %v3740
        %v3742 = vlaneseq
        %v3743 = vshrl.u32 %v3742, 7
        %v3744 = vsub.s32 0, %v3743
        %v3745 = vrot.slane %v3723, %v3744
        %v3746 = vadd.f32 %v3741, %v3745
        %s3747 = scalar_lea.vmem [#allocation34], 64
        %v3748 = vld [vmem:[%s3747] sm:$0xff]
        %v3749 = vld [vmem:[%s3747 + $0x8] sm:$0xff]
        %v3750 = vld [vmem:[%s3747 + $0x10] sm:$0xff]
        %v3751 = vld [vmem:[%s3747 + $0x18] sm:$0xff]
        %v3752 = vld [vmem:[%s3747 + $0x20] sm:$0xff]
        %v3753 = vld [vmem:[%s3747 + $0x28] sm:$0xff]
        %v3754 = vld [vmem:[%s3747 + $0x30] sm:$0xff]
        %v3755 = vld [vmem:[%s3747 + $0x38] sm:$0xff]
        %v3756 = vld [vmem:[%s69 + $0x1] sm:$0x1]
        %v3757 = vlaneseq
        %v3758 = vshrl.u32 %v3757, 7
        %v3759 = vsub.s32 0, %v3758
        %v3760 = vrot.slane %v3756, %v3759
        %v3762 = vsel %vm1716, %v3746, 0
        %3764 = vmatprep.subr.mxu0 0.0
        %3765 = vmatpush1.msra.mxu0 %v3748
        %3766 = vmatprep.subr.mxu0 0.0
        %3767 = vmatpush1.msra.mxu0 %v3749
        %3768 = vmatprep.subr.mxu0 0.0
        %3769 = vmatpush1.msra.mxu0 %v3750
        %3770 = vmatprep.subr.mxu0 0.0
        %3771 = vmatpush1.msra.mxu0 %v3751
        %3772 = vmatprep.subr.mxu0 0.0
        %3773 = vmatpush1.msra.mxu0 %v3752
        %3774 = vmatprep.subr.mxu0 0.0
        %3775 = vmatpush1.msra.mxu0 %v3753
        %3776 = vmatprep.subr.mxu0 0.0
        %3777 = vmatpush1.msra.mxu0 %v3754
        %3778 = vmatprep.subr.mxu0 0.0
        %3779 = vmatpush1.msra.mxu0 %v3755
        %3780 = vmatprep.subr.mxu0 0.0
        %3781 = vmatpush1.msra.mxu0 0.0
        %3782 = vmatprep.subr.mxu0 0.0
        %3783 = vmatpush1.msra.mxu0 0.0
        %3784 = vmatprep.subr.mxu0 0.0
        %3785 = vmatpush1.msra.mxu0 0.0
        %3786 = vmatprep.subr.mxu0 0.0
        %3787 = vmatpush1.msra.mxu0 0.0
        %3788 = vmatprep.subr.mxu0 0.0
        %3789 = vmatpush1.msra.mxu0 0.0
        %3790 = vmatprep.subr.mxu0 0.0
        %3791 = vmatpush1.msra.mxu0 0.0
        %3792 = vmatprep.subr.mxu0 0.0
        %3793 = vmatpush1.msra.mxu0 0.0
        %3794 = vmatprep.subr.mxu0 0.0
        %3795 = vmatpush1.msra.mxu0 0.0
        %3796 = vmatprep.subr.mxu0 0.0
        %3797 = vmatpush1.msra.mxu0 0.0
        %3798 = vmatprep.subr.mxu0 0.0
        %3799 = vmatpush1.msra.mxu0 0.0
        %3800 = vmatprep.subr.mxu0 0.0
        %3801 = vmatpush1.msra.mxu0 0.0
        %3802 = vmatprep.subr.mxu0 0.0
        %3803 = vmatpush1.msra.mxu0 0.0
        %3804 = vmatprep.subr.mxu0 0.0
        %3805 = vmatpush1.msra.mxu0 0.0
        %3806 = vmatprep.subr.mxu0 0.0
        %3807 = vmatpush1.msra.mxu0 0.0
        %3808 = vmatprep.subr.mxu0 0.0
        %3809 = vmatpush1.msra.mxu0 0.0
        %3810 = vmatprep.subr.mxu0 0.0
        %3811 = vmatpush1.msra.mxu0 0.0
        %3812 = vmatprep.subr.mxu0 0.0
        %3813 = vmatpush1.msra.mxu0 0.0
        %3814 = vmatprep.subr.mxu0 0.0
        %3815 = vmatpush1.msra.mxu0 0.0
        %3816 = vmatprep.subr.mxu0 0.0
        %3817 = vmatpush1.msra.mxu0 0.0
        %3818 = vmatprep.subr.mxu0 0.0
        %3819 = vmatpush1.msra.mxu0 0.0
        %3820 = vmatprep.subr.mxu0 0.0
        %3821 = vmatpush1.msra.mxu0 0.0
        %3822 = vmatprep.subr.mxu0 0.0
        %3823 = vmatpush1.msra.mxu0 0.0
        %3824 = vmatprep.subr.mxu0 0.0
        %3825 = vmatpush1.msra.mxu0 0.0
        %3826 = vmatprep.subr.mxu0 0.0
        %3827 = vmatpush1.msra.mxu0 0.0
        %3828 = vmatprep.mubr.f32.mxu0 0.0
        %3829 = vmatmul.mubr.f32.gmra.mrb[0].mxu0 %v3762
        %v3830 = vpop.f32.mrb[0].mxu0
        %v3831 = vadd.f32 %v3760, %v3830
        %v3832 = vpop.f32.mrb[0].mxu0
        %3833 = vdwg.mxu0
        %v3834 = vmax.f32 %v3831, 0.0
        %s3835 = scalar_lea.vmem %s71, 128
        %v3836 = vld [vmem:[%s3835] sm:$0xff]
        %v3837 = vld [vmem:[%s3835 + $0x8] sm:$0xff]
        %v3838 = vld [vmem:[%s3835 + $0x10] sm:$0xff]
        %v3839 = vld [vmem:[%s3835 + $0x18] sm:$0xff]
        %v3840 = vld [vmem:[%s3835 + $0x20] sm:$0xff]
        %v3841 = vld [vmem:[%s3835 + $0x28] sm:$0xff]
        %v3842 = vld [vmem:[%s3835 + $0x30] sm:$0xff]
        %v3843 = vld [vmem:[%s3835 + $0x38] sm:$0xff]
        %v3844 = vld [vmem:[%s3835 + $0x40] sm:$0xff]
        %v3845 = vld [vmem:[%s3835 + $0x48] sm:$0xff]
        %v3846 = vld [vmem:[%s3835 + $0x50] sm:$0xff]
        %v3847 = vld [vmem:[%s3835 + $0x58] sm:$0xff]
        %v3848 = vld [vmem:[%s3835 + $0x60] sm:$0xff]
        %v3849 = vld [vmem:[%s3835 + $0x68] sm:$0xff]
        %v3850 = vld [vmem:[%s3835 + $0x70] sm:$0xff]
        %v3851 = vld [vmem:[%s3835 + $0x78] sm:$0xff]
        %v3852 = vld [vmem:[%s73 + $0x1] sm:$0x1]
        %v3853 = vlaneseq
        %v3854 = vshrl.u32 %v3853, 7
        %v3855 = vsub.s32 0, %v3854
        %v3856 = vrot.slane %v3852, %v3855
        %3857 = vmatprep.subr.mxu0 0.0
        %3858 = vmatpush1.msra.mxu0 %v3836
        %3859 = vmatprep.subr.mxu0 0.0
        %3860 = vmatpush1.msra.mxu0 %v3837
        %3861 = vmatprep.subr.mxu0 0.0
        %3862 = vmatpush1.msra.mxu0 %v3838
        %3863 = vmatprep.subr.mxu0 0.0
        %3864 = vmatpush1.msra.mxu0 %v3839
        %3865 = vmatprep.subr.mxu0 0.0
        %3866 = vmatpush1.msra.mxu0 %v3840
        %3867 = vmatprep.subr.mxu0 0.0
        %3868 = vmatpush1.msra.mxu0 %v3841
        %3869 = vmatprep.subr.mxu0 0.0
        %3870 = vmatpush1.msra.mxu0 %v3842
        %3871 = vmatprep.subr.mxu0 0.0
        %3872 = vmatpush1.msra.mxu0 %v3843
        %3873 = vmatprep.subr.mxu0 0.0
        %3874 = vmatpush1.msra.mxu0 %v3844
        %3875 = vmatprep.subr.mxu0 0.0
        %3876 = vmatpush1.msra.mxu0 %v3845
        %3877 = vmatprep.subr.mxu0 0.0
        %3878 = vmatpush1.msra.mxu0 %v3846
        %3879 = vmatprep.subr.mxu0 0.0
        %3880 = vmatpush1.msra.mxu0 %v3847
        %3881 = vmatprep.subr.mxu0 0.0
        %3882 = vmatpush1.msra.mxu0 %v3848
        %3883 = vmatprep.subr.mxu0 0.0
        %3884 = vmatpush1.msra.mxu0 %v3849
        %3885 = vmatprep.subr.mxu0 0.0
        %3886 = vmatpush1.msra.mxu0 %v3850
        %3887 = vmatprep.subr.mxu0 0.0
        %3888 = vmatpush1.msra.mxu0 %v3851
        %3889 = vmatprep.subr.mxu0 0.0
        %3890 = vmatpush1.msra.mxu0 0.0
        %3891 = vmatprep.subr.mxu0 0.0
        %3892 = vmatpush1.msra.mxu0 0.0
        %3893 = vmatprep.subr.mxu0 0.0
        %3894 = vmatpush1.msra.mxu0 0.0
        %3895 = vmatprep.subr.mxu0 0.0
        %3896 = vmatpush1.msra.mxu0 0.0
        %3897 = vmatprep.subr.mxu0 0.0
        %3898 = vmatpush1.msra.mxu0 0.0
        %3899 = vmatprep.subr.mxu0 0.0
        %3900 = vmatpush1.msra.mxu0 0.0
        %3901 = vmatprep.subr.mxu0 0.0
        %3902 = vmatpush1.msra.mxu0 0.0
        %3903 = vmatprep.subr.mxu0 0.0
        %3904 = vmatpush1.msra.mxu0 0.0
        %3905 = vmatprep.subr.mxu0 0.0
        %3906 = vmatpush1.msra.mxu0 0.0
        %3907 = vmatprep.subr.mxu0 0.0
        %3908 = vmatpush1.msra.mxu0 0.0
        %3909 = vmatprep.subr.mxu0 0.0
        %3910 = vmatpush1.msra.mxu0 0.0
        %3911 = vmatprep.subr.mxu0 0.0
        %3912 = vmatpush1.msra.mxu0 0.0
        %3913 = vmatprep.subr.mxu0 0.0
        %3914 = vmatpush1.msra.mxu0 0.0
        %3915 = vmatprep.subr.mxu0 0.0
        %3916 = vmatpush1.msra.mxu0 0.0
        %3917 = vmatprep.subr.mxu0 0.0
        %3918 = vmatpush1.msra.mxu0 0.0
        %3919 = vmatprep.subr.mxu0 0.0
        %3920 = vmatpush1.msra.mxu0 0.0
        %3921 = vmatprep.mubr.f32.mxu0 0.0
        %3922 = vmatmul.mubr.f32.gmra.mrb[0].mxu0 %v3834
        %v3923 = vpop.f32.mrb[0].mxu0
        %v3924 = vadd.f32 %v3856, %v3923
        %v3925 = vpop.f32.mrb[0].mxu0
        %3926 = vdwg.mxu0
        %v3927 = vadd.f32 %v3746, %v3924
        %v3928 = vld [vmem:[%s83 + $0x1] sm:$0x1]
        %v3929 = vld [vmem:[%s85 + $0x1] sm:$0x1]
        %v3930 = vsel %vm3122, %v3927, 0.0
        %3931 = vadd.xlane.f32.xlu0 %v3930
        %v3932 = vpop.xlane.xlu0 %3931
        %v3933 = vmul.f32 %v3932, %v1796
        %v3934 = vsub.f32 %v3927, %v3933
        %v3935 = vmul.f32 %v3934, %v3934
        %v3936 = vsel %vm3122, %v3935, 0.0
        %3937 = vadd.xlane.f32.xlu0 %v3936
        %v3938 = vpop.xlane.xlu0 %3937
        %v3939 = vmul.f32 %v3938, %v1796
        %v3940 = vadd.f32 %v3939, 1e-05
        %v3941 = vrsqrt.pop %v3940
        %v3942 = vmul.f32 %v3934, %v3941
        %v3943 = vlaneseq
        %v3944 = vshrl.u32 %v3943, 7
        %v3945 = vsub.s32 0, %v3944
        %v3946 = vrot.slane %v3928, %v3945
        %v3947 = vmul.f32 %v3942, %v3946
        %v3948 = vlaneseq
        %v3949 = vshrl.u32 %v3948, 7
        %v3950 = vsub.s32 0, %v3949
        %v3951 = vrot.slane %v3929, %v3950
        %v3952 = vadd.f32 %v3947, %v3951
        %v3953 = vld [vmem:[%s87] sm:$0x1]
        %v3954 = vld [vmem:[%s89] sm:$0x1]
        %v3955 = vsel %vm3122, %v3952, 0.0
        %3956 = vadd.xlane.f32.xlu0 %v3955
        %v3957 = vpop.xlane.xlu0 %3956
        %v3958 = vmul.f32 %v3957, %v1796
        %v3959 = vsub.f32 %v3952, %v3958
        %v3960 = vmul.f32 %v3959, %v3959
        %v3961 = vsel %vm3122, %v3960, 0.0
        %3962 = vadd.xlane.f32.xlu0 %v3961
        %v3963 = vpop.xlane.xlu0 %3962
        %v3964 = vmul.f32 %v3963, %v1796
        %v3965 = vadd.f32 %v3964, 1e-05
        %v3966 = vrsqrt.pop %v3965
        %v3967 = vmul.f32 %v3959, %v3966
        %v3969 = vlaneseq
        %v3970 = vshrl.u32 %v3969, 7
        %v3971 = vsub.s32 0, %v3970
        %v3972 = vrot.slane %v3953, %v3971
        %v3974 = vmul.f32 %v3967, %v3972
        %v3976 = vlaneseq
        %v3977 = vshrl.u32 %v3976, 7
        %v3978 = vsub.s32 0, %v3977
        %v3979 = vrot.slane %v3954, %v3978
        %v3981 = vadd.f32 %v3974, %v3979
        %3983 = vrot.lane.b32.xlu0 %v3981, 64
        %v3984 = vpop.permute.xlu0 %3983
        %v3986 = vsel %vm1716, %v3981, %v3984
        %v3989 = vunpack.c.l.s4 1966171168
        %v3990 = vunpack.c.0.s8 %v3989
        %v3991 = vlaneseq
        %v3992 = vshrl.u32 %v3991, 7
        %v3993 = vsub.s32 %v3990, %v3992
        %v3994 = vrot.slane %v3986, %v3993
        %v3995 = vcombine.high %v3994, %v3994
        %v3997 = vunpack.c.l.s4 1966171168
        %v3998 = vunpack.c.0.s8 %v3997
        %v3999 = vlaneseq
        %v4000 = vshrl.u32 %v3999, 7
        %v4001 = vsub.s32 %v3998, %v4000
        %v4002 = vrot.slane %v3994, %v4001
        %v4004 = vunpack.c.l.s4 1966171168
        %v4005 = vunpack.c.0.s8 %v4004
        %v4006 = vlaneseq
        %v4007 = vshrl.u32 %v4006, 7
        %v4008 = vsub.s32 %v4005, %v4007
        %v4009 = vrot.slane %v3995, %v4008
        %v4010 = vcombine.high %v4002, %v4002
        %v4011 = vcombine.high %v4009, %v4009
        %v4012 = vlaneseq
        %v4013 = vshrl.u32 %v4012, 7
        %v4014 = vsub.s32 0, %v4013
        %v4015 = vrot.slane %v4002, %v4014
        %v4016 = vlaneseq
        %v4017 = vshrl.u32 %v4016, 7
        %v4018 = vsub.s32 0, %v4017
        %v4019 = vrot.slane %v4009, %v4018
        %v4020 = vlaneseq
        %v4021 = vshrl.u32 %v4020, 7
        %v4022 = vsub.s32 0, %v4021
        %v4023 = vrot.slane %v4010, %v4022
        %v4024 = vlaneseq
        %v4025 = vshrl.u32 %v4024, 7
        %v4026 = vsub.s32 0, %v4025
        %v4027 = vrot.slane %v4011, %v4026
        %v4028 = vcombine.low %v4015, %v4019
        %v4029 = vcombine.low %v4023, %v4027
        %4032 = vst [vmem:[%s1624] sm:$0xff] %v4028
        %4033 = vst [vmem:[%s1624 + $0x8] sm:$0xff] %v4029
        %s4034 = sand.u32 %s1076, 1
        %s4035 = scalar_lea.sflag [#allocation4], %s4034
        %s4036 = sand.u32 %s1076, 1
        %s4037 = smul.addr %s4036, 16
        %s4038 = scalar_lea.vmem [#allocation35], %s4037
        // Predicated region
        $region285: #{tpu_custom_call.1} parent=199 // pred_check
          %p4039 = pneg %p1086
        $region286: #{tpu_custom_call.1} parent=199 // pred_check_branch
          %4041 = sbr.rel (%p4039) target = $region288
        $region287: #{tpu_custom_call.1} parent=199 // pred_region
          %s4042 = smul.u32 2, %s118
          %s4044 = ssub.s32 256, 256
          %4045 = vsyncadd %s4035, %s4044
          %s4046 = smul.addr %s4042, 128
          %s4047 = scalar_lea.hbm %s91, %s4046
          %s4048 = sshll.u32 %s4038, 4
          %s4049 = int_to_ptr.vmem [resolvable:$true] %s4048
          %4054 = dma.vmem_to_hbm [thread:$0]  %s4049, 256, %s4047, %s4035, 128, 128, 8
        $region288: #{tpu_custom_call.1} parent=199 // pred_fallthru
          _
      $region200: #{tpu_custom_call.1} parent=5 // pred_fallthru
        _
      %p4055 = scmp.le.s32.totalorder 2, %s113
      // Predicated region
      $region289: #{tpu_custom_call.1} parent=5 // pred_check
        %p4056 = pneg %p4055
      $region290: #{tpu_custom_call.1} parent=5 // pred_check_branch
        %4058 = sbr.rel (%p4056) target = $region292
      $region291: #{tpu_custom_call.1} parent=5 // pred_region
        %s4059 = ssub.s32 %s113, 2
        // Predicated region
        $region293: #{tpu_custom_call.1} parent=291 // pred_check
          %p4060 = pneg %p1092
        $region294: #{tpu_custom_call.1} parent=291 // pred_check_branch
          %4062 = sbr.rel (%p4060) target = $region296
        $region295: #{tpu_custom_call.1} parent=291 // pred_region
          %s4063 = sand.u32 %s1077, 1
          %s4064 = scalar_lea.sflag [#allocation4], %s4063
          %s4065 = sand.u32 %s1077, 1
          %s4066 = smul.addr %s4065, 16
          %s4067 = scalar_lea.vmem [#allocation35], %s4066
          %4068 = dma.done %s4064, 256
        $region296: #{tpu_custom_call.1} parent=291 // pred_fallthru
          _
      $region292: #{tpu_custom_call.1} parent=5 // pred_fallthru
        _
    $region6: #{tpu_custom_call.1} parent=1 // loop_footer
      %s117 = sadd.s32 1, %s113
    $region7: #{tpu_custom_call.1} parent=1 // loop_footer_branch
      %112 = sbr.rel target = $region3
    $region8: #{tpu_custom_call.1} parent=1 // loop_exit
      _
    %4069 = vsyncpa [#allocation3], 1
    %s4070 = scalar_lea.sflag [#allocation3], 1
    %4071 = vsyncpa %s4070, 1
    %4072 = vsyncpa [#allocation6], 1
    %4073 = vsyncpa [#allocation9], 1
    %4074 = vsyncpa [#allocation12], 1
    %4075 = vsyncpa [#allocation15], 1
    %4076 = vsyncpa [#allocation18], 1
    %4077 = vsyncpa [#allocation21], 1
    %4078 = vsyncpa [#allocation24], 1
    %4079 = vsyncpa [#allocation27], 1
    %4080 = vsyncpa [#allocation30], 1
    %4081 = vsyncpa [#allocation33], 1
    %4082 = vsyncpa [#allocation4], 1
    %s4083 = scalar_lea.sflag [#allocation4], 1
    %4084 = vsyncpa %s4083, 1

</llo_original>
